<compile_context>
chip_gen: v5e
topology: v5e:2x2
jax: 0.10.0
libtpu: 0.0.40
codegen_flags: <defaults>
</compile_context>

<pallas_src>
import math
import numpy as np
import jax
import jax.numpy as jnp
from jax.experimental import pallas as pl
from jax.experimental.pallas import tpu as pltpu


# ----------------------------------------------------------------------------
# Host-side operator construction (PyTorch-exact semantics)
# ----------------------------------------------------------------------------
def adaptive_pool_matrix(out_size, in_size):
    """Row i averages input bin [floor(i*I/O), ceil((i+1)*I/O)) — AdaptiveAvgPool."""
    m = np.zeros((out_size, in_size), np.float32)
    for i in range(out_size):
        start = (i * in_size) // out_size
        end = -(-((i + 1) * in_size) // out_size)
        m[i, start:end] = 1.0 / (end - start)
    return m


def bilinear_matrix(out_size, in_size):
    """F.interpolate(mode='bilinear', align_corners=True), one axis."""
    m = np.zeros((out_size, in_size), np.float32)
    if in_size == 1:
        m[:, 0] = 1.0
    elif out_size == 1:
        m[0, 0] = 1.0
    else:
        for i in range(out_size):
            s = i * (in_size - 1) / (out_size - 1)
            lo = int(np.floor(s))
            hi = min(lo + 1, in_size - 1)
            f = s - lo
            m[i, lo] += 1.0 - f
            m[i, hi] += f
    return m


def conv_geometry(hh, ww, kh, kw):
    """Static lane shifts + {0,1} validity masks for a same-padded conv on an
    (hh, ww) map stored row-major-flattened along the lane axis."""
    ph, pw = (kh - 1) // 2, (kw - 1) // 2
    hs = np.arange(hh)[:, None]
    ws = np.arange(ww)[None, :]
    shifts, rows = [], []
    for dh in range(kh):
        for dw in range(kw):
            shifts.append((dh - ph) * ww + (dw - pw))
            valid = ((hs + dh - ph >= 0) & (hs + dh - ph < hh) &
                     (ws + dw - pw >= 0) & (ws + dw - pw < ww))
            rows.append(valid.reshape(-1).astype(np.float32))
    return tuple(shifts), np.stack(rows, axis=0)            # (T,), (T, hh*ww)


# ----------------------------------------------------------------------------
# Parameters (deterministic synthetic init; BN folded to scale/bias)
# ----------------------------------------------------------------------------
def conv_bn_params(key, kh, kw, cin, cout):
    k1, k2, k3, k4, k5 = jax.random.split(key, 5)
    w = jax.random.normal(k1, (kh, kw, cin, cout), jnp.float32) / math.sqrt(kh * kw * cin)
    gamma = 1.0 + 0.1 * jax.random.normal(k2, (cout,), jnp.float32)
    beta = 0.1 * jax.random.normal(k3, (cout,), jnp.float32)
    mean = 0.1 * jax.random.normal(k4, (cout,), jnp.float32)
    var = jnp.abs(jax.random.normal(k5, (cout,), jnp.float32)) * 0.5 + 0.5
    scale = gamma / jnp.sqrt(var + 1e-5)
    bias = beta - mean * scale
    return w, scale, bias


def init_params(key, in_channels):
    ic = in_channels // 4
    shapes = {
        'conv1_1': (1, 1, in_channels, ic), 'conv1_2': (1, 1, in_channels, ic),
        'conv2_0': (3, 3, ic, ic), 'conv2_1': (3, 3, ic, ic), 'conv2_2': (3, 3, ic, ic),
        'conv2_3': (1, 3, ic, ic), 'conv2_4': (3, 1, ic, ic),
        'conv2_5': (3, 3, ic, ic), 'conv2_6': (3, 3, ic, ic),
        'conv3': (1, 1, 2 * ic, in_channels),
    }
    params = {}
    for k, (name, shp) in zip(jax.random.split(key, len(shapes)), shapes.items()):
        params[name] = conv_bn_params(k, *shp)
    return params


# ----------------------------------------------------------------------------
# Operand packing for the fused kernel
# ----------------------------------------------------------------------------
def _fold_1x1(p):
    wgt, scale, bias = (np.asarray(a, np.float32) for a in p)
    ws = wgt[0, 0] * scale[None, :]                         # (cin, cout)
    return np.concatenate([ws.T, bias.reshape(-1, 1)], axis=1)   # (cout, cin+1)


def _fold_taps(p, hh, ww):
    wgt, scale, bias = (np.asarray(a, np.float32) for a in p)
    kh, kw, cin, cout = wgt.shape
    ws = wgt * scale[None, None, None, :]
    wf = np.transpose(ws, (3, 0, 1, 2)).reshape(cout, kh * kw * cin)
    w_aug = np.concatenate([wf, bias.reshape(cout, 1)], axis=1)  # (cout, T*cin+1)
    shifts, mask = conv_geometry(hh, ww, kh, kw)
    return w_aug, shifts, np.repeat(mask, cin, axis=0)           # mask: (T*cin, hw)


def _prepare(params, h, w, pool_size):
    A, B, K = adaptive_pool_matrix, bilinear_matrix, np.kron
    p0, p1 = pool_size

    w12a = np.concatenate([_fold_1x1(params['conv1_1']),
                           _fold_1x1(params['conv1_2'])], axis=0)
    w3a = _fold_1x1(params['conv3'])

    w20a, g_full, m_full = _fold_taps(params['conv2_0'], h, w)
    w21a, g_p1, m_p1 = _fold_taps(params['conv2_1'], p0, p0)
    w22a, g_p2, m_p2 = _fold_taps(params['conv2_2'], p1, p1)
    w23a, g_p3, m_p3 = _fold_taps(params['conv2_3'], 1, w)
    w24a, g_p4, m_p4 = _fold_taps(params['conv2_4'], h, 1)
    w25a, _, _ = _fold_taps(params['conv2_5'], h, w)
    w26a, _, _ = _fold_taps(params['conv2_6'], h, w)

    # Separable resizes as Kronecker matrices:  pooled = X @ kron(Rh,Rw)^T,
    # upsampled = Y @ kron(Uh,Uw)^T, all on the (C, H*W) layout.
    pools = [K(A(p0, h), A(p0, w)).T, K(A(p1, h), A(p1, w)).T,
             K(A(1, h), A(w, w)).T, K(A(h, h), A(1, w)).T]
    ups = [K(B(h, p0), B(w, p0)).T, K(B(h, p1), B(w, p1)).T,
           K(B(h, 1), B(w, w)).T, K(B(h, h), B(w, 1)).T]

    arrays = [w12a, w20a, w21a, w22a, w23a, w24a, w25a, w26a, w3a,
              *pools, *ups, m_full, m_p1, m_p2, m_p3, m_p4]
    arrays = [jnp.asarray(a, jnp.float32) for a in arrays]
    shifts = dict(full=g_full, p1=g_p1, p2=g_p2, p3=g_p3, p4=g_p4)
    return arrays, shifts


# ----------------------------------------------------------------------------
# Fused Pallas kernel
# ----------------------------------------------------------------------------
def _conv_taps(x, w_aug, mask, shifts, relu):
    """Same-padded conv on a flattened (Cin, HW) map: tap stack built with
    static lane rolls + validity masks, contracted in ONE matmul; the folded-BN
    bias is the last weight column multiplying a constant-1 operand row."""
    hw = x.shape[1]
    taps = [x if s == 0 else jnp.roll(x, -s, axis=1) for s in shifts]
    xt = taps[0] if len(taps) == 1 else jnp.concatenate(taps, axis=0)
    if mask is not None:
        xt = xt * mask
    xt = jnp.concatenate([xt, jnp.ones((1, hw), jnp.float32)], axis=0)
    y = jnp.dot(w_aug, xt, preferred_element_type=jnp.float32)
    return jnp.maximum(y, 0.0) if relu else y


def _make_strip_kernel(ic, shifts):
    g_full, g1, g2, g3, g4 = (shifts['full'], shifts['p1'], shifts['p2'],
                              shifts['p3'], shifts['p4'])

    def kernel(x_ref, w12_ref, w20_ref, w21_ref, w22_ref, w23_ref, w24_ref,
               w25_ref, w26_ref, w3_ref, p1_ref, p2_ref, p3_ref, p4_ref,
               u1_ref, u2_ref, u3_ref, u4_ref,
               mf_ref, m1_ref, m2_ref, m3_ref, m4_ref, o_ref):
        x = x_ref[0]                                         # (C, H*W)
        mf = mf_ref[...]

        # conv1_1 + conv1_2 fused (shared input x) -> split channels.
        y12 = _conv_taps(x, w12_ref[...], None, (0,), relu=True)
        x1, x2 = y12[:ic], y12[ic:]

        # plain 3x3 conv branch
        x2_1 = _conv_taps(x1, w20_ref[...], mf, g_full, relu=False)

        # adaptive-pool -> 3x3 conv -> bilinear-up branches
        p = jnp.dot(x1, p1_ref[...], preferred_element_type=jnp.float32)
        p = _conv_taps(p, w21_ref[...], m1_ref[...], g1, relu=False)
        x2_2 = jnp.dot(p, u1_ref[...], preferred_element_type=jnp.float32)

        p = jnp.dot(x1, p2_ref[...], preferred_element_type=jnp.float32)
        p = _conv_taps(p, w22_ref[...], m2_ref[...], g2, relu=False)
        x2_3 = jnp.dot(p, u2_ref[...], preferred_element_type=jnp.float32)

        # strip-pool (1,W) -> (1,3) conv -> up
        p = jnp.dot(x2, p3_ref[...], preferred_element_type=jnp.float32)
        p = _conv_taps(p, w23_ref[...], m3_ref[...], g3, relu=False)
        x2_4 = jnp.dot(p, u3_ref[...], preferred_element_type=jnp.float32)

        # strip-pool (H,1) -> (3,1) conv -> up
        p = jnp.dot(x2, p4_ref[...], preferred_element_type=jnp.float32)
        p = _conv_taps(p, w24_ref[...], m4_ref[...], g4, relu=False)
        x2_5 = jnp.dot(p, u4_ref[...], preferred_element_type=jnp.float32)

        x1b = _conv_taps(jnp.maximum(x2_1 + x2_2 + x2_3, 0.0),
                         w25_ref[...], mf, g_full, relu=True)
        x2b = _conv_taps(jnp.maximum(x2_5 + x2_4, 0.0),
                         w26_ref[...], mf, g_full, relu=True)

        cat = jnp.concatenate([x1b, x2b], axis=0)            # (2*ic, HW)
        out = _conv_taps(cat, w3_ref[...], None, (0,), relu=False)

        # residual add + final ReLU (kernel epilogue)
        o_ref[0] = jnp.maximum(x + out, 0.0).astype(o_ref.dtype)

    return kernel


def strip_pooling_forward(x_nchw, params, pool_size):
    n, c, h, w = x_nchw.shape
    ic, hw = c // 4, h * w
    arrays, shifts = _prepare(params, h, w, pool_size)
    x_flat = x_nchw.reshape(n, c, hw)

    def const_spec(a):
        nd = a.ndim
        return pl.BlockSpec(a.shape, lambda i, _nd=nd: (0,) * _nd)

    out = pl.pallas_call(
        _make_strip_kernel(ic, shifts),
        out_shape=jax.ShapeDtypeStruct((n, c, hw), x_nchw.dtype),
        grid=(n,),
        in_specs=[pl.BlockSpec((1, c, hw), lambda i: (i, 0, 0))]
                 + [const_spec(a) for a in arrays],
        out_specs=pl.BlockSpec((1, c, hw), lambda i: (i, 0, 0)),
        compiler_params=pltpu.CompilerParams(
            dimension_semantics=("parallel",)),
    )(x_flat, *arrays)
    return out.reshape(n, c, h, w)


# ----------------------------------------------------------------------------
# Pure-JAX reference (validation only)
# ----------------------------------------------------------------------------
def ref_forward(x_nhwc, params, pool_size):
    n, h, w, c = x_nhwc.shape
    A, B = adaptive_pool_matrix, bilinear_matrix
    P = jax.lax.Precision.HIGHEST
    m = dict(
        pool1=(A(pool_size[0], h), A(pool_size[0], w)),
        pool2=(A(pool_size[1], h), A(pool_size[1], w)),
        pool3=(A(1, h), A(w, w)),
        pool4=(A(h, h), A(1, w)),
        up1=(B(h, pool_size[0]), B(w, pool_size[0])),
        up2=(B(h, pool_size[1]), B(w, pool_size[1])),
        up3=(B(h, 1), B(w, w)),
        up4=(B(h, h), B(w, 1)),
    )

    def cb(xx, p, relu):
        wgt, scale, bias = p
        kh, kw = wgt.shape[0], wgt.shape[1]
        y = jax.lax.conv_general_dilated(
            xx, wgt, (1, 1), ((kh // 2, kh // 2), (kw // 2, kw // 2)),
            dimension_numbers=('NHWC', 'HWIO', 'NHWC'), precision=P)
        y = y * scale + bias
        return jnp.maximum(y, 0.0) if relu else y

    def rs(xx, rh, rw):
        return jnp.einsum('ah,nhwc,bw->nabc', jnp.asarray(rh), xx,
                          jnp.asarray(rw), precision=P)

    x1 = cb(x_nhwc, params['conv1_1'], True)
    x2 = cb(x_nhwc, params['conv1_2'], True)
    x2_1 = cb(x1, params['conv2_0'], False)
    x2_2 = rs(cb(rs(x1, *m['pool1']), params['conv2_1'], False), *m['up1'])
    x2_3 = rs(cb(rs(x1, *m['pool2']), params['conv2_2'], False), *m['up2'])
    x2_4 = rs(cb(rs(x2, *m['pool3']), params['conv2_3'], False), *m['up3'])
    x2_5 = rs(cb(rs(x2, *m['pool4']), params['conv2_4'], False), *m['up4'])
    x1b = cb(jnp.maximum(x2_1 + x2_2 + x2_3, 0.0), params['conv2_5'], True)
    x2b = cb(jnp.maximum(x2_5 + x2_4, 0.0), params['conv2_6'], True)
    out = cb(jnp.concatenate([x1b, x2b], axis=-1), params['conv3'], False)
    return jnp.maximum(x_nhwc + out, 0.0)


# ----------------------------------------------------------------------------
if __name__ == "__main__":
    key = jax.random.PRNGKey(0)
    N, C_IN, H, W = 2, 16, 16, 24            # PyTorch input layout: NCHW
    POOL_SIZE = (4, 8)
    kx, kp = jax.random.split(key)
    x_nchw = jax.random.normal(kx, (N, C_IN, H, W), jnp.float32)
    params = init_params(kp, C_IN)

    out = strip_pooling_forward(x_nchw, params, POOL_SIZE)
    out = jax.block_until_ready(out)

    ref_nhwc = jax.block_until_ready(
        ref_forward(jnp.transpose(x_nchw, (0, 2, 3, 1)), params, POOL_SIZE))
    ref = jnp.transpose(ref_nhwc, (0, 3, 1, 2))

    assert out.shape == x_nchw.shape and out.dtype == x_nchw.dtype
    max_err = float(jnp.max(jnp.abs(out - ref)))
    if not np.isfinite(max_err) or max_err > 2e-4:
        raise SystemExit(f"mismatch vs reference: max abs err = {max_err}")
    print("KERNEL_OK")
</pallas_src>

<mosaic_0001>
module attributes {stable_mosaic.version = 11 : i64} {
  func.func @kernel(%arg0: i32, %arg1: memref<1x16x384xf32, #tpu.memory_space<vmem>>, %arg2: memref<8x17xf32, #tpu.memory_space<vmem>>, %arg3: memref<4x37xf32, #tpu.memory_space<vmem>>, %arg4: memref<4x37xf32, #tpu.memory_space<vmem>>, %arg5: memref<4x37xf32, #tpu.memory_space<vmem>>, %arg6: memref<4x13xf32, #tpu.memory_space<vmem>>, %arg7: memref<4x13xf32, #tpu.memory_space<vmem>>, %arg8: memref<4x37xf32, #tpu.memory_space<vmem>>, %arg9: memref<4x37xf32, #tpu.memory_space<vmem>>, %arg10: memref<16x9xf32, #tpu.memory_space<vmem>>, %arg11: memref<384x16xf32, #tpu.memory_space<vmem>>, %arg12: memref<384x64xf32, #tpu.memory_space<vmem>>, %arg13: memref<384x24xf32, #tpu.memory_space<vmem>>, %arg14: memref<384x16xf32, #tpu.memory_space<vmem>>, %arg15: memref<16x384xf32, #tpu.memory_space<vmem>>, %arg16: memref<64x384xf32, #tpu.memory_space<vmem>>, %arg17: memref<24x384xf32, #tpu.memory_space<vmem>>, %arg18: memref<16x384xf32, #tpu.memory_space<vmem>>, %arg19: memref<36x384xf32, #tpu.memory_space<vmem>>, %arg20: memref<36x16xf32, #tpu.memory_space<vmem>>, %arg21: memref<36x64xf32, #tpu.memory_space<vmem>>, %arg22: memref<12x24xf32, #tpu.memory_space<vmem>>, %arg23: memref<12x16xf32, #tpu.memory_space<vmem>>, %arg24: memref<1x16x384xf32, #tpu.memory_space<vmem>>) attributes {dimension_semantics = [#tpu.dimension_semantics<parallel>], iteration_bounds = array<i64: 2>, scalar_prefetch = 0 : i64, scratch_operands = 0 : i64, tpu.core_type = #tpu.core_type<tc>, window_params = [{transform_indices = @transform_0, window_bounds = array<i64: 1, 16, 384>}, {pipeline_mode = #tpu.pipeline_mode<synchronous>, transform_indices = @transform_1, window_bounds = array<i64: 8, 17>}, {pipeline_mode = #tpu.pipeline_mode<synchronous>, transform_indices = @transform_2, window_bounds = array<i64: 4, 37>}, {pipeline_mode = #tpu.pipeline_mode<synchronous>, transform_indices = @transform_3, window_bounds = array<i64: 4, 37>}, {pipeline_mode = #tpu.pipeline_mode<synchronous>, transform_indices = @transform_4, window_bounds = array<i64: 4, 37>}, {pipeline_mode = #tpu.pipeline_mode<synchronous>, transform_indices = @transform_5, window_bounds = array<i64: 4, 13>}, {pipeline_mode = #tpu.pipeline_mode<synchronous>, transform_indices = @transform_6, window_bounds = array<i64: 4, 13>}, {pipeline_mode = #tpu.pipeline_mode<synchronous>, transform_indices = @transform_7, window_bounds = array<i64: 4, 37>}, {pipeline_mode = #tpu.pipeline_mode<synchronous>, transform_indices = @transform_8, window_bounds = array<i64: 4, 37>}, {pipeline_mode = #tpu.pipeline_mode<synchronous>, transform_indices = @transform_9, window_bounds = array<i64: 16, 9>}, {pipeline_mode = #tpu.pipeline_mode<synchronous>, transform_indices = @transform_10, window_bounds = array<i64: 384, 16>}, {pipeline_mode = #tpu.pipeline_mode<synchronous>, transform_indices = @transform_11, window_bounds = array<i64: 384, 64>}, {pipeline_mode = #tpu.pipeline_mode<synchronous>, transform_indices = @transform_12, window_bounds = array<i64: 384, 24>}, {pipeline_mode = #tpu.pipeline_mode<synchronous>, transform_indices = @transform_13, window_bounds = array<i64: 384, 16>}, {pipeline_mode = #tpu.pipeline_mode<synchronous>, transform_indices = @transform_14, window_bounds = array<i64: 16, 384>}, {pipeline_mode = #tpu.pipeline_mode<synchronous>, transform_indices = @transform_15, window_bounds = array<i64: 64, 384>}, {pipeline_mode = #tpu.pipeline_mode<synchronous>, transform_indices = @transform_16, window_bounds = array<i64: 24, 384>}, {pipeline_mode = #tpu.pipeline_mode<synchronous>, transform_indices = @transform_17, window_bounds = array<i64: 16, 384>}, {pipeline_mode = #tpu.pipeline_mode<synchronous>, transform_indices = @transform_18, window_bounds = array<i64: 36, 384>}, {pipeline_mode = #tpu.pipeline_mode<synchronous>, transform_indices = @transform_19, window_bounds = array<i64: 36, 16>}, {pipeline_mode = #tpu.pipeline_mode<synchronous>, transform_indices = @transform_20, window_bounds = array<i64: 36, 64>}, {pipeline_mode = #tpu.pipeline_mode<synchronous>, transform_indices = @transform_21, window_bounds = array<i64: 12, 24>}, {pipeline_mode = #tpu.pipeline_mode<synchronous>, transform_indices = @transform_22, window_bounds = array<i64: 12, 16>}, {transform_indices = @transform_23, window_bounds = array<i64: 1, 16, 384>}]} {
    %c0 = arith.constant 0 : index
    %c0_0 = arith.constant 0 : index
    %c0_1 = arith.constant 0 : index
    %0 = vector.load %arg1[%c0, %c0_0, %c0_1] : memref<1x16x384xf32, #tpu.memory_space<vmem>>, vector<1x16x384xf32>
    %1 = vector.shape_cast %0 : vector<1x16x384xf32> to vector<16x384xf32>
    %c0_2 = arith.constant 0 : index
    %c0_3 = arith.constant 0 : index
    %2 = vector.load %arg19[%c0_2, %c0_3] : memref<36x384xf32, #tpu.memory_space<vmem>>, vector<36x384xf32>
    %c0_4 = arith.constant 0 : index
    %c0_5 = arith.constant 0 : index
    %3 = vector.load %arg2[%c0_4, %c0_5] : memref<8x17xf32, #tpu.memory_space<vmem>>, vector<8x17xf32>
    %cst = arith.constant 1.000000e+00 : f32
    %4 = vector.broadcast %cst : f32 to vector<1x384xf32>
    %5 = tpu.concatenate %1, %4 in 0 : vector<16x384xf32>, vector<1x384xf32> -> vector<17x384xf32>
    %cst_6 = arith.constant dense<0.000000e+00> : vector<8x384xf32>
    %6 = tpu.matmul %3, %5, %cst_6 {dimension_numbers = #tpu.dot_dimension_numbers<[1], [0], [0], [1], [0, 0, 1, 1], [], []>} : vector<8x17xf32>, vector<17x384xf32>, vector<8x384xf32> -> vector<8x384xf32>
    %cst_7 = arith.constant 0.000000e+00 : f32
    %7 = vector.broadcast %cst_7 : f32 to vector<8x384xf32>
    %8 = arith.maximumf %6, %7 : vector<8x384xf32>
    %9 = vector.extract_strided_slice %8 {offsets = [0, 0], sizes = [4, 384], strides = [1, 1]} : vector<8x384xf32> to vector<4x384xf32>
    %10 = vector.extract_strided_slice %8 {offsets = [4, 0], sizes = [4, 384], strides = [1, 1]} : vector<8x384xf32> to vector<4x384xf32>
    %c0_8 = arith.constant 0 : index
    %c0_9 = arith.constant 0 : index
    %11 = vector.load %arg3[%c0_8, %c0_9] : memref<4x37xf32, #tpu.memory_space<vmem>>, vector<4x37xf32>
    %12 = vector.extract_strided_slice %9 {offsets = [0, 359], sizes = [4, 25], strides = [1, 1]} : vector<4x384xf32> to vector<4x25xf32>
    %13 = vector.extract_strided_slice %9 {offsets = [0, 0], sizes = [4, 359], strides = [1, 1]} : vector<4x384xf32> to vector<4x359xf32>
    %14 = tpu.concatenate %12, %13 in 1 : vector<4x25xf32>, vector<4x359xf32> -> vector<4x384xf32>
    %15 = vector.extract_strided_slice %9 {offsets = [0, 360], sizes = [4, 24], strides = [1, 1]} : vector<4x384xf32> to vector<4x24xf32>
    %16 = vector.extract_strided_slice %9 {offsets = [0, 0], sizes = [4, 360], strides = [1, 1]} : vector<4x384xf32> to vector<4x360xf32>
    %17 = tpu.concatenate %15, %16 in 1 : vector<4x24xf32>, vector<4x360xf32> -> vector<4x384xf32>
    %18 = vector.extract_strided_slice %9 {offsets = [0, 361], sizes = [4, 23], strides = [1, 1]} : vector<4x384xf32> to vector<4x23xf32>
    %19 = vector.extract_strided_slice %9 {offsets = [0, 0], sizes = [4, 361], strides = [1, 1]} : vector<4x384xf32> to vector<4x361xf32>
    %20 = tpu.concatenate %18, %19 in 1 : vector<4x23xf32>, vector<4x361xf32> -> vector<4x384xf32>
    %21 = vector.extract_strided_slice %9 {offsets = [0, 383], sizes = [4, 1], strides = [1, 1]} : vector<4x384xf32> to vector<4x1xf32>
    %22 = vector.extract_strided_slice %9 {offsets = [0, 0], sizes = [4, 383], strides = [1, 1]} : vector<4x384xf32> to vector<4x383xf32>
    %23 = tpu.concatenate %21, %22 in 1 : vector<4x1xf32>, vector<4x383xf32> -> vector<4x384xf32>
    %24 = vector.extract_strided_slice %9 {offsets = [0, 1], sizes = [4, 383], strides = [1, 1]} : vector<4x384xf32> to vector<4x383xf32>
    %25 = vector.extract_strided_slice %9 {offsets = [0, 0], sizes = [4, 1], strides = [1, 1]} : vector<4x384xf32> to vector<4x1xf32>
    %26 = tpu.concatenate %24, %25 in 1 : vector<4x383xf32>, vector<4x1xf32> -> vector<4x384xf32>
    %27 = vector.extract_strided_slice %9 {offsets = [0, 23], sizes = [4, 361], strides = [1, 1]} : vector<4x384xf32> to vector<4x361xf32>
    %28 = vector.extract_strided_slice %9 {offsets = [0, 0], sizes = [4, 23], strides = [1, 1]} : vector<4x384xf32> to vector<4x23xf32>
    %29 = tpu.concatenate %27, %28 in 1 : vector<4x361xf32>, vector<4x23xf32> -> vector<4x384xf32>
    %30 = vector.extract_strided_slice %9 {offsets = [0, 24], sizes = [4, 360], strides = [1, 1]} : vector<4x384xf32> to vector<4x360xf32>
    %31 = vector.extract_strided_slice %9 {offsets = [0, 0], sizes = [4, 24], strides = [1, 1]} : vector<4x384xf32> to vector<4x24xf32>
    %32 = tpu.concatenate %30, %31 in 1 : vector<4x360xf32>, vector<4x24xf32> -> vector<4x384xf32>
    %33 = vector.extract_strided_slice %9 {offsets = [0, 25], sizes = [4, 359], strides = [1, 1]} : vector<4x384xf32> to vector<4x359xf32>
    %34 = vector.extract_strided_slice %9 {offsets = [0, 0], sizes = [4, 25], strides = [1, 1]} : vector<4x384xf32> to vector<4x25xf32>
    %35 = tpu.concatenate %33, %34 in 1 : vector<4x359xf32>, vector<4x25xf32> -> vector<4x384xf32>
    %36 = tpu.concatenate %14, %17, %20, %23, %9, %26, %29, %32, %35 in 0 : vector<4x384xf32>, vector<4x384xf32>, vector<4x384xf32>, vector<4x384xf32>, vector<4x384xf32>, vector<4x384xf32>, vector<4x384xf32>, vector<4x384xf32>, vector<4x384xf32> -> vector<36x384xf32>
    %37 = arith.mulf %36, %2 : vector<36x384xf32>
    %cst_10 = arith.constant 1.000000e+00 : f32
    %38 = vector.broadcast %cst_10 : f32 to vector<1x384xf32>
    %39 = tpu.concatenate %37, %38 in 0 : vector<36x384xf32>, vector<1x384xf32> -> vector<37x384xf32>
    %cst_11 = arith.constant dense<0.000000e+00> : vector<4x384xf32>
    %40 = tpu.matmul %11, %39, %cst_11 {dimension_numbers = #tpu.dot_dimension_numbers<[1], [0], [0], [1], [0, 0, 1, 1], [], []>} : vector<4x37xf32>, vector<37x384xf32>, vector<4x384xf32> -> vector<4x384xf32>
    %c0_12 = arith.constant 0 : index
    %c0_13 = arith.constant 0 : index
    %41 = vector.load %arg11[%c0_12, %c0_13] : memref<384x16xf32, #tpu.memory_space<vmem>>, vector<384x16xf32>
    %cst_14 = arith.constant dense<0.000000e+00> : vector<4x16xf32>
    %42 = tpu.matmul %9, %41, %cst_14 {dimension_numbers = #tpu.dot_dimension_numbers<[1], [0], [0], [1], [0, 0, 1, 1], [], []>} : vector<4x384xf32>, vector<384x16xf32>, vector<4x16xf32> -> vector<4x16xf32>
    %c0_15 = arith.constant 0 : index
    %c0_16 = arith.constant 0 : index
    %43 = vector.load %arg4[%c0_15, %c0_16] : memref<4x37xf32, #tpu.memory_space<vmem>>, vector<4x37xf32>
    %c0_17 = arith.constant 0 : index
    %c0_18 = arith.constant 0 : index
    %44 = vector.load %arg20[%c0_17, %c0_18] : memref<36x16xf32, #tpu.memory_space<vmem>>, vector<36x16xf32>
    %45 = vector.extract_strided_slice %42 {offsets = [0, 11], sizes = [4, 5], strides = [1, 1]} : vector<4x16xf32> to vector<4x5xf32>
    %46 = vector.extract_strided_slice %42 {offsets = [0, 0], sizes = [4, 11], strides = [1, 1]} : vector<4x16xf32> to vector<4x11xf32>
    %47 = tpu.concatenate %45, %46 in 1 : vector<4x5xf32>, vector<4x11xf32> -> vector<4x16xf32>
    %48 = vector.extract_strided_slice %42 {offsets = [0, 12], sizes = [4, 4], strides = [1, 1]} : vector<4x16xf32> to vector<4x4xf32>
    %49 = vector.extract_strided_slice %42 {offsets = [0, 0], sizes = [4, 12], strides = [1, 1]} : vector<4x16xf32> to vector<4x12xf32>
    %50 = tpu.concatenate %48, %49 in 1 : vector<4x4xf32>, vector<4x12xf32> -> vector<4x16xf32>
    %51 = vector.extract_strided_slice %42 {offsets = [0, 13], sizes = [4, 3], strides = [1, 1]} : vector<4x16xf32> to vector<4x3xf32>
    %52 = vector.extract_strided_slice %42 {offsets = [0, 0], sizes = [4, 13], strides = [1, 1]} : vector<4x16xf32> to vector<4x13xf32>
    %53 = tpu.concatenate %51, %52 in 1 : vector<4x3xf32>, vector<4x13xf32> -> vector<4x16xf32>
    %54 = vector.extract_strided_slice %42 {offsets = [0, 15], sizes = [4, 1], strides = [1, 1]} : vector<4x16xf32> to vector<4x1xf32>
    %55 = vector.extract_strided_slice %42 {offsets = [0, 0], sizes = [4, 15], strides = [1, 1]} : vector<4x16xf32> to vector<4x15xf32>
    %56 = tpu.concatenate %54, %55 in 1 : vector<4x1xf32>, vector<4x15xf32> -> vector<4x16xf32>
    %57 = vector.extract_strided_slice %42 {offsets = [0, 1], sizes = [4, 15], strides = [1, 1]} : vector<4x16xf32> to vector<4x15xf32>
    %58 = vector.extract_strided_slice %42 {offsets = [0, 0], sizes = [4, 1], strides = [1, 1]} : vector<4x16xf32> to vector<4x1xf32>
    %59 = tpu.concatenate %57, %58 in 1 : vector<4x15xf32>, vector<4x1xf32> -> vector<4x16xf32>
    %60 = vector.extract_strided_slice %42 {offsets = [0, 3], sizes = [4, 13], strides = [1, 1]} : vector<4x16xf32> to vector<4x13xf32>
    %61 = vector.extract_strided_slice %42 {offsets = [0, 0], sizes = [4, 3], strides = [1, 1]} : vector<4x16xf32> to vector<4x3xf32>
    %62 = tpu.concatenate %60, %61 in 1 : vector<4x13xf32>, vector<4x3xf32> -> vector<4x16xf32>
    %63 = vector.extract_strided_slice %42 {offsets = [0, 4], sizes = [4, 12], strides = [1, 1]} : vector<4x16xf32> to vector<4x12xf32>
    %64 = vector.extract_strided_slice %42 {offsets = [0, 0], sizes = [4, 4], strides = [1, 1]} : vector<4x16xf32> to vector<4x4xf32>
    %65 = tpu.concatenate %63, %64 in 1 : vector<4x12xf32>, vector<4x4xf32> -> vector<4x16xf32>
    %66 = vector.extract_strided_slice %42 {offsets = [0, 5], sizes = [4, 11], strides = [1, 1]} : vector<4x16xf32> to vector<4x11xf32>
    %67 = vector.extract_strided_slice %42 {offsets = [0, 0], sizes = [4, 5], strides = [1, 1]} : vector<4x16xf32> to vector<4x5xf32>
    %68 = tpu.concatenate %66, %67 in 1 : vector<4x11xf32>, vector<4x5xf32> -> vector<4x16xf32>
    %69 = tpu.concatenate %47, %50, %53, %56, %42, %59, %62, %65, %68 in 0 : vector<4x16xf32>, vector<4x16xf32>, vector<4x16xf32>, vector<4x16xf32>, vector<4x16xf32>, vector<4x16xf32>, vector<4x16xf32>, vector<4x16xf32>, vector<4x16xf32> -> vector<36x16xf32>
    %70 = arith.mulf %69, %44 : vector<36x16xf32>
    %cst_19 = arith.constant 1.000000e+00 : f32
    %71 = vector.broadcast %cst_19 : f32 to vector<1x16xf32>
    %72 = tpu.concatenate %70, %71 in 0 : vector<36x16xf32>, vector<1x16xf32> -> vector<37x16xf32>
    %cst_20 = arith.constant dense<0.000000e+00> : vector<4x16xf32>
    %73 = tpu.matmul %43, %72, %cst_20 {dimension_numbers = #tpu.dot_dimension_numbers<[1], [0], [0], [1], [0, 0, 1, 1], [], []>} : vector<4x37xf32>, vector<37x16xf32>, vector<4x16xf32> -> vector<4x16xf32>
    %c0_21 = arith.constant 0 : index
    %c0_22 = arith.constant 0 : index
    %74 = vector.load %arg15[%c0_21, %c0_22] : memref<16x384xf32, #tpu.memory_space<vmem>>, vector<16x384xf32>
    %cst_23 = arith.constant dense<0.000000e+00> : vector<4x384xf32>
    %75 = tpu.matmul %73, %74, %cst_23 {dimension_numbers = #tpu.dot_dimension_numbers<[1], [0], [0], [1], [0, 0, 1, 1], [], []>} : vector<4x16xf32>, vector<16x384xf32>, vector<4x384xf32> -> vector<4x384xf32>
    %c0_24 = arith.constant 0 : index
    %c0_25 = arith.constant 0 : index
    %76 = vector.load %arg12[%c0_24, %c0_25] : memref<384x64xf32, #tpu.memory_space<vmem>>, vector<384x64xf32>
    %cst_26 = arith.constant dense<0.000000e+00> : vector<4x64xf32>
    %77 = tpu.matmul %9, %76, %cst_26 {dimension_numbers = #tpu.dot_dimension_numbers<[1], [0], [0], [1], [0, 0, 1, 1], [], []>} : vector<4x384xf32>, vector<384x64xf32>, vector<4x64xf32> -> vector<4x64xf32>
    %c0_27 = arith.constant 0 : index
    %c0_28 = arith.constant 0 : index
    %78 = vector.load %arg5[%c0_27, %c0_28] : memref<4x37xf32, #tpu.memory_space<vmem>>, vector<4x37xf32>
    %c0_29 = arith.constant 0 : index
    %c0_30 = arith.constant 0 : index
    %79 = vector.load %arg21[%c0_29, %c0_30] : memref<36x64xf32, #tpu.memory_space<vmem>>, vector<36x64xf32>
    %80 = vector.extract_strided_slice %77 {offsets = [0, 55], sizes = [4, 9], strides = [1, 1]} : vector<4x64xf32> to vector<4x9xf32>
    %81 = vector.extract_strided_slice %77 {offsets = [0, 0], sizes = [4, 55], strides = [1, 1]} : vector<4x64xf32> to vector<4x55xf32>
    %82 = tpu.concatenate %80, %81 in 1 : vector<4x9xf32>, vector<4x55xf32> -> vector<4x64xf32>
    %83 = vector.extract_strided_slice %77 {offsets = [0, 56], sizes = [4, 8], strides = [1, 1]} : vector<4x64xf32> to vector<4x8xf32>
    %84 = vector.extract_strided_slice %77 {offsets = [0, 0], sizes = [4, 56], strides = [1, 1]} : vector<4x64xf32> to vector<4x56xf32>
    %85 = tpu.concatenate %83, %84 in 1 : vector<4x8xf32>, vector<4x56xf32> -> vector<4x64xf32>
    %86 = vector.extract_strided_slice %77 {offsets = [0, 57], sizes = [4, 7], strides = [1, 1]} : vector<4x64xf32> to vector<4x7xf32>
    %87 = vector.extract_strided_slice %77 {offsets = [0, 0], sizes = [4, 57], strides = [1, 1]} : vector<4x64xf32> to vector<4x57xf32>
    %88 = tpu.concatenate %86, %87 in 1 : vector<4x7xf32>, vector<4x57xf32> -> vector<4x64xf32>
    %89 = vector.extract_strided_slice %77 {offsets = [0, 63], sizes = [4, 1], strides = [1, 1]} : vector<4x64xf32> to vector<4x1xf32>
    %90 = vector.extract_strided_slice %77 {offsets = [0, 0], sizes = [4, 63], strides = [1, 1]} : vector<4x64xf32> to vector<4x63xf32>
    %91 = tpu.concatenate %89, %90 in 1 : vector<4x1xf32>, vector<4x63xf32> -> vector<4x64xf32>
    %92 = vector.extract_strided_slice %77 {offsets = [0, 1], sizes = [4, 63], strides = [1, 1]} : vector<4x64xf32> to vector<4x63xf32>
    %93 = vector.extract_strided_slice %77 {offsets = [0, 0], sizes = [4, 1], strides = [1, 1]} : vector<4x64xf32> to vector<4x1xf32>
    %94 = tpu.concatenate %92, %93 in 1 : vector<4x63xf32>, vector<4x1xf32> -> vector<4x64xf32>
    %95 = vector.extract_strided_slice %77 {offsets = [0, 7], sizes = [4, 57], strides = [1, 1]} : vector<4x64xf32> to vector<4x57xf32>
    %96 = vector.extract_strided_slice %77 {offsets = [0, 0], sizes = [4, 7], strides = [1, 1]} : vector<4x64xf32> to vector<4x7xf32>
    %97 = tpu.concatenate %95, %96 in 1 : vector<4x57xf32>, vector<4x7xf32> -> vector<4x64xf32>
    %98 = vector.extract_strided_slice %77 {offsets = [0, 8], sizes = [4, 56], strides = [1, 1]} : vector<4x64xf32> to vector<4x56xf32>
    %99 = vector.extract_strided_slice %77 {offsets = [0, 0], sizes = [4, 8], strides = [1, 1]} : vector<4x64xf32> to vector<4x8xf32>
    %100 = tpu.concatenate %98, %99 in 1 : vector<4x56xf32>, vector<4x8xf32> -> vector<4x64xf32>
    %101 = vector.extract_strided_slice %77 {offsets = [0, 9], sizes = [4, 55], strides = [1, 1]} : vector<4x64xf32> to vector<4x55xf32>
    %102 = vector.extract_strided_slice %77 {offsets = [0, 0], sizes = [4, 9], strides = [1, 1]} : vector<4x64xf32> to vector<4x9xf32>
    %103 = tpu.concatenate %101, %102 in 1 : vector<4x55xf32>, vector<4x9xf32> -> vector<4x64xf32>
    %104 = tpu.concatenate %82, %85, %88, %91, %77, %94, %97, %100, %103 in 0 : vector<4x64xf32>, vector<4x64xf32>, vector<4x64xf32>, vector<4x64xf32>, vector<4x64xf32>, vector<4x64xf32>, vector<4x64xf32>, vector<4x64xf32>, vector<4x64xf32> -> vector<36x64xf32>
    %105 = arith.mulf %104, %79 : vector<36x64xf32>
    %cst_31 = arith.constant 1.000000e+00 : f32
    %106 = vector.broadcast %cst_31 : f32 to vector<1x64xf32>
    %107 = tpu.concatenate %105, %106 in 0 : vector<36x64xf32>, vector<1x64xf32> -> vector<37x64xf32>
    %cst_32 = arith.constant dense<0.000000e+00> : vector<4x64xf32>
    %108 = tpu.matmul %78, %107, %cst_32 {dimension_numbers = #tpu.dot_dimension_numbers<[1], [0], [0], [1], [0, 0, 1, 1], [], []>} : vector<4x37xf32>, vector<37x64xf32>, vector<4x64xf32> -> vector<4x64xf32>
    %c0_33 = arith.constant 0 : index
    %c0_34 = arith.constant 0 : index
    %109 = vector.load %arg16[%c0_33, %c0_34] : memref<64x384xf32, #tpu.memory_space<vmem>>, vector<64x384xf32>
    %cst_35 = arith.constant dense<0.000000e+00> : vector<4x384xf32>
    %110 = tpu.matmul %108, %109, %cst_35 {dimension_numbers = #tpu.dot_dimension_numbers<[1], [0], [0], [1], [0, 0, 1, 1], [], []>} : vector<4x64xf32>, vector<64x384xf32>, vector<4x384xf32> -> vector<4x384xf32>
    %c0_36 = arith.constant 0 : index
    %c0_37 = arith.constant 0 : index
    %111 = vector.load %arg13[%c0_36, %c0_37] : memref<384x24xf32, #tpu.memory_space<vmem>>, vector<384x24xf32>
    %cst_38 = arith.constant dense<0.000000e+00> : vector<4x24xf32>
    %112 = tpu.matmul %10, %111, %cst_38 {dimension_numbers = #tpu.dot_dimension_numbers<[1], [0], [0], [1], [0, 0, 1, 1], [], []>} : vector<4x384xf32>, vector<384x24xf32>, vector<4x24xf32> -> vector<4x24xf32>
    %c0_39 = arith.constant 0 : index
    %c0_40 = arith.constant 0 : index
    %113 = vector.load %arg6[%c0_39, %c0_40] : memref<4x13xf32, #tpu.memory_space<vmem>>, vector<4x13xf32>
    %c0_41 = arith.constant 0 : index
    %c0_42 = arith.constant 0 : index
    %114 = vector.load %arg22[%c0_41, %c0_42] : memref<12x24xf32, #tpu.memory_space<vmem>>, vector<12x24xf32>
    %115 = vector.extract_strided_slice %112 {offsets = [0, 23], sizes = [4, 1], strides = [1, 1]} : vector<4x24xf32> to vector<4x1xf32>
    %116 = vector.extract_strided_slice %112 {offsets = [0, 0], sizes = [4, 23], strides = [1, 1]} : vector<4x24xf32> to vector<4x23xf32>
    %117 = tpu.concatenate %115, %116 in 1 : vector<4x1xf32>, vector<4x23xf32> -> vector<4x24xf32>
    %118 = vector.extract_strided_slice %112 {offsets = [0, 1], sizes = [4, 23], strides = [1, 1]} : vector<4x24xf32> to vector<4x23xf32>
    %119 = vector.extract_strided_slice %112 {offsets = [0, 0], sizes = [4, 1], strides = [1, 1]} : vector<4x24xf32> to vector<4x1xf32>
    %120 = tpu.concatenate %118, %119 in 1 : vector<4x23xf32>, vector<4x1xf32> -> vector<4x24xf32>
    %121 = tpu.concatenate %117, %112, %120 in 0 : vector<4x24xf32>, vector<4x24xf32>, vector<4x24xf32> -> vector<12x24xf32>
    %122 = arith.mulf %121, %114 : vector<12x24xf32>
    %cst_43 = arith.constant 1.000000e+00 : f32
    %123 = vector.broadcast %cst_43 : f32 to vector<1x24xf32>
    %124 = tpu.concatenate %122, %123 in 0 : vector<12x24xf32>, vector<1x24xf32> -> vector<13x24xf32>
    %cst_44 = arith.constant dense<0.000000e+00> : vector<4x24xf32>
    %125 = tpu.matmul %113, %124, %cst_44 {dimension_numbers = #tpu.dot_dimension_numbers<[1], [0], [0], [1], [0, 0, 1, 1], [], []>} : vector<4x13xf32>, vector<13x24xf32>, vector<4x24xf32> -> vector<4x24xf32>
    %c0_45 = arith.constant 0 : index
    %c0_46 = arith.constant 0 : index
    %126 = vector.load %arg17[%c0_45, %c0_46] : memref<24x384xf32, #tpu.memory_space<vmem>>, vector<24x384xf32>
    %cst_47 = arith.constant dense<0.000000e+00> : vector<4x384xf32>
    %127 = tpu.matmul %125, %126, %cst_47 {dimension_numbers = #tpu.dot_dimension_numbers<[1], [0], [0], [1], [0, 0, 1, 1], [], []>} : vector<4x24xf32>, vector<24x384xf32>, vector<4x384xf32> -> vector<4x384xf32>
    %c0_48 = arith.constant 0 : index
    %c0_49 = arith.constant 0 : index
    %128 = vector.load %arg14[%c0_48, %c0_49] : memref<384x16xf32, #tpu.memory_space<vmem>>, vector<384x16xf32>
    %cst_50 = arith.constant dense<0.000000e+00> : vector<4x16xf32>
    %129 = tpu.matmul %10, %128, %cst_50 {dimension_numbers = #tpu.dot_dimension_numbers<[1], [0], [0], [1], [0, 0, 1, 1], [], []>} : vector<4x384xf32>, vector<384x16xf32>, vector<4x16xf32> -> vector<4x16xf32>
    %c0_51 = arith.constant 0 : index
    %c0_52 = arith.constant 0 : index
    %130 = vector.load %arg7[%c0_51, %c0_52] : memref<4x13xf32, #tpu.memory_space<vmem>>, vector<4x13xf32>
    %c0_53 = arith.constant 0 : index
    %c0_54 = arith.constant 0 : index
    %131 = vector.load %arg23[%c0_53, %c0_54] : memref<12x16xf32, #tpu.memory_space<vmem>>, vector<12x16xf32>
    %132 = vector.extract_strided_slice %129 {offsets = [0, 15], sizes = [4, 1], strides = [1, 1]} : vector<4x16xf32> to vector<4x1xf32>
    %133 = vector.extract_strided_slice %129 {offsets = [0, 0], sizes = [4, 15], strides = [1, 1]} : vector<4x16xf32> to vector<4x15xf32>
    %134 = tpu.concatenate %132, %133 in 1 : vector<4x1xf32>, vector<4x15xf32> -> vector<4x16xf32>
    %135 = vector.extract_strided_slice %129 {offsets = [0, 1], sizes = [4, 15], strides = [1, 1]} : vector<4x16xf32> to vector<4x15xf32>
    %136 = vector.extract_strided_slice %129 {offsets = [0, 0], sizes = [4, 1], strides = [1, 1]} : vector<4x16xf32> to vector<4x1xf32>
    %137 = tpu.concatenate %135, %136 in 1 : vector<4x15xf32>, vector<4x1xf32> -> vector<4x16xf32>
    %138 = tpu.concatenate %134, %129, %137 in 0 : vector<4x16xf32>, vector<4x16xf32>, vector<4x16xf32> -> vector<12x16xf32>
    %139 = arith.mulf %138, %131 : vector<12x16xf32>
    %cst_55 = arith.constant 1.000000e+00 : f32
    %140 = vector.broadcast %cst_55 : f32 to vector<1x16xf32>
    %141 = tpu.concatenate %139, %140 in 0 : vector<12x16xf32>, vector<1x16xf32> -> vector<13x16xf32>
    %cst_56 = arith.constant dense<0.000000e+00> : vector<4x16xf32>
    %142 = tpu.matmul %130, %141, %cst_56 {dimension_numbers = #tpu.dot_dimension_numbers<[1], [0], [0], [1], [0, 0, 1, 1], [], []>} : vector<4x13xf32>, vector<13x16xf32>, vector<4x16xf32> -> vector<4x16xf32>
    %c0_57 = arith.constant 0 : index
    %c0_58 = arith.constant 0 : index
    %143 = vector.load %arg18[%c0_57, %c0_58] : memref<16x384xf32, #tpu.memory_space<vmem>>, vector<16x384xf32>
    %cst_59 = arith.constant dense<0.000000e+00> : vector<4x384xf32>
    %144 = tpu.matmul %142, %143, %cst_59 {dimension_numbers = #tpu.dot_dimension_numbers<[1], [0], [0], [1], [0, 0, 1, 1], [], []>} : vector<4x16xf32>, vector<16x384xf32>, vector<4x384xf32> -> vector<4x384xf32>
    %145 = arith.addf %40, %75 : vector<4x384xf32>
    %146 = arith.addf %145, %110 : vector<4x384xf32>
    %cst_60 = arith.constant 0.000000e+00 : f32
    %147 = vector.broadcast %cst_60 : f32 to vector<4x384xf32>
    %148 = arith.maximumf %146, %147 : vector<4x384xf32>
    %c0_61 = arith.constant 0 : index
    %c0_62 = arith.constant 0 : index
    %149 = vector.load %arg8[%c0_61, %c0_62] : memref<4x37xf32, #tpu.memory_space<vmem>>, vector<4x37xf32>
    %150 = vector.extract_strided_slice %148 {offsets = [0, 359], sizes = [4, 25], strides = [1, 1]} : vector<4x384xf32> to vector<4x25xf32>
    %151 = vector.extract_strided_slice %148 {offsets = [0, 0], sizes = [4, 359], strides = [1, 1]} : vector<4x384xf32> to vector<4x359xf32>
    %152 = tpu.concatenate %150, %151 in 1 : vector<4x25xf32>, vector<4x359xf32> -> vector<4x384xf32>
    %153 = vector.extract_strided_slice %148 {offsets = [0, 360], sizes = [4, 24], strides = [1, 1]} : vector<4x384xf32> to vector<4x24xf32>
    %154 = vector.extract_strided_slice %148 {offsets = [0, 0], sizes = [4, 360], strides = [1, 1]} : vector<4x384xf32> to vector<4x360xf32>
    %155 = tpu.concatenate %153, %154 in 1 : vector<4x24xf32>, vector<4x360xf32> -> vector<4x384xf32>
    %156 = vector.extract_strided_slice %148 {offsets = [0, 361], sizes = [4, 23], strides = [1, 1]} : vector<4x384xf32> to vector<4x23xf32>
    %157 = vector.extract_strided_slice %148 {offsets = [0, 0], sizes = [4, 361], strides = [1, 1]} : vector<4x384xf32> to vector<4x361xf32>
    %158 = tpu.concatenate %156, %157 in 1 : vector<4x23xf32>, vector<4x361xf32> -> vector<4x384xf32>
    %159 = vector.extract_strided_slice %148 {offsets = [0, 383], sizes = [4, 1], strides = [1, 1]} : vector<4x384xf32> to vector<4x1xf32>
    %160 = vector.extract_strided_slice %148 {offsets = [0, 0], sizes = [4, 383], strides = [1, 1]} : vector<4x384xf32> to vector<4x383xf32>
    %161 = tpu.concatenate %159, %160 in 1 : vector<4x1xf32>, vector<4x383xf32> -> vector<4x384xf32>
    %162 = vector.extract_strided_slice %148 {offsets = [0, 1], sizes = [4, 383], strides = [1, 1]} : vector<4x384xf32> to vector<4x383xf32>
    %163 = vector.extract_strided_slice %148 {offsets = [0, 0], sizes = [4, 1], strides = [1, 1]} : vector<4x384xf32> to vector<4x1xf32>
    %164 = tpu.concatenate %162, %163 in 1 : vector<4x383xf32>, vector<4x1xf32> -> vector<4x384xf32>
    %165 = vector.extract_strided_slice %148 {offsets = [0, 23], sizes = [4, 361], strides = [1, 1]} : vector<4x384xf32> to vector<4x361xf32>
    %166 = vector.extract_strided_slice %148 {offsets = [0, 0], sizes = [4, 23], strides = [1, 1]} : vector<4x384xf32> to vector<4x23xf32>
    %167 = tpu.concatenate %165, %166 in 1 : vector<4x361xf32>, vector<4x23xf32> -> vector<4x384xf32>
    %168 = vector.extract_strided_slice %148 {offsets = [0, 24], sizes = [4, 360], strides = [1, 1]} : vector<4x384xf32> to vector<4x360xf32>
    %169 = vector.extract_strided_slice %148 {offsets = [0, 0], sizes = [4, 24], strides = [1, 1]} : vector<4x384xf32> to vector<4x24xf32>
    %170 = tpu.concatenate %168, %169 in 1 : vector<4x360xf32>, vector<4x24xf32> -> vector<4x384xf32>
    %171 = vector.extract_strided_slice %148 {offsets = [0, 25], sizes = [4, 359], strides = [1, 1]} : vector<4x384xf32> to vector<4x359xf32>
    %172 = vector.extract_strided_slice %148 {offsets = [0, 0], sizes = [4, 25], strides = [1, 1]} : vector<4x384xf32> to vector<4x25xf32>
    %173 = tpu.concatenate %171, %172 in 1 : vector<4x359xf32>, vector<4x25xf32> -> vector<4x384xf32>
    %174 = tpu.concatenate %152, %155, %158, %161, %148, %164, %167, %170, %173 in 0 : vector<4x384xf32>, vector<4x384xf32>, vector<4x384xf32>, vector<4x384xf32>, vector<4x384xf32>, vector<4x384xf32>, vector<4x384xf32>, vector<4x384xf32>, vector<4x384xf32> -> vector<36x384xf32>
    %175 = arith.mulf %174, %2 : vector<36x384xf32>
    %cst_63 = arith.constant 1.000000e+00 : f32
    %176 = vector.broadcast %cst_63 : f32 to vector<1x384xf32>
    %177 = tpu.concatenate %175, %176 in 0 : vector<36x384xf32>, vector<1x384xf32> -> vector<37x384xf32>
    %cst_64 = arith.constant dense<0.000000e+00> : vector<4x384xf32>
    %178 = tpu.matmul %149, %177, %cst_64 {dimension_numbers = #tpu.dot_dimension_numbers<[1], [0], [0], [1], [0, 0, 1, 1], [], []>} : vector<4x37xf32>, vector<37x384xf32>, vector<4x384xf32> -> vector<4x384xf32>
    %cst_65 = arith.constant 0.000000e+00 : f32
    %179 = vector.broadcast %cst_65 : f32 to vector<4x384xf32>
    %180 = arith.maximumf %178, %179 : vector<4x384xf32>
    %181 = arith.addf %144, %127 : vector<4x384xf32>
    %cst_66 = arith.constant 0.000000e+00 : f32
    %182 = vector.broadcast %cst_66 : f32 to vector<4x384xf32>
    %183 = arith.maximumf %181, %182 : vector<4x384xf32>
    %c0_67 = arith.constant 0 : index
    %c0_68 = arith.constant 0 : index
    %184 = vector.load %arg9[%c0_67, %c0_68] : memref<4x37xf32, #tpu.memory_space<vmem>>, vector<4x37xf32>
    %185 = vector.extract_strided_slice %183 {offsets = [0, 359], sizes = [4, 25], strides = [1, 1]} : vector<4x384xf32> to vector<4x25xf32>
    %186 = vector.extract_strided_slice %183 {offsets = [0, 0], sizes = [4, 359], strides = [1, 1]} : vector<4x384xf32> to vector<4x359xf32>
    %187 = tpu.concatenate %185, %186 in 1 : vector<4x25xf32>, vector<4x359xf32> -> vector<4x384xf32>
    %188 = vector.extract_strided_slice %183 {offsets = [0, 360], sizes = [4, 24], strides = [1, 1]} : vector<4x384xf32> to vector<4x24xf32>
    %189 = vector.extract_strided_slice %183 {offsets = [0, 0], sizes = [4, 360], strides = [1, 1]} : vector<4x384xf32> to vector<4x360xf32>
    %190 = tpu.concatenate %188, %189 in 1 : vector<4x24xf32>, vector<4x360xf32> -> vector<4x384xf32>
    %191 = vector.extract_strided_slice %183 {offsets = [0, 361], sizes = [4, 23], strides = [1, 1]} : vector<4x384xf32> to vector<4x23xf32>
    %192 = vector.extract_strided_slice %183 {offsets = [0, 0], sizes = [4, 361], strides = [1, 1]} : vector<4x384xf32> to vector<4x361xf32>
    %193 = tpu.concatenate %191, %192 in 1 : vector<4x23xf32>, vector<4x361xf32> -> vector<4x384xf32>
    %194 = vector.extract_strided_slice %183 {offsets = [0, 383], sizes = [4, 1], strides = [1, 1]} : vector<4x384xf32> to vector<4x1xf32>
    %195 = vector.extract_strided_slice %183 {offsets = [0, 0], sizes = [4, 383], strides = [1, 1]} : vector<4x384xf32> to vector<4x383xf32>
    %196 = tpu.concatenate %194, %195 in 1 : vector<4x1xf32>, vector<4x383xf32> -> vector<4x384xf32>
    %197 = vector.extract_strided_slice %183 {offsets = [0, 1], sizes = [4, 383], strides = [1, 1]} : vector<4x384xf32> to vector<4x383xf32>
    %198 = vector.extract_strided_slice %183 {offsets = [0, 0], sizes = [4, 1], strides = [1, 1]} : vector<4x384xf32> to vector<4x1xf32>
    %199 = tpu.concatenate %197, %198 in 1 : vector<4x383xf32>, vector<4x1xf32> -> vector<4x384xf32>
    %200 = vector.extract_strided_slice %183 {offsets = [0, 23], sizes = [4, 361], strides = [1, 1]} : vector<4x384xf32> to vector<4x361xf32>
    %201 = vector.extract_strided_slice %183 {offsets = [0, 0], sizes = [4, 23], strides = [1, 1]} : vector<4x384xf32> to vector<4x23xf32>
    %202 = tpu.concatenate %200, %201 in 1 : vector<4x361xf32>, vector<4x23xf32> -> vector<4x384xf32>
    %203 = vector.extract_strided_slice %183 {offsets = [0, 24], sizes = [4, 360], strides = [1, 1]} : vector<4x384xf32> to vector<4x360xf32>
    %204 = vector.extract_strided_slice %183 {offsets = [0, 0], sizes = [4, 24], strides = [1, 1]} : vector<4x384xf32> to vector<4x24xf32>
    %205 = tpu.concatenate %203, %204 in 1 : vector<4x360xf32>, vector<4x24xf32> -> vector<4x384xf32>
    %206 = vector.extract_strided_slice %183 {offsets = [0, 25], sizes = [4, 359], strides = [1, 1]} : vector<4x384xf32> to vector<4x359xf32>
    %207 = vector.extract_strided_slice %183 {offsets = [0, 0], sizes = [4, 25], strides = [1, 1]} : vector<4x384xf32> to vector<4x25xf32>
    %208 = tpu.concatenate %206, %207 in 1 : vector<4x359xf32>, vector<4x25xf32> -> vector<4x384xf32>
    %209 = tpu.concatenate %187, %190, %193, %196, %183, %199, %202, %205, %208 in 0 : vector<4x384xf32>, vector<4x384xf32>, vector<4x384xf32>, vector<4x384xf32>, vector<4x384xf32>, vector<4x384xf32>, vector<4x384xf32>, vector<4x384xf32>, vector<4x384xf32> -> vector<36x384xf32>
    %210 = arith.mulf %209, %2 : vector<36x384xf32>
    %cst_69 = arith.constant 1.000000e+00 : f32
    %211 = vector.broadcast %cst_69 : f32 to vector<1x384xf32>
    %212 = tpu.concatenate %210, %211 in 0 : vector<36x384xf32>, vector<1x384xf32> -> vector<37x384xf32>
    %cst_70 = arith.constant dense<0.000000e+00> : vector<4x384xf32>
    %213 = tpu.matmul %184, %212, %cst_70 {dimension_numbers = #tpu.dot_dimension_numbers<[1], [0], [0], [1], [0, 0, 1, 1], [], []>} : vector<4x37xf32>, vector<37x384xf32>, vector<4x384xf32> -> vector<4x384xf32>
    %cst_71 = arith.constant 0.000000e+00 : f32
    %214 = vector.broadcast %cst_71 : f32 to vector<4x384xf32>
    %215 = arith.maximumf %213, %214 : vector<4x384xf32>
    %216 = tpu.concatenate %180, %215 in 0 : vector<4x384xf32>, vector<4x384xf32> -> vector<8x384xf32>
    %c0_72 = arith.constant 0 : index
    %c0_73 = arith.constant 0 : index
    %217 = vector.load %arg10[%c0_72, %c0_73] : memref<16x9xf32, #tpu.memory_space<vmem>>, vector<16x9xf32>
    %cst_74 = arith.constant 1.000000e+00 : f32
    %218 = vector.broadcast %cst_74 : f32 to vector<1x384xf32>
    %219 = tpu.concatenate %216, %218 in 0 : vector<8x384xf32>, vector<1x384xf32> -> vector<9x384xf32>
    %cst_75 = arith.constant dense<0.000000e+00> : vector<16x384xf32>
    %220 = tpu.matmul %217, %219, %cst_75 {dimension_numbers = #tpu.dot_dimension_numbers<[1], [0], [0], [1], [0, 0, 1, 1], [], []>} : vector<16x9xf32>, vector<9x384xf32>, vector<16x384xf32> -> vector<16x384xf32>
    %221 = arith.addf %1, %220 : vector<16x384xf32>
    %cst_76 = arith.constant 0.000000e+00 : f32
    %222 = vector.broadcast %cst_76 : f32 to vector<16x384xf32>
    %223 = arith.maximumf %221, %222 : vector<16x384xf32>
    %c0_77 = arith.constant 0 : index
    %c0_78 = arith.constant 0 : index
    %c0_79 = arith.constant 0 : index
    %224 = vector.load %arg24[%c0_77, %c0_78, %c0_79] : memref<1x16x384xf32, #tpu.memory_space<vmem>>, vector<1x16x384xf32>
    %225 = vector.shape_cast %224 : vector<1x16x384xf32> to vector<16x384xf32>
    %226 = vector.shape_cast %223 : vector<16x384xf32> to vector<1x16x384xf32>
    tpu.vector_store %arg24[%c0_77, %c0_78, %c0_79], %226 {strides = array<i32>} : memref<1x16x384xf32, #tpu.memory_space<vmem>>, vector<1x16x384xf32>,
    return
  }
  func.func @transform_0(%arg0: i32) -> (i32, i32, i32) {
    %c0_i32 = arith.constant 0 : i32
    %c0_i32_0 = arith.constant 0 : i32
    %c0_i32_1 = arith.constant 0 : i32
    return %arg0, %c0_i32, %c0_i32_0 : i32, i32, i32
  }
  func.func @transform_1(%arg0: i32) -> (i32, i32) {
    %c0_i32 = arith.constant 0 : i32
    %c0_i32_0 = arith.constant 0 : i32
    %c0_i32_1 = arith.constant 0 : i32
    return %c0_i32, %c0_i32_0 : i32, i32
  }
  func.func @transform_2(%arg0: i32) -> (i32, i32) {
    %c0_i32 = arith.constant 0 : i32
    %c0_i32_0 = arith.constant 0 : i32
    %c0_i32_1 = arith.constant 0 : i32
    return %c0_i32, %c0_i32_0 : i32, i32
  }
  func.func @transform_3(%arg0: i32) -> (i32, i32) {
    %c0_i32 = arith.constant 0 : i32
    %c0_i32_0 = arith.constant 0 : i32
    %c0_i32_1 = arith.constant 0 : i32
    return %c0_i32, %c0_i32_0 : i32, i32
  }
  func.func @transform_4(%arg0: i32) -> (i32, i32) {
    %c0_i32 = arith.constant 0 : i32
    %c0_i32_0 = arith.constant 0 : i32
    %c0_i32_1 = arith.constant 0 : i32
    return %c0_i32, %c0_i32_0 : i32, i32
  }
  func.func @transform_5(%arg0: i32) -> (i32, i32) {
    %c0_i32 = arith.constant 0 : i32
    %c0_i32_0 = arith.constant 0 : i32
    %c0_i32_1 = arith.constant 0 : i32
    return %c0_i32, %c0_i32_0 : i32, i32
  }
  func.func @transform_6(%arg0: i32) -> (i32, i32) {
    %c0_i32 = arith.constant 0 : i32
    %c0_i32_0 = arith.constant 0 : i32
    %c0_i32_1 = arith.constant 0 : i32
    return %c0_i32, %c0_i32_0 : i32, i32
  }
  func.func @transform_7(%arg0: i32) -> (i32, i32) {
    %c0_i32 = arith.constant 0 : i32
    %c0_i32_0 = arith.constant 0 : i32
    %c0_i32_1 = arith.constant 0 : i32
    return %c0_i32, %c0_i32_0 : i32, i32
  }
  func.func @transform_8(%arg0: i32) -> (i32, i32) {
    %c0_i32 = arith.constant 0 : i32
    %c0_i32_0 = arith.constant 0 : i32
    %c0_i32_1 = arith.constant 0 : i32
    return %c0_i32, %c0_i32_0 : i32, i32
  }
  func.func @transform_9(%arg0: i32) -> (i32, i32) {
    %c0_i32 = arith.constant 0 : i32
    %c0_i32_0 = arith.constant 0 : i32
    %c0_i32_1 = arith.constant 0 : i32
    return %c0_i32, %c0_i32_0 : i32, i32
  }
  func.func @transform_10(%arg0: i32) -> (i32, i32) {
    %c0_i32 = arith.constant 0 : i32
    %c0_i32_0 = arith.constant 0 : i32
    %c0_i32_1 = arith.constant 0 : i32
    return %c0_i32, %c0_i32_0 : i32, i32
  }
  func.func @transform_11(%arg0: i32) -> (i32, i32) {
    %c0_i32 = arith.constant 0 : i32
    %c0_i32_0 = arith.constant 0 : i32
    %c0_i32_1 = arith.constant 0 : i32
    return %c0_i32, %c0_i32_0 : i32, i32
  }
  func.func @transform_12(%arg0: i32) -> (i32, i32) {
    %c0_i32 = arith.constant 0 : i32
    %c0_i32_0 = arith.constant 0 : i32
    %c0_i32_1 = arith.constant 0 : i32
    return %c0_i32, %c0_i32_0 : i32, i32
  }
  func.func @transform_13(%arg0: i32) -> (i32, i32) {
    %c0_i32 = arith.constant 0 : i32
    %c0_i32_0 = arith.constant 0 : i32
    %c0_i32_1 = arith.constant 0 : i32
    return %c0_i32, %c0_i32_0 : i32, i32
  }
  func.func @transform_14(%arg0: i32) -> (i32, i32) {
    %c0_i32 = arith.constant 0 : i32
    %c0_i32_0 = arith.constant 0 : i32
    %c0_i32_1 = arith.constant 0 : i32
    return %c0_i32, %c0_i32_0 : i32, i32
  }
  func.func @transform_15(%arg0: i32) -> (i32, i32) {
    %c0_i32 = arith.constant 0 : i32
    %c0_i32_0 = arith.constant 0 : i32
    %c0_i32_1 = arith.constant 0 : i32
    return %c0_i32, %c0_i32_0 : i32, i32
  }
  func.func @transform_16(%arg0: i32) -> (i32, i32) {
    %c0_i32 = arith.constant 0 : i32
    %c0_i32_0 = arith.constant 0 : i32
    %c0_i32_1 = arith.constant 0 : i32
    return %c0_i32, %c0_i32_0 : i32, i32
  }
  func.func @transform_17(%arg0: i32) -> (i32, i32) {
    %c0_i32 = arith.constant 0 : i32
    %c0_i32_0 = arith.constant 0 : i32
    %c0_i32_1 = arith.constant 0 : i32
    return %c0_i32, %c0_i32_0 : i32, i32
  }
  func.func @transform_18(%arg0: i32) -> (i32, i32) {
    %c0_i32 = arith.constant 0 : i32
    %c0_i32_0 = arith.constant 0 : i32
    %c0_i32_1 = arith.constant 0 : i32
    return %c0_i32, %c0_i32_0 : i32, i32
  }
  func.func @transform_19(%arg0: i32) -> (i32, i32) {
    %c0_i32 = arith.constant 0 : i32
    %c0_i32_0 = arith.constant 0 : i32
    %c0_i32_1 = arith.constant 0 : i32
    return %c0_i32, %c0_i32_0 : i32, i32
  }
  func.func @transform_20(%arg0: i32) -> (i32, i32) {
    %c0_i32 = arith.constant 0 : i32
    %c0_i32_0 = arith.constant 0 : i32
    %c0_i32_1 = arith.constant 0 : i32
    return %c0_i32, %c0_i32_0 : i32, i32
  }
  func.func @transform_21(%arg0: i32) -> (i32, i32) {
    %c0_i32 = arith.constant 0 : i32
    %c0_i32_0 = arith.constant 0 : i32
    %c0_i32_1 = arith.constant 0 : i32
    return %c0_i32, %c0_i32_0 : i32, i32
  }
  func.func @transform_22(%arg0: i32) -> (i32, i32) {
    %c0_i32 = arith.constant 0 : i32
    %c0_i32_0 = arith.constant 0 : i32
    %c0_i32_1 = arith.constant 0 : i32
    return %c0_i32, %c0_i32_0 : i32, i32
  }
  func.func @transform_23(%arg0: i32) -> (i32, i32, i32) {
    %c0_i32 = arith.constant 0 : i32
    %c0_i32_0 = arith.constant 0 : i32
    %c0_i32_1 = arith.constant 0 : i32
    return %arg0, %c0_i32, %c0_i32_0 : i32, i32, i32
  }
}

</mosaic_0001>

<llo_original>
// kernel: tpu_custom_call.1
$region0: #{tpu_custom_call.1}
  #allocation0 [shape = 'u32[]', space=smem, size = 0x4, offset = 0x4, fixed_abs, tag = 'smem constant byte address 0x4 - core index']
  #allocation1 [shape = 'u32[72,128]{1,0:T(1,128)}', space=vmem, size = 0x9000, scoped, tag = 'internal scratch']
  %s0 = inlined_call_operand.vmem [shape: f32[2,16,384], index: 0, kind: input, shape index: {}]
  %s1 = inlined_call_operand.vmem [shape: f32[8,17], index: 1, kind: input, shape index: {}]
  %s2 = inlined_call_operand.vmem [shape: f32[4,37], index: 2, kind: input, shape index: {}]
  %s3 = inlined_call_operand.vmem [shape: f32[4,37], index: 3, kind: input, shape index: {}]
  %s4 = inlined_call_operand.vmem [shape: f32[4,37], index: 4, kind: input, shape index: {}]
  %s5 = inlined_call_operand.vmem [shape: f32[4,13], index: 5, kind: input, shape index: {}]
  %s6 = inlined_call_operand.vmem [shape: f32[4,13], index: 6, kind: input, shape index: {}]
  %s7 = inlined_call_operand.vmem [shape: f32[4,37], index: 7, kind: input, shape index: {}]
  %s8 = inlined_call_operand.vmem [shape: f32[4,37], index: 8, kind: input, shape index: {}]
  %s9 = inlined_call_operand.vmem [shape: f32[16,9], index: 9, kind: input, shape index: {}]
  %s10 = inlined_call_operand.vmem [shape: f32[384,16], index: 10, kind: input, shape index: {}]
  %s11 = inlined_call_operand.vmem [shape: f32[384,64], index: 11, kind: input, shape index: {}]
  %s12 = inlined_call_operand.vmem [shape: f32[384,24], index: 12, kind: input, shape index: {}]
  %s13 = inlined_call_operand.vmem [shape: f32[384,16], index: 13, kind: input, shape index: {}]
  %s14 = inlined_call_operand.vmem [shape: f32[16,384], index: 14, kind: input, shape index: {}]
  %s15 = inlined_call_operand.vmem [shape: f32[64,384], index: 15, kind: input, shape index: {}]
  %s16 = inlined_call_operand.vmem [shape: f32[24,384], index: 16, kind: input, shape index: {}]
  %s17 = inlined_call_operand.vmem [shape: f32[16,384], index: 17, kind: input, shape index: {}]
  %s18 = inlined_call_operand.vmem [shape: f32[36,384], index: 18, kind: input, shape index: {}]
  %s19 = inlined_call_operand.vmem [shape: f32[36,16], index: 19, kind: input, shape index: {}]
  %s20 = inlined_call_operand.vmem [shape: f32[36,64], index: 20, kind: input, shape index: {}]
  %s21 = inlined_call_operand.vmem [shape: f32[12,24], index: 21, kind: input, shape index: {}]
  %s22 = inlined_call_operand.vmem [shape: f32[12,16], index: 22, kind: input, shape index: {}]
  %s23 = inlined_call_operand.hbm [shape: f32[2,16,384], index: 23, kind: output, shape index: {}]
  %s24 = sld [smem:[#allocation0]]
  $region125: #{tpu_custom_call.1} parent=0
    _
  %s26 = ssub.s32 1, %s24
  %s27 = scalar_select 0, %s26, %s24
  $region1: #{tpu_custom_call.1} parent=0
    #allocation2 [shape = 'u8[49152]{0}', space=vmem, size = 0xc000, scoped, tag = 'output window, operand 0']
    #allocation3 [shape = 's32[2]{0}', space=sflag, size = 0x8, scoped, tag = 'scoped memory for tpu_custom_call.1']
    %28 = vsyncpa [#allocation3], 0
    %s29 = scalar_lea.sflag [#allocation3], 1
    %30 = vsyncpa %s29, 0
    loop: start=0, step=1, limit=4
    $region2: #{tpu_custom_call.1} parent=1 // loop_pre_header
      _
    $region3: #{tpu_custom_call.1} parent=1 // loop_header
      %s32 = sphi 0, %s36
      %p33 = scmp.ge.s32.totalorder %s32, 4
      %s42 = sphi 0, %s44
      %s45 = sphi 0, %s42
      %s46 = sphi 0, %s45
      %s62 = sphi 0, %s46
      %s66 = sphi 0, %s66
      %s68 = sphi 0, %s66
      %s69 = sphi 0, %s68
      %s83 = sphi 0, %s69
      %s87 = sphi 0, %s87
      %s89 = sphi 0, %s87
      %s90 = sphi 0, %s89
      %s104 = sphi 0, %s90
      %s108 = sphi 0, %s108
      %s110 = sphi 0, %s108
      %s111 = sphi 0, %s110
      %s125 = sphi 0, %s111
      %s129 = sphi 0, %s129
      %s131 = sphi 0, %s129
      %s132 = sphi 0, %s131
      %s146 = sphi 0, %s132
      %s150 = sphi 0, %s150
      %s152 = sphi 0, %s150
      %s153 = sphi 0, %s152
      %s167 = sphi 0, %s153
      %s171 = sphi 0, %s171
      %s173 = sphi 0, %s171
      %s174 = sphi 0, %s173
      %s188 = sphi 0, %s174
      %s192 = sphi 0, %s192
      %s194 = sphi 0, %s192
      %s195 = sphi 0, %s194
      %s209 = sphi 0, %s195
      %s213 = sphi 0, %s213
      %s215 = sphi 0, %s213
      %s216 = sphi 0, %s215
      %s230 = sphi 0, %s216
      %s234 = sphi 0, %s234
      %s236 = sphi 0, %s234
      %s237 = sphi 0, %s236
      %s251 = sphi 0, %s237
      %s255 = sphi 0, %s255
      %s257 = sphi 0, %s255
      %s258 = sphi 0, %s257
      %s272 = sphi 0, %s258
      %s276 = sphi 0, %s276
      %s278 = sphi 0, %s276
      %s279 = sphi 0, %s278
      %s293 = sphi 0, %s279
      %s297 = sphi 0, %s297
      %s299 = sphi 0, %s297
      %s300 = sphi 0, %s299
      %s314 = sphi 0, %s300
      %s318 = sphi 0, %s318
      %s320 = sphi 0, %s318
      %s321 = sphi 0, %s320
      %s335 = sphi 0, %s321
      %s339 = sphi 0, %s339
      %s341 = sphi 0, %s339
      %s342 = sphi 0, %s341
      %s356 = sphi 0, %s342
      %s360 = sphi 0, %s360
      %s362 = sphi 0, %s360
      %s363 = sphi 0, %s362
      %s377 = sphi 0, %s363
      %s381 = sphi 0, %s381
      %s383 = sphi 0, %s381
      %s384 = sphi 0, %s383
      %s398 = sphi 0, %s384
      %s402 = sphi 0, %s402
      %s404 = sphi 0, %s402
      %s405 = sphi 0, %s404
      %s419 = sphi 0, %s405
      %s423 = sphi 0, %s423
      %s425 = sphi 0, %s423
      %s426 = sphi 0, %s425
      %s440 = sphi 0, %s426
      %s444 = sphi 0, %s444
      %s446 = sphi 0, %s444
      %s447 = sphi 0, %s446
      %s461 = sphi 0, %s447
      %s465 = sphi 0, %s465
      %s467 = sphi 0, %s465
      %s468 = sphi 0, %s467
      %s482 = sphi 0, %s468
      %s486 = sphi 0, %s486
      %s488 = sphi 0, %s486
      %s489 = sphi 0, %s488
      %s503 = sphi 0, %s489
      %s507 = sphi 0, %s507
      %s509 = sphi 0, %s507
      %s510 = sphi 0, %s509
      %s524 = sphi 0, %s510
      %s530 = sphi 0, %s532
      %s533 = sphi 0, %s530
      %s534 = sphi 0, %s533
      %s550 = sphi 0, %s534
    $region4: #{tpu_custom_call.1} parent=1 // loop_header_branch
      %35 = sbr.rel (%p33) target = $region8
    $region5: #{tpu_custom_call.1} parent=1 // loop_body
      %s37 = ssub.s32 %s32, 1
      %s38 = ssub.s32 %s32, 2
      %s39 = sadd.s32 %s32, 1
      %s40 = ssub.s32 %s32, %s39
      %p41 = scmp.eq.s32.totalorder %s40, 0
      %s43 = sadd.s32 %s42, 1
      %s44 = scalar_select %p41, %s42, %s43
      %p47 = pneg %p41
      %p48 = scmp.eq.s32.totalorder %s32, 1
      %p49 = por %p47, %p48
      %p50 = scmp.ne.s32.totalorder %s42, %s45
      %p51 = scmp.eq.s32.totalorder %s32, 0
      %p52 = por %p50, %p51
      %p53 = scmp.ne.s32.totalorder %s42, %s45
      %p54 = scmp.eq.s32.totalorder %s37, 1
      %p55 = por %p53, %p54
      %p56 = scmp.ne.s32.totalorder %s45, %s46
      %p57 = scmp.eq.s32.totalorder %s37, 0
      %p58 = por %p56, %p57
      %p59 = scmp.ne.s32.totalorder %s45, %s46
      %p60 = scmp.eq.s32.totalorder %s38, 1
      %p61 = por %p59, %p60
      %p63 = scmp.ne.s32.totalorder %s46, %s62
      %p64 = scmp.eq.s32.totalorder %s38, 0
      %p65 = por %p63, %p64
      %s67 = sadd.s32 %s66, 1
      %p70 = scmp.eq.s32.totalorder %s32, 1
      %p71 = scmp.ne.s32.totalorder %s66, %s68
      %p72 = scmp.eq.s32.totalorder %s32, 0
      %p73 = por %p71, %p72
      %p74 = scmp.ne.s32.totalorder %s66, %s68
      %p75 = scmp.eq.s32.totalorder %s37, 1
      %p76 = por %p74, %p75
      %p77 = scmp.ne.s32.totalorder %s68, %s69
      %p78 = scmp.eq.s32.totalorder %s37, 0
      %p79 = por %p77, %p78
      %p80 = scmp.ne.s32.totalorder %s68, %s69
      %p81 = scmp.eq.s32.totalorder %s38, 1
      %p82 = por %p80, %p81
      %p84 = scmp.ne.s32.totalorder %s69, %s83
      %p85 = scmp.eq.s32.totalorder %s38, 0
      %p86 = por %p84, %p85
      %s88 = sadd.s32 %s87, 1
      %p91 = scmp.eq.s32.totalorder %s32, 1
      %p92 = scmp.ne.s32.totalorder %s87, %s89
      %p93 = scmp.eq.s32.totalorder %s32, 0
      %p94 = por %p92, %p93
      %p95 = scmp.ne.s32.totalorder %s87, %s89
      %p96 = scmp.eq.s32.totalorder %s37, 1
      %p97 = por %p95, %p96
      %p98 = scmp.ne.s32.totalorder %s89, %s90
      %p99 = scmp.eq.s32.totalorder %s37, 0
      %p100 = por %p98, %p99
      %p101 = scmp.ne.s32.totalorder %s89, %s90
      %p102 = scmp.eq.s32.totalorder %s38, 1
      %p103 = por %p101, %p102
      %p105 = scmp.ne.s32.totalorder %s90, %s104
      %p106 = scmp.eq.s32.totalorder %s38, 0
      %p107 = por %p105, %p106
      %s109 = sadd.s32 %s108, 1
      %p112 = scmp.eq.s32.totalorder %s32, 1
      %p113 = scmp.ne.s32.totalorder %s108, %s110
      %p114 = scmp.eq.s32.totalorder %s32, 0
      %p115 = por %p113, %p114
      %p116 = scmp.ne.s32.totalorder %s108, %s110
      %p117 = scmp.eq.s32.totalorder %s37, 1
      %p118 = por %p116, %p117
      %p119 = scmp.ne.s32.totalorder %s110, %s111
      %p120 = scmp.eq.s32.totalorder %s37, 0
      %p121 = por %p119, %p120
      %p122 = scmp.ne.s32.totalorder %s110, %s111
      %p123 = scmp.eq.s32.totalorder %s38, 1
      %p124 = por %p122, %p123
      %p126 = scmp.ne.s32.totalorder %s111, %s125
      %p127 = scmp.eq.s32.totalorder %s38, 0
      %p128 = por %p126, %p127
      %s130 = sadd.s32 %s129, 1
      %p133 = scmp.eq.s32.totalorder %s32, 1
      %p134 = scmp.ne.s32.totalorder %s129, %s131
      %p135 = scmp.eq.s32.totalorder %s32, 0
      %p136 = por %p134, %p135
      %p137 = scmp.ne.s32.totalorder %s129, %s131
      %p138 = scmp.eq.s32.totalorder %s37, 1
      %p139 = por %p137, %p138
      %p140 = scmp.ne.s32.totalorder %s131, %s132
      %p141 = scmp.eq.s32.totalorder %s37, 0
      %p142 = por %p140, %p141
      %p143 = scmp.ne.s32.totalorder %s131, %s132
      %p144 = scmp.eq.s32.totalorder %s38, 1
      %p145 = por %p143, %p144
      %p147 = scmp.ne.s32.totalorder %s132, %s146
      %p148 = scmp.eq.s32.totalorder %s38, 0
      %p149 = por %p147, %p148
      %s151 = sadd.s32 %s150, 1
      %p154 = scmp.eq.s32.totalorder %s32, 1
      %p155 = scmp.ne.s32.totalorder %s150, %s152
      %p156 = scmp.eq.s32.totalorder %s32, 0
      %p157 = por %p155, %p156
      %p158 = scmp.ne.s32.totalorder %s150, %s152
      %p159 = scmp.eq.s32.totalorder %s37, 1
      %p160 = por %p158, %p159
      %p161 = scmp.ne.s32.totalorder %s152, %s153
      %p162 = scmp.eq.s32.totalorder %s37, 0
      %p163 = por %p161, %p162
      %p164 = scmp.ne.s32.totalorder %s152, %s153
      %p165 = scmp.eq.s32.totalorder %s38, 1
      %p166 = por %p164, %p165
      %p168 = scmp.ne.s32.totalorder %s153, %s167
      %p169 = scmp.eq.s32.totalorder %s38, 0
      %p170 = por %p168, %p169
      %s172 = sadd.s32 %s171, 1
      %p175 = scmp.eq.s32.totalorder %s32, 1
      %p176 = scmp.ne.s32.totalorder %s171, %s173
      %p177 = scmp.eq.s32.totalorder %s32, 0
      %p178 = por %p176, %p177
      %p179 = scmp.ne.s32.totalorder %s171, %s173
      %p180 = scmp.eq.s32.totalorder %s37, 1
      %p181 = por %p179, %p180
      %p182 = scmp.ne.s32.totalorder %s173, %s174
      %p183 = scmp.eq.s32.totalorder %s37, 0
      %p184 = por %p182, %p183
      %p185 = scmp.ne.s32.totalorder %s173, %s174
      %p186 = scmp.eq.s32.totalorder %s38, 1
      %p187 = por %p185, %p186
      %p189 = scmp.ne.s32.totalorder %s174, %s188
      %p190 = scmp.eq.s32.totalorder %s38, 0
      %p191 = por %p189, %p190
      %s193 = sadd.s32 %s192, 1
      %p196 = scmp.eq.s32.totalorder %s32, 1
      %p197 = scmp.ne.s32.totalorder %s192, %s194
      %p198 = scmp.eq.s32.totalorder %s32, 0
      %p199 = por %p197, %p198
      %p200 = scmp.ne.s32.totalorder %s192, %s194
      %p201 = scmp.eq.s32.totalorder %s37, 1
      %p202 = por %p200, %p201
      %p203 = scmp.ne.s32.totalorder %s194, %s195
      %p204 = scmp.eq.s32.totalorder %s37, 0
      %p205 = por %p203, %p204
      %p206 = scmp.ne.s32.totalorder %s194, %s195
      %p207 = scmp.eq.s32.totalorder %s38, 1
      %p208 = por %p206, %p207
      %p210 = scmp.ne.s32.totalorder %s195, %s209
      %p211 = scmp.eq.s32.totalorder %s38, 0
      %p212 = por %p210, %p211
      %s214 = sadd.s32 %s213, 1
      %p217 = scmp.eq.s32.totalorder %s32, 1
      %p218 = scmp.ne.s32.totalorder %s213, %s215
      %p219 = scmp.eq.s32.totalorder %s32, 0
      %p220 = por %p218, %p219
      %p221 = scmp.ne.s32.totalorder %s213, %s215
      %p222 = scmp.eq.s32.totalorder %s37, 1
      %p223 = por %p221, %p222
      %p224 = scmp.ne.s32.totalorder %s215, %s216
      %p225 = scmp.eq.s32.totalorder %s37, 0
      %p226 = por %p224, %p225
      %p227 = scmp.ne.s32.totalorder %s215, %s216
      %p228 = scmp.eq.s32.totalorder %s38, 1
      %p229 = por %p227, %p228
      %p231 = scmp.ne.s32.totalorder %s216, %s230
      %p232 = scmp.eq.s32.totalorder %s38, 0
      %p233 = por %p231, %p232
      %s235 = sadd.s32 %s234, 1
      %p238 = scmp.eq.s32.totalorder %s32, 1
      %p239 = scmp.ne.s32.totalorder %s234, %s236
      %p240 = scmp.eq.s32.totalorder %s32, 0
      %p241 = por %p239, %p240
      %p242 = scmp.ne.s32.totalorder %s234, %s236
      %p243 = scmp.eq.s32.totalorder %s37, 1
      %p244 = por %p242, %p243
      %p245 = scmp.ne.s32.totalorder %s236, %s237
      %p246 = scmp.eq.s32.totalorder %s37, 0
      %p247 = por %p245, %p246
      %p248 = scmp.ne.s32.totalorder %s236, %s237
      %p249 = scmp.eq.s32.totalorder %s38, 1
      %p250 = por %p248, %p249
      %p252 = scmp.ne.s32.totalorder %s237, %s251
      %p253 = scmp.eq.s32.totalorder %s38, 0
      %p254 = por %p252, %p253
      %s256 = sadd.s32 %s255, 1
      %p259 = scmp.eq.s32.totalorder %s32, 1
      %p260 = scmp.ne.s32.totalorder %s255, %s257
      %p261 = scmp.eq.s32.totalorder %s32, 0
      %p262 = por %p260, %p261
      %p263 = scmp.ne.s32.totalorder %s255, %s257
      %p264 = scmp.eq.s32.totalorder %s37, 1
      %p265 = por %p263, %p264
      %p266 = scmp.ne.s32.totalorder %s257, %s258
      %p267 = scmp.eq.s32.totalorder %s37, 0
      %p268 = por %p266, %p267
      %p269 = scmp.ne.s32.totalorder %s257, %s258
      %p270 = scmp.eq.s32.totalorder %s38, 1
      %p271 = por %p269, %p270
      %p273 = scmp.ne.s32.totalorder %s258, %s272
      %p274 = scmp.eq.s32.totalorder %s38, 0
      %p275 = por %p273, %p274
      %s277 = sadd.s32 %s276, 1
      %p280 = scmp.eq.s32.totalorder %s32, 1
      %p281 = scmp.ne.s32.totalorder %s276, %s278
      %p282 = scmp.eq.s32.totalorder %s32, 0
      %p283 = por %p281, %p282
      %p284 = scmp.ne.s32.totalorder %s276, %s278
      %p285 = scmp.eq.s32.totalorder %s37, 1
      %p286 = por %p284, %p285
      %p287 = scmp.ne.s32.totalorder %s278, %s279
      %p288 = scmp.eq.s32.totalorder %s37, 0
      %p289 = por %p287, %p288
      %p290 = scmp.ne.s32.totalorder %s278, %s279
      %p291 = scmp.eq.s32.totalorder %s38, 1
      %p292 = por %p290, %p291
      %p294 = scmp.ne.s32.totalorder %s279, %s293
      %p295 = scmp.eq.s32.totalorder %s38, 0
      %p296 = por %p294, %p295
      %s298 = sadd.s32 %s297, 1
      %p301 = scmp.eq.s32.totalorder %s32, 1
      %p302 = scmp.ne.s32.totalorder %s297, %s299
      %p303 = scmp.eq.s32.totalorder %s32, 0
      %p304 = por %p302, %p303
      %p305 = scmp.ne.s32.totalorder %s297, %s299
      %p306 = scmp.eq.s32.totalorder %s37, 1
      %p307 = por %p305, %p306
      %p308 = scmp.ne.s32.totalorder %s299, %s300
      %p309 = scmp.eq.s32.totalorder %s37, 0
      %p310 = por %p308, %p309
      %p311 = scmp.ne.s32.totalorder %s299, %s300
      %p312 = scmp.eq.s32.totalorder %s38, 1
      %p313 = por %p311, %p312
      %p315 = scmp.ne.s32.totalorder %s300, %s314
      %p316 = scmp.eq.s32.totalorder %s38, 0
      %p317 = por %p315, %p316
      %s319 = sadd.s32 %s318, 1
      %p322 = scmp.eq.s32.totalorder %s32, 1
      %p323 = scmp.ne.s32.totalorder %s318, %s320
      %p324 = scmp.eq.s32.totalorder %s32, 0
      %p325 = por %p323, %p324
      %p326 = scmp.ne.s32.totalorder %s318, %s320
      %p327 = scmp.eq.s32.totalorder %s37, 1
      %p328 = por %p326, %p327
      %p329 = scmp.ne.s32.totalorder %s320, %s321
      %p330 = scmp.eq.s32.totalorder %s37, 0
      %p331 = por %p329, %p330
      %p332 = scmp.ne.s32.totalorder %s320, %s321
      %p333 = scmp.eq.s32.totalorder %s38, 1
      %p334 = por %p332, %p333
      %p336 = scmp.ne.s32.totalorder %s321, %s335
      %p337 = scmp.eq.s32.totalorder %s38, 0
      %p338 = por %p336, %p337
      %s340 = sadd.s32 %s339, 1
      %p343 = scmp.eq.s32.totalorder %s32, 1
      %p344 = scmp.ne.s32.totalorder %s339, %s341
      %p345 = scmp.eq.s32.totalorder %s32, 0
      %p346 = por %p344, %p345
      %p347 = scmp.ne.s32.totalorder %s339, %s341
      %p348 = scmp.eq.s32.totalorder %s37, 1
      %p349 = por %p347, %p348
      %p350 = scmp.ne.s32.totalorder %s341, %s342
      %p351 = scmp.eq.s32.totalorder %s37, 0
      %p352 = por %p350, %p351
      %p353 = scmp.ne.s32.totalorder %s341, %s342
      %p354 = scmp.eq.s32.totalorder %s38, 1
      %p355 = por %p353, %p354
      %p357 = scmp.ne.s32.totalorder %s342, %s356
      %p358 = scmp.eq.s32.totalorder %s38, 0
      %p359 = por %p357, %p358
      %s361 = sadd.s32 %s360, 1
      %p364 = scmp.eq.s32.totalorder %s32, 1
      %p365 = scmp.ne.s32.totalorder %s360, %s362
      %p366 = scmp.eq.s32.totalorder %s32, 0
      %p367 = por %p365, %p366
      %p368 = scmp.ne.s32.totalorder %s360, %s362
      %p369 = scmp.eq.s32.totalorder %s37, 1
      %p370 = por %p368, %p369
      %p371 = scmp.ne.s32.totalorder %s362, %s363
      %p372 = scmp.eq.s32.totalorder %s37, 0
      %p373 = por %p371, %p372
      %p374 = scmp.ne.s32.totalorder %s362, %s363
      %p375 = scmp.eq.s32.totalorder %s38, 1
      %p376 = por %p374, %p375
      %p378 = scmp.ne.s32.totalorder %s363, %s377
      %p379 = scmp.eq.s32.totalorder %s38, 0
      %p380 = por %p378, %p379
      %s382 = sadd.s32 %s381, 1
      %p385 = scmp.eq.s32.totalorder %s32, 1
      %p386 = scmp.ne.s32.totalorder %s381, %s383
      %p387 = scmp.eq.s32.totalorder %s32, 0
      %p388 = por %p386, %p387
      %p389 = scmp.ne.s32.totalorder %s381, %s383
      %p390 = scmp.eq.s32.totalorder %s37, 1
      %p391 = por %p389, %p390
      %p392 = scmp.ne.s32.totalorder %s383, %s384
      %p393 = scmp.eq.s32.totalorder %s37, 0
      %p394 = por %p392, %p393
      %p395 = scmp.ne.s32.totalorder %s383, %s384
      %p396 = scmp.eq.s32.totalorder %s38, 1
      %p397 = por %p395, %p396
      %p399 = scmp.ne.s32.totalorder %s384, %s398
      %p400 = scmp.eq.s32.totalorder %s38, 0
      %p401 = por %p399, %p400
      %s403 = sadd.s32 %s402, 1
      %p406 = scmp.eq.s32.totalorder %s32, 1
      %p407 = scmp.ne.s32.totalorder %s402, %s404
      %p408 = scmp.eq.s32.totalorder %s32, 0
      %p409 = por %p407, %p408
      %p410 = scmp.ne.s32.totalorder %s402, %s404
      %p411 = scmp.eq.s32.totalorder %s37, 1
      %p412 = por %p410, %p411
      %p413 = scmp.ne.s32.totalorder %s404, %s405
      %p414 = scmp.eq.s32.totalorder %s37, 0
      %p415 = por %p413, %p414
      %p416 = scmp.ne.s32.totalorder %s404, %s405
      %p417 = scmp.eq.s32.totalorder %s38, 1
      %p418 = por %p416, %p417
      %p420 = scmp.ne.s32.totalorder %s405, %s419
      %p421 = scmp.eq.s32.totalorder %s38, 0
      %p422 = por %p420, %p421
      %s424 = sadd.s32 %s423, 1
      %p427 = scmp.eq.s32.totalorder %s32, 1
      %p428 = scmp.ne.s32.totalorder %s423, %s425
      %p429 = scmp.eq.s32.totalorder %s32, 0
      %p430 = por %p428, %p429
      %p431 = scmp.ne.s32.totalorder %s423, %s425
      %p432 = scmp.eq.s32.totalorder %s37, 1
      %p433 = por %p431, %p432
      %p434 = scmp.ne.s32.totalorder %s425, %s426
      %p435 = scmp.eq.s32.totalorder %s37, 0
      %p436 = por %p434, %p435
      %p437 = scmp.ne.s32.totalorder %s425, %s426
      %p438 = scmp.eq.s32.totalorder %s38, 1
      %p439 = por %p437, %p438
      %p441 = scmp.ne.s32.totalorder %s426, %s440
      %p442 = scmp.eq.s32.totalorder %s38, 0
      %p443 = por %p441, %p442
      %s445 = sadd.s32 %s444, 1
      %p448 = scmp.eq.s32.totalorder %s32, 1
      %p449 = scmp.ne.s32.totalorder %s444, %s446
      %p450 = scmp.eq.s32.totalorder %s32, 0
      %p451 = por %p449, %p450
      %p452 = scmp.ne.s32.totalorder %s444, %s446
      %p453 = scmp.eq.s32.totalorder %s37, 1
      %p454 = por %p452, %p453
      %p455 = scmp.ne.s32.totalorder %s446, %s447
      %p456 = scmp.eq.s32.totalorder %s37, 0
      %p457 = por %p455, %p456
      %p458 = scmp.ne.s32.totalorder %s446, %s447
      %p459 = scmp.eq.s32.totalorder %s38, 1
      %p460 = por %p458, %p459
      %p462 = scmp.ne.s32.totalorder %s447, %s461
      %p463 = scmp.eq.s32.totalorder %s38, 0
      %p464 = por %p462, %p463
      %s466 = sadd.s32 %s465, 1
      %p469 = scmp.eq.s32.totalorder %s32, 1
      %p470 = scmp.ne.s32.totalorder %s465, %s467
      %p471 = scmp.eq.s32.totalorder %s32, 0
      %p472 = por %p470, %p471
      %p473 = scmp.ne.s32.totalorder %s465, %s467
      %p474 = scmp.eq.s32.totalorder %s37, 1
      %p475 = por %p473, %p474
      %p476 = scmp.ne.s32.totalorder %s467, %s468
      %p477 = scmp.eq.s32.totalorder %s37, 0
      %p478 = por %p476, %p477
      %p479 = scmp.ne.s32.totalorder %s467, %s468
      %p480 = scmp.eq.s32.totalorder %s38, 1
      %p481 = por %p479, %p480
      %p483 = scmp.ne.s32.totalorder %s468, %s482
      %p484 = scmp.eq.s32.totalorder %s38, 0
      %p485 = por %p483, %p484
      %s487 = sadd.s32 %s486, 1
      %p490 = scmp.eq.s32.totalorder %s32, 1
      %p491 = scmp.ne.s32.totalorder %s486, %s488
      %p492 = scmp.eq.s32.totalorder %s32, 0
      %p493 = por %p491, %p492
      %p494 = scmp.ne.s32.totalorder %s486, %s488
      %p495 = scmp.eq.s32.totalorder %s37, 1
      %p496 = por %p494, %p495
      %p497 = scmp.ne.s32.totalorder %s488, %s489
      %p498 = scmp.eq.s32.totalorder %s37, 0
      %p499 = por %p497, %p498
      %p500 = scmp.ne.s32.totalorder %s488, %s489
      %p501 = scmp.eq.s32.totalorder %s38, 1
      %p502 = por %p500, %p501
      %p504 = scmp.ne.s32.totalorder %s489, %s503
      %p505 = scmp.eq.s32.totalorder %s38, 0
      %p506 = por %p504, %p505
      %s508 = sadd.s32 %s507, 1
      %p511 = scmp.eq.s32.totalorder %s32, 1
      %p512 = scmp.ne.s32.totalorder %s507, %s509
      %p513 = scmp.eq.s32.totalorder %s32, 0
      %p514 = por %p512, %p513
      %p515 = scmp.ne.s32.totalorder %s507, %s509
      %p516 = scmp.eq.s32.totalorder %s37, 1
      %p517 = por %p515, %p516
      %p518 = scmp.ne.s32.totalorder %s509, %s510
      %p519 = scmp.eq.s32.totalorder %s37, 0
      %p520 = por %p518, %p519
      %p521 = scmp.ne.s32.totalorder %s509, %s510
      %p522 = scmp.eq.s32.totalorder %s38, 1
      %p523 = por %p521, %p522
      %p525 = scmp.ne.s32.totalorder %s510, %s524
      %p526 = scmp.eq.s32.totalorder %s38, 0
      %p527 = por %p525, %p526
      %s528 = ssub.s32 %s32, %s39
      %p529 = scmp.eq.s32.totalorder %s528, 0
      %s531 = sadd.s32 %s530, 1
      %s532 = scalar_select %p529, %s530, %s531
      %p535 = pneg %p529
      %p536 = scmp.eq.s32.totalorder %s32, 1
      %p537 = por %p535, %p536
      %p538 = scmp.ne.s32.totalorder %s530, %s533
      %p539 = scmp.eq.s32.totalorder %s32, 0
      %p540 = por %p538, %p539
      %p541 = scmp.ne.s32.totalorder %s530, %s533
      %p542 = scmp.eq.s32.totalorder %s37, 1
      %p543 = por %p541, %p542
      %p544 = scmp.ne.s32.totalorder %s533, %s534
      %p545 = scmp.eq.s32.totalorder %s37, 0
      %p546 = por %p544, %p545
      %p547 = scmp.ne.s32.totalorder %s533, %s534
      %p548 = scmp.eq.s32.totalorder %s38, 1
      %p549 = por %p547, %p548
      %p551 = scmp.ne.s32.totalorder %s534, %s550
      %p552 = scmp.eq.s32.totalorder %s38, 0
      %p553 = por %p551, %p552
      %p554 = scmp.le.s32.totalorder 1, %s32
      %p555 = scmp.lt.s32.totalorder %s32, 3
      %p556 = pnand %p554, %p555
      %p557 = pneg %p556
      // Predicated region
      $region9: #{tpu_custom_call.1} parent=5 // pred_check
        _
      $region10: #{tpu_custom_call.1} parent=5 // pred_check_branch
        %559 = sbr.rel (%p556) target = $region12
      $region11: #{tpu_custom_call.1} parent=5 // pred_region
        %s560 = ssub.s32 %s32, 1
        // Predicated region
        $region13: #{tpu_custom_call.1} parent=11 // pred_check
          %p561 = pneg %p79
        $region14: #{tpu_custom_call.1} parent=11 // pred_check_branch
          %563 = sbr.rel (%p561) target = $region16
        $region15: #{tpu_custom_call.1} parent=11 // pred_region
          _
        $region16: #{tpu_custom_call.1} parent=11 // pred_fallthru
          _
        // Predicated region
        $region17: #{tpu_custom_call.1} parent=11 // pred_check
          %p564 = pneg %p100
        $region18: #{tpu_custom_call.1} parent=11 // pred_check_branch
          %566 = sbr.rel (%p564) target = $region20
        $region19: #{tpu_custom_call.1} parent=11 // pred_region
          _
        $region20: #{tpu_custom_call.1} parent=11 // pred_fallthru
          _
        // Predicated region
        $region21: #{tpu_custom_call.1} parent=11 // pred_check
          %p567 = pneg %p121
        $region22: #{tpu_custom_call.1} parent=11 // pred_check_branch
          %569 = sbr.rel (%p567) target = $region24
        $region23: #{tpu_custom_call.1} parent=11 // pred_region
          _
        $region24: #{tpu_custom_call.1} parent=11 // pred_fallthru
          _
        // Predicated region
        $region25: #{tpu_custom_call.1} parent=11 // pred_check
          %p570 = pneg %p142
        $region26: #{tpu_custom_call.1} parent=11 // pred_check_branch
          %572 = sbr.rel (%p570) target = $region28
        $region27: #{tpu_custom_call.1} parent=11 // pred_region
          _
        $region28: #{tpu_custom_call.1} parent=11 // pred_fallthru
          _
        // Predicated region
        $region29: #{tpu_custom_call.1} parent=11 // pred_check
          %p573 = pneg %p163
        $region30: #{tpu_custom_call.1} parent=11 // pred_check_branch
          %575 = sbr.rel (%p573) target = $region32
        $region31: #{tpu_custom_call.1} parent=11 // pred_region
          _
        $region32: #{tpu_custom_call.1} parent=11 // pred_fallthru
          _
        // Predicated region
        $region33: #{tpu_custom_call.1} parent=11 // pred_check
          %p576 = pneg %p184
        $region34: #{tpu_custom_call.1} parent=11 // pred_check_branch
          %578 = sbr.rel (%p576) target = $region36
        $region35: #{tpu_custom_call.1} parent=11 // pred_region
          _
        $region36: #{tpu_custom_call.1} parent=11 // pred_fallthru
          _
        // Predicated region
        $region37: #{tpu_custom_call.1} parent=11 // pred_check
          %p579 = pneg %p205
        $region38: #{tpu_custom_call.1} parent=11 // pred_check_branch
          %581 = sbr.rel (%p579) target = $region40
        $region39: #{tpu_custom_call.1} parent=11 // pred_region
          _
        $region40: #{tpu_custom_call.1} parent=11 // pred_fallthru
          _
        // Predicated region
        $region41: #{tpu_custom_call.1} parent=11 // pred_check
          %p582 = pneg %p226
        $region42: #{tpu_custom_call.1} parent=11 // pred_check_branch
          %584 = sbr.rel (%p582) target = $region44
        $region43: #{tpu_custom_call.1} parent=11 // pred_region
          _
        $region44: #{tpu_custom_call.1} parent=11 // pred_fallthru
          _
        // Predicated region
        $region45: #{tpu_custom_call.1} parent=11 // pred_check
          %p585 = pneg %p247
        $region46: #{tpu_custom_call.1} parent=11 // pred_check_branch
          %587 = sbr.rel (%p585) target = $region48
        $region47: #{tpu_custom_call.1} parent=11 // pred_region
          _
        $region48: #{tpu_custom_call.1} parent=11 // pred_fallthru
          _
        // Predicated region
        $region49: #{tpu_custom_call.1} parent=11 // pred_check
          %p588 = pneg %p268
        $region50: #{tpu_custom_call.1} parent=11 // pred_check_branch
          %590 = sbr.rel (%p588) target = $region52
        $region51: #{tpu_custom_call.1} parent=11 // pred_region
          _
        $region52: #{tpu_custom_call.1} parent=11 // pred_fallthru
          _
        // Predicated region
        $region53: #{tpu_custom_call.1} parent=11 // pred_check
          %p591 = pneg %p289
        $region54: #{tpu_custom_call.1} parent=11 // pred_check_branch
          %593 = sbr.rel (%p591) target = $region56
        $region55: #{tpu_custom_call.1} parent=11 // pred_region
          _
        $region56: #{tpu_custom_call.1} parent=11 // pred_fallthru
          _
        // Predicated region
        $region57: #{tpu_custom_call.1} parent=11 // pred_check
          %p594 = pneg %p310
        $region58: #{tpu_custom_call.1} parent=11 // pred_check_branch
          %596 = sbr.rel (%p594) target = $region60
        $region59: #{tpu_custom_call.1} parent=11 // pred_region
          _
        $region60: #{tpu_custom_call.1} parent=11 // pred_fallthru
          _
        // Predicated region
        $region61: #{tpu_custom_call.1} parent=11 // pred_check
          %p597 = pneg %p331
        $region62: #{tpu_custom_call.1} parent=11 // pred_check_branch
          %599 = sbr.rel (%p597) target = $region64
        $region63: #{tpu_custom_call.1} parent=11 // pred_region
          _
        $region64: #{tpu_custom_call.1} parent=11 // pred_fallthru
          _
        // Predicated region
        $region65: #{tpu_custom_call.1} parent=11 // pred_check
          %p600 = pneg %p352
        $region66: #{tpu_custom_call.1} parent=11 // pred_check_branch
          %602 = sbr.rel (%p600) target = $region68
        $region67: #{tpu_custom_call.1} parent=11 // pred_region
          _
        $region68: #{tpu_custom_call.1} parent=11 // pred_fallthru
          _
        // Predicated region
        $region69: #{tpu_custom_call.1} parent=11 // pred_check
          %p603 = pneg %p373
        $region70: #{tpu_custom_call.1} parent=11 // pred_check_branch
          %605 = sbr.rel (%p603) target = $region72
        $region71: #{tpu_custom_call.1} parent=11 // pred_region
          _
        $region72: #{tpu_custom_call.1} parent=11 // pred_fallthru
          _
        // Predicated region
        $region73: #{tpu_custom_call.1} parent=11 // pred_check
          %p606 = pneg %p394
        $region74: #{tpu_custom_call.1} parent=11 // pred_check_branch
          %608 = sbr.rel (%p606) target = $region76
        $region75: #{tpu_custom_call.1} parent=11 // pred_region
          _
        $region76: #{tpu_custom_call.1} parent=11 // pred_fallthru
          _
        // Predicated region
        $region77: #{tpu_custom_call.1} parent=11 // pred_check
          %p609 = pneg %p415
        $region78: #{tpu_custom_call.1} parent=11 // pred_check_branch
          %611 = sbr.rel (%p609) target = $region80
        $region79: #{tpu_custom_call.1} parent=11 // pred_region
          _
        $region80: #{tpu_custom_call.1} parent=11 // pred_fallthru
          _
        // Predicated region
        $region81: #{tpu_custom_call.1} parent=11 // pred_check
          %p612 = pneg %p436
        $region82: #{tpu_custom_call.1} parent=11 // pred_check_branch
          %614 = sbr.rel (%p612) target = $region84
        $region83: #{tpu_custom_call.1} parent=11 // pred_region
          _
        $region84: #{tpu_custom_call.1} parent=11 // pred_fallthru
          _
        // Predicated region
        $region85: #{tpu_custom_call.1} parent=11 // pred_check
          %p615 = pneg %p457
        $region86: #{tpu_custom_call.1} parent=11 // pred_check_branch
          %617 = sbr.rel (%p615) target = $region88
        $region87: #{tpu_custom_call.1} parent=11 // pred_region
          _
        $region88: #{tpu_custom_call.1} parent=11 // pred_fallthru
          _
        // Predicated region
        $region89: #{tpu_custom_call.1} parent=11 // pred_check
          %p618 = pneg %p478
        $region90: #{tpu_custom_call.1} parent=11 // pred_check_branch
          %620 = sbr.rel (%p618) target = $region92
        $region91: #{tpu_custom_call.1} parent=11 // pred_region
          _
        $region92: #{tpu_custom_call.1} parent=11 // pred_fallthru
          _
        // Predicated region
        $region93: #{tpu_custom_call.1} parent=11 // pred_check
          %p621 = pneg %p499
        $region94: #{tpu_custom_call.1} parent=11 // pred_check_branch
          %623 = sbr.rel (%p621) target = $region96
        $region95: #{tpu_custom_call.1} parent=11 // pred_region
          _
        $region96: #{tpu_custom_call.1} parent=11 // pred_fallthru
          _
        // Predicated region
        $region97: #{tpu_custom_call.1} parent=11 // pred_check
          %p624 = pneg %p520
        $region98: #{tpu_custom_call.1} parent=11 // pred_check_branch
          %626 = sbr.rel (%p624) target = $region100
        $region99: #{tpu_custom_call.1} parent=11 // pred_region
          _
        $region100: #{tpu_custom_call.1} parent=11 // pred_fallthru
          _
      $region12: #{tpu_custom_call.1} parent=5 // pred_fallthru
        _
      %p627 = scmp.lt.s32.totalorder %s32, 2
      // Predicated region
      $region101: #{tpu_custom_call.1} parent=5 // pred_check
        %p628 = pneg %p627
      $region102: #{tpu_custom_call.1} parent=5 // pred_check_branch
        %630 = sbr.rel (%p628) target = $region104
      $region103: #{tpu_custom_call.1} parent=5 // pred_region
        // Predicated region
        $region105: #{tpu_custom_call.1} parent=103 // pred_check
          %p631 = pneg %p52
        $region106: #{tpu_custom_call.1} parent=103 // pred_check_branch
          %633 = sbr.rel (%p631) target = $region108
        $region107: #{tpu_custom_call.1} parent=103 // pred_region
          %p634 = scmp.lt.s32.totalorder %s32, 1
          %s635 = scalar_select %p634, %s32, 1
          %s636 = smul.addr %s635, 6
          %s637 = smul.addr %s636, 8
          %s638 = scalar_lea.vmem %s0, %s637
        $region108: #{tpu_custom_call.1} parent=103 // pred_fallthru
          _
      $region104: #{tpu_custom_call.1} parent=5 // pred_fallthru
        _
      %p639 = scmp.le.s32.totalorder 1, %s32
      %p640 = scmp.lt.s32.totalorder %s32, 3
      %p641 = pnand %p639, %p640
      %p642 = pneg %p641
      // Predicated region
      $region109: #{tpu_custom_call.1} parent=5 // pred_check
        _
      $region110: #{tpu_custom_call.1} parent=5 // pred_check_branch
        %644 = sbr.rel (%p641) target = $region112
      $region111: #{tpu_custom_call.1} parent=5 // pred_region
        %s645 = ssub.s32 %s32, 1
        %p646 = scmp.lt.s32.totalorder %s37, 1
        %s647 = scalar_select %p646, %s37, 1
        %s648 = smul.addr %s647, 6
        %s649 = smul.addr %s648, 8
        %s650 = scalar_lea.vmem %s0, %s649
        %p651 = pneg %p58
        %p652 = pneg %p55
        %p653 = pneg %p79
        %p654 = pneg %p76
        %p655 = pneg %p100
        %p656 = pneg %p97
        %p657 = pneg %p121
        %p658 = pneg %p118
        %p659 = pneg %p142
        %p660 = pneg %p139
        %p661 = pneg %p163
        %p662 = pneg %p160
        %p663 = pneg %p184
        %p664 = pneg %p181
        %p665 = pneg %p205
        %p666 = pneg %p202
        %p667 = pneg %p226
        %p668 = pneg %p223
        %p669 = pneg %p247
        %p670 = pneg %p244
        %p671 = pneg %p268
        %p672 = pneg %p265
        %p673 = pneg %p289
        %p674 = pneg %p286
        %p675 = pneg %p310
        %p676 = pneg %p307
        %p677 = pneg %p331
        %p678 = pneg %p328
        %p679 = pneg %p352
        %p680 = pneg %p349
        %p681 = pneg %p373
        %p682 = pneg %p370
        %p683 = pneg %p394
        %p684 = pneg %p391
        %p685 = pneg %p415
        %p686 = pneg %p412
        %p687 = pneg %p436
        %p688 = pneg %p433
        %p689 = pneg %p457
        %p690 = pneg %p454
        %p691 = pneg %p478
        %p692 = pneg %p475
        %p693 = pneg %p499
        %p694 = pneg %p496
        %p695 = pneg %p520
        %p696 = pneg %p517
        %p697 = pneg %p546
        %p698 = pneg %p543
        %s699 = sand.u32 %s533, 1
        %s700 = scalar_lea.sflag [#allocation3], %s699
        %s701 = sand.u32 %s533, 1
        %s702 = smul.addr %s701, 48
        %s703 = scalar_lea.vmem [#allocation2], %s702
        %p704 = scmp.lt.s32.totalorder %s37, 1
        %s705 = scalar_select %p704, %s37, 1
        %s706 = smul.addr %s705, 6
        %s707 = smul.addr %s706, 8
        %s708 = scalar_lea.vmem %s0, %s707
        %v709 = vld [vmem:[%s708] sm:$0xff]
        %v710 = vld [vmem:[%s708 + $0x8] sm:$0xff]
        %v711 = vld [vmem:[%s708 + $0x10] sm:$0xff]
        %v712 = vld [vmem:[%s708 + $0x18] sm:$0xff]
        %v713 = vld [vmem:[%s708 + $0x20] sm:$0xff]
        %v714 = vld [vmem:[%s708 + $0x28] sm:$0xff]
        %v715 = vld [vmem:[%s18] sm:$0xff]
        %v716 = vld [vmem:[%s18 + $0x8] sm:$0xff]
        %v717 = vld [vmem:[%s18 + $0x10] sm:$0xff]
        %v718 = vld [vmem:[%s18 + $0x18] sm:$0xff]
        %v719 = vld [vmem:[%s18 + $0x20] sm:$0xff]
        %v720 = vld [vmem:[%s18 + $0x28] sm:$0xff]
        %v721 = vld [vmem:[%s18 + $0x30] sm:$0xff]
        %v722 = vld [vmem:[%s18 + $0x38] sm:$0xff]
        %v723 = vld [vmem:[%s18 + $0x40] sm:$0xff]
        %v724 = vld [vmem:[%s18 + $0x48] sm:$0xff]
        %v725 = vld [vmem:[%s18 + $0x50] sm:$0xff]
        %v726 = vld [vmem:[%s18 + $0x58] sm:$0xff]
        %v727 = vld [vmem:[%s18 + $0x60] sm:$0xf]
        %v728 = vld [vmem:[%s18 + $0x68] sm:$0xf]
        %v729 = vld [vmem:[%s18 + $0x70] sm:$0xf]
        %v730 = vld [vmem:[%s1] sm:$0xff]
        %vm731 = vcmask 138240
        %v733 = vsel %vm731, %v730, 0
        %vm735 = vcmask 1040384
        %v737 = vsel %vm735, 1.0, 0
        %739 = vmatpush.msra.mxu0 0.0
        %740 = vmatpush.msra.mxu0 0.0
        %741 = vmatpush.msra.mxu0 0.0
        %742 = vmatpush.msra.mxu0 0.0
        %743 = vmatpush.msra.mxu0 0.0
        %744 = vmatpush.msra.mxu0 0.0
        %745 = vmatpush.msra.mxu0 0.0
        %746 = vmatpush.msra.mxu0 0.0
        %747 = vmatpush.msra.mxu0 0.0
        %748 = vmatpush.msra.mxu0 0.0
        %749 = vmatpush.msra.mxu0 0.0
        %750 = vmatpush.msra.mxu0 0.0
        %751 = vmatpush.msra.mxu0 0.0
        %752 = vmatpush.msra.mxu0 %v737
        %753 = vmatpush.msra.mxu0 %v712
        %754 = vmatpush.msra.mxu0 %v709
        %755 = vmatmul.f32.gmra.mxu0 %v733
        %v756 = vpop.f32.mrf.mxu0
        %v757 = vadd.f32 0.0, %v756
        %758 = vdwg.mxu0
        %759 = vmatpush.msra.mxu0 0.0
        %760 = vmatpush.msra.mxu0 0.0
        %761 = vmatpush.msra.mxu0 0.0
        %762 = vmatpush.msra.mxu0 0.0
        %763 = vmatpush.msra.mxu0 0.0
        %764 = vmatpush.msra.mxu0 0.0
        %765 = vmatpush.msra.mxu0 0.0
        %766 = vmatpush.msra.mxu0 0.0
        %767 = vmatpush.msra.mxu0 0.0
        %768 = vmatpush.msra.mxu0 0.0
        %769 = vmatpush.msra.mxu0 0.0
        %770 = vmatpush.msra.mxu0 0.0
        %771 = vmatpush.msra.mxu0 0.0
        %772 = vmatpush.msra.mxu0 %v737
        %773 = vmatpush.msra.mxu0 %v713
        %774 = vmatpush.msra.mxu0 %v710
        %775 = vmatmul.f32.gmra.mxu0 %v733
        %v776 = vpop.f32.mrf.mxu0
        %v777 = vadd.f32 0.0, %v776
        %778 = vdwg.mxu0
        %779 = vmatpush.msra.mxu0 0.0
        %780 = vmatpush.msra.mxu0 0.0
        %781 = vmatpush.msra.mxu0 0.0
        %782 = vmatpush.msra.mxu0 0.0
        %783 = vmatpush.msra.mxu0 0.0
        %784 = vmatpush.msra.mxu0 0.0
        %785 = vmatpush.msra.mxu0 0.0
        %786 = vmatpush.msra.mxu0 0.0
        %787 = vmatpush.msra.mxu0 0.0
        %788 = vmatpush.msra.mxu0 0.0
        %789 = vmatpush.msra.mxu0 0.0
        %790 = vmatpush.msra.mxu0 0.0
        %791 = vmatpush.msra.mxu0 0.0
        %792 = vmatpush.msra.mxu0 %v737
        %793 = vmatpush.msra.mxu0 %v714
        %794 = vmatpush.msra.mxu0 %v711
        %795 = vmatmul.f32.gmra.mxu0 %v733
        %v796 = vpop.f32.mrf.mxu0
        %v797 = vadd.f32 0.0, %v796
        %798 = vdwg.mxu0
        %v799 = vmax.f32 %v757, 0.0
        %v800 = vmax.f32 %v777, 0.0
        %v801 = vmax.f32 %v797, 0.0
        %v802 = vld [vmem:[%s2] sm:$0xf]
        %804 = vrot.lane.b32.xlu0 %v801, 25
        %v805 = vpop.permute.xlu0 %804
        %809 = vrot.lane.b32.xlu0 %v799, 25
        %v810 = vpop.permute.xlu0 %809
        %811 = vrot.lane.b32.xlu0 %v800, 25
        %v812 = vpop.permute.xlu0 %811
        %vm813 = vcmask 203776
        %v814 = vsel %vm813, %v810, %v812
        %v815 = vsel %vm813, %v812, %v805
        %v819 = vsel %vm813, %v805, %v810
        %820 = vrot.lane.b32.xlu0 %v801, 24
        %v821 = vpop.permute.xlu0 %820
        %823 = vrot.lane.b32.xlu0 %v799, 24
        %v824 = vpop.permute.xlu0 %823
        %825 = vrot.lane.b32.xlu0 %v800, 24
        %v826 = vpop.permute.xlu0 %825
        %vm827 = vcmask 195584
        %v828 = vsel %vm827, %v824, %v826
        %v829 = vsel %vm827, %v826, %v821
        %v831 = vsel %vm827, %v821, %v824
        %832 = vrot.lane.b32.xlu0 %v801, 23
        %v833 = vpop.permute.xlu0 %832
        %835 = vrot.lane.b32.xlu0 %v799, 23
        %v836 = vpop.permute.xlu0 %835
        %837 = vrot.lane.b32.xlu0 %v800, 23
        %v838 = vpop.permute.xlu0 %837
        %vm839 = vcmask 187392
        %v840 = vsel %vm839, %v836, %v838
        %v841 = vsel %vm839, %v838, %v833
        %v845 = vsel %vm839, %v833, %v836
        %846 = vrot.lane.b32.xlu0 %v801, 1
        %v847 = vpop.permute.xlu0 %846
        %849 = vrot.lane.b32.xlu0 %v799, 1
        %v850 = vpop.permute.xlu0 %849
        %851 = vrot.lane.b32.xlu0 %v800, 1
        %v852 = vpop.permute.xlu0 %851
        %vm853 = vcmask 7168
        %v854 = vsel %vm853, %v850, %v852
        %v855 = vsel %vm853, %v852, %v847
        %v857 = vsel %vm853, %v847, %v850
        %858 = vrot.lane.b32.xlu0 %v799, 127
        %v859 = vpop.permute.xlu0 %858
        %860 = vrot.lane.b32.xlu0 %v800, 127
        %v861 = vpop.permute.xlu0 %860
        %862 = vrot.lane.b32.xlu0 %v801, 127
        %v863 = vpop.permute.xlu0 %862
        %vm864 = vcmask 1039360
        %v865 = vsel %vm864, %v859, %v861
        %v866 = vsel %vm864, %v861, %v863
        %v869 = vsel %vm864, %v863, %v859
        %870 = vrot.lane.b32.xlu0 %v799, 105
        %v871 = vpop.permute.xlu0 %870
        %872 = vrot.lane.b32.xlu0 %v800, 105
        %v873 = vpop.permute.xlu0 %872
        %874 = vrot.lane.b32.xlu0 %v801, 105
        %v875 = vpop.permute.xlu0 %874
        %vm876 = vcmask 859136
        %v877 = vsel %vm876, %v871, %v873
        %v878 = vsel %vm876, %v873, %v875
        %v883 = vsel %vm876, %v875, %v871
        %884 = vrot.lane.b32.xlu0 %v799, 104
        %v885 = vpop.permute.xlu0 %884
        %886 = vrot.lane.b32.xlu0 %v800, 104
        %v887 = vpop.permute.xlu0 %886
        %888 = vrot.lane.b32.xlu0 %v801, 104
        %v889 = vpop.permute.xlu0 %888
        %vm890 = vcmask 850944
        %v891 = vsel %vm890, %v885, %v887
        %v892 = vsel %vm890, %v887, %v889
        %v895 = vsel %vm890, %v889, %v885
        %896 = vrot.lane.b32.xlu0 %v799, 103
        %v897 = vpop.permute.xlu0 %896
        %898 = vrot.lane.b32.xlu0 %v800, 103
        %v899 = vpop.permute.xlu0 %898
        %900 = vrot.lane.b32.xlu0 %v801, 103
        %v901 = vpop.permute.xlu0 %900
        %vm902 = vcmask 842752
        %v903 = vsel %vm902, %v897, %v899
        %v904 = vsel %vm902, %v899, %v901
        %v909 = vsel %vm902, %v901, %v897
        %v911 = vrot.slane %v831, 4
        %v912 = vrot.slane %v828, 4
        %v913 = vrot.slane %v829, 4
        %v918 = vrot.slane %v857, 4
        %v919 = vrot.slane %v854, 4
        %v920 = vrot.slane %v855, 4
        %v925 = vrot.slane %v865, 4
        %v926 = vrot.slane %v866, 4
        %v927 = vrot.slane %v869, 4
        %v932 = vrot.slane %v891, 4
        %v933 = vrot.slane %v892, 4
        %v934 = vrot.slane %v895, 4
        %vm938 = vcmask 1043456
        %v939 = vsel %vm938, %v819, %v911
        %v940 = vsel %vm938, %v814, %v912
        %v941 = vsel %vm938, %v815, %v913
        %v942 = vsel %vm938, %v845, %v918
        %v943 = vsel %vm938, %v840, %v919
        %v944 = vsel %vm938, %v841, %v920
        %v945 = vsel %vm938, %v799, %v925
        %v946 = vsel %vm938, %v800, %v926
        %v947 = vsel %vm938, %v801, %v927
        %v948 = vsel %vm938, %v877, %v932
        %v949 = vsel %vm938, %v878, %v933
        %v950 = vsel %vm938, %v883, %v934
        %v951 = vmul.f32 %v939, %v715
        %v952 = vmul.f32 %v940, %v716
        %v953 = vmul.f32 %v941, %v717
        %v954 = vmul.f32 %v942, %v718
        %v955 = vmul.f32 %v943, %v719
        %v956 = vmul.f32 %v944, %v720
        %v957 = vmul.f32 %v945, %v721
        %v958 = vmul.f32 %v946, %v722
        %v959 = vmul.f32 %v947, %v723
        %v960 = vmul.f32 %v948, %v724
        %v961 = vmul.f32 %v949, %v725
        %v962 = vmul.f32 %v950, %v726
        %v963 = vmul.f32 %v903, %v727
        %v964 = vmul.f32 %v904, %v728
        %v965 = vmul.f32 %v909, %v729
        %v966 = vsel %vm938, %v963, 1.0
        %v967 = vsel %vm938, %v964, 1.0
        %v968 = vsel %vm938, %v965, 1.0
        %v969 = vld [vmem:[%s10] sm:$0xff]
        %v970 = vld [vmem:[%s10 + $0x8] sm:$0xff]
        %v971 = vld [vmem:[%s10 + $0x10] sm:$0xff]
        %v972 = vld [vmem:[%s10 + $0x18] sm:$0xff]
        %v973 = vld [vmem:[%s10 + $0x20] sm:$0xff]
        %v974 = vld [vmem:[%s10 + $0x28] sm:$0xff]
        %v975 = vld [vmem:[%s10 + $0x30] sm:$0xff]
        %v976 = vld [vmem:[%s10 + $0x38] sm:$0xff]
        %v977 = vld [vmem:[%s10 + $0x40] sm:$0xff]
        %v978 = vld [vmem:[%s10 + $0x48] sm:$0xff]
        %v979 = vld [vmem:[%s10 + $0x50] sm:$0xff]
        %v980 = vld [vmem:[%s10 + $0x58] sm:$0xff]
        %v981 = vld [vmem:[%s10 + $0x60] sm:$0xff]
        %v982 = vld [vmem:[%s10 + $0x68] sm:$0xff]
        %v983 = vld [vmem:[%s10 + $0x70] sm:$0xff]
        %v984 = vld [vmem:[%s10 + $0x78] sm:$0xff]
        %v985 = vld [vmem:[%s10 + $0x80] sm:$0xff]
        %v986 = vld [vmem:[%s10 + $0x88] sm:$0xff]
        %v987 = vld [vmem:[%s10 + $0x90] sm:$0xff]
        %v988 = vld [vmem:[%s10 + $0x98] sm:$0xff]
        %v989 = vld [vmem:[%s10 + $0xa0] sm:$0xff]
        %v990 = vld [vmem:[%s10 + $0xa8] sm:$0xff]
        %v991 = vld [vmem:[%s10 + $0xb0] sm:$0xff]
        %v992 = vld [vmem:[%s10 + $0xb8] sm:$0xff]
        %v993 = vld [vmem:[%s10 + $0xc0] sm:$0xff]
        %v994 = vld [vmem:[%s10 + $0xc8] sm:$0xff]
        %v995 = vld [vmem:[%s10 + $0xd0] sm:$0xff]
        %v996 = vld [vmem:[%s10 + $0xd8] sm:$0xff]
        %v997 = vld [vmem:[%s10 + $0xe0] sm:$0xff]
        %v998 = vld [vmem:[%s10 + $0xe8] sm:$0xff]
        %v999 = vld [vmem:[%s10 + $0xf0] sm:$0xff]
        %v1000 = vld [vmem:[%s10 + $0xf8] sm:$0xff]
        %v1001 = vld [vmem:[%s10 + $0x100] sm:$0xff]
        %v1002 = vld [vmem:[%s10 + $0x108] sm:$0xff]
        %v1003 = vld [vmem:[%s10 + $0x110] sm:$0xff]
        %v1004 = vld [vmem:[%s10 + $0x118] sm:$0xff]
        %v1005 = vld [vmem:[%s10 + $0x120] sm:$0xff]
        %v1006 = vld [vmem:[%s10 + $0x128] sm:$0xff]
        %v1007 = vld [vmem:[%s10 + $0x130] sm:$0xff]
        %v1008 = vld [vmem:[%s10 + $0x138] sm:$0xff]
        %v1009 = vld [vmem:[%s10 + $0x140] sm:$0xff]
        %v1010 = vld [vmem:[%s10 + $0x148] sm:$0xff]
        %v1011 = vld [vmem:[%s10 + $0x150] sm:$0xff]
        %v1012 = vld [vmem:[%s10 + $0x158] sm:$0xff]
        %v1013 = vld [vmem:[%s10 + $0x160] sm:$0xff]
        %v1014 = vld [vmem:[%s10 + $0x168] sm:$0xff]
        %v1015 = vld [vmem:[%s10 + $0x170] sm:$0xff]
        %v1016 = vld [vmem:[%s10 + $0x178] sm:$0xff]
        %1017 = vmatpush.msra.mxu0 %v984
        %1018 = vmatpush.msra.mxu0 %v983
        %1019 = vmatpush.msra.mxu0 %v982
        %1020 = vmatpush.msra.mxu0 %v981
        %1021 = vmatpush.msra.mxu0 %v980
        %1022 = vmatpush.msra.mxu0 %v979
        %1023 = vmatpush.msra.mxu0 %v978
        %1024 = vmatpush.msra.mxu0 %v977
        %1025 = vmatpush.msra.mxu0 %v976
        %1026 = vmatpush.msra.mxu0 %v975
        %1027 = vmatpush.msra.mxu0 %v974
        %1028 = vmatpush.msra.mxu0 %v973
        %1029 = vmatpush.msra.mxu0 %v972
        %1030 = vmatpush.msra.mxu0 %v971
        %1031 = vmatpush.msra.mxu0 %v970
        %1032 = vmatpush.msra.mxu0 %v969
        %1033 = vmatmul.f32.gmra.mxu0 %v799
        %v1034 = vpop.f32.mrf.mxu0
        %v1035 = vadd.f32 0.0, %v1034
        %1036 = vdwg.mxu0
        %1037 = vmatpush.msra.mxu0 %v1000
        %1038 = vmatpush.msra.mxu0 %v999
        %1039 = vmatpush.msra.mxu0 %v998
        %1040 = vmatpush.msra.mxu0 %v997
        %1041 = vmatpush.msra.mxu0 %v996
        %1042 = vmatpush.msra.mxu0 %v995
        %1043 = vmatpush.msra.mxu0 %v994
        %1044 = vmatpush.msra.mxu0 %v993
        %1045 = vmatpush.msra.mxu0 %v992
        %1046 = vmatpush.msra.mxu0 %v991
        %1047 = vmatpush.msra.mxu0 %v990
        %1048 = vmatpush.msra.mxu0 %v989
        %1049 = vmatpush.msra.mxu0 %v988
        %1050 = vmatpush.msra.mxu0 %v987
        %1051 = vmatpush.msra.mxu0 %v986
        %1052 = vmatpush.msra.mxu0 %v985
        %1053 = vmatmul.f32.gmra.mxu0 %v800
        %v1054 = vpop.f32.mrf.mxu0
        %v1055 = vadd.f32 %v1035, %v1054
        %1056 = vdwg.mxu0
        %1057 = vmatpush.msra.mxu0 %v1016
        %1058 = vmatpush.msra.mxu0 %v1015
        %1059 = vmatpush.msra.mxu0 %v1014
        %1060 = vmatpush.msra.mxu0 %v1013
        %1061 = vmatpush.msra.mxu0 %v1012
        %1062 = vmatpush.msra.mxu0 %v1011
        %1063 = vmatpush.msra.mxu0 %v1010
        %1064 = vmatpush.msra.mxu0 %v1009
        %1065 = vmatpush.msra.mxu0 %v1008
        %1066 = vmatpush.msra.mxu0 %v1007
        %1067 = vmatpush.msra.mxu0 %v1006
        %1068 = vmatpush.msra.mxu0 %v1005
        %1069 = vmatpush.msra.mxu0 %v1004
        %1070 = vmatpush.msra.mxu0 %v1003
        %1071 = vmatpush.msra.mxu0 %v1002
        %1072 = vmatpush.msra.mxu0 %v1001
        %1073 = vmatmul.f32.gmra.mxu0 %v801
        %v1074 = vpop.f32.mrf.mxu0
        %v1075 = vadd.f32 %v1055, %v1074
        %1076 = vdwg.mxu0
        %v1077 = vld [vmem:[%s3] sm:$0xf]
        %v1078 = vld [vmem:[%s19] sm:$0xff]
        %v1079 = vld [vmem:[%s19 + $0x8] sm:$0xff]
        %v1080 = vld [vmem:[%s19 + $0x10] sm:$0xff]
        %v1081 = vld [vmem:[%s19 + $0x18] sm:$0xff]
        %v1082 = vld [vmem:[%s19 + $0x20] sm:$0xf]
        %1084 = vrot.lane.b32.xlu0 %v1075, 117
        %v1085 = vpop.permute.xlu0 %1084
        %1087 = vrot.lane.b32.xlu0 %v1075, 5
        %v1088 = vpop.permute.xlu0 %1087
        %vm1090 = vcmask 39936
        %v1091 = vsel %vm1090, %v1085, %v1088
        %1092 = vrot.lane.b32.xlu0 %v1075, 116
        %v1093 = vpop.permute.xlu0 %1092
        %1095 = vrot.lane.b32.xlu0 %v1075, 4
        %v1096 = vpop.permute.xlu0 %1095
        %vm1098 = vcmask 31744
        %v1099 = vsel %vm1098, %v1093, %v1096
        %1100 = vrot.lane.b32.xlu0 %v1075, 115
        %v1101 = vpop.permute.xlu0 %1100
        %1103 = vrot.lane.b32.xlu0 %v1075, 3
        %v1104 = vpop.permute.xlu0 %1103
        %vm1106 = vcmask 23552
        %v1107 = vsel %vm1106, %v1101, %v1104
        %1108 = vrot.lane.b32.xlu0 %v1075, 113
        %v1109 = vpop.permute.xlu0 %1108
        %1111 = vrot.lane.b32.xlu0 %v1075, 1
        %v1112 = vpop.permute.xlu0 %1111
        %v1114 = vsel %vm853, %v1109, %v1112
        %1115 = vrot.lane.b32.xlu0 %v1075, 127
        %v1116 = vpop.permute.xlu0 %1115
        %1118 = vrot.lane.b32.xlu0 %v1075, 15
        %v1119 = vpop.permute.xlu0 %1118
        %vm1121 = vcmask 121856
        %v1122 = vsel %vm1121, %v1116, %v1119
        %1123 = vrot.lane.b32.xlu0 %v1075, 125
        %v1124 = vpop.permute.xlu0 %1123
        %1126 = vrot.lane.b32.xlu0 %v1075, 13
        %v1127 = vpop.permute.xlu0 %1126
        %vm1129 = vcmask 105472
        %v1130 = vsel %vm1129, %v1124, %v1127
        %1131 = vrot.lane.b32.xlu0 %v1075, 124
        %v1132 = vpop.permute.xlu0 %1131
        %1134 = vrot.lane.b32.xlu0 %v1075, 12
        %v1135 = vpop.permute.xlu0 %1134
        %vm1137 = vcmask 97280
        %v1138 = vsel %vm1137, %v1132, %v1135
        %1139 = vrot.lane.b32.xlu0 %v1075, 123
        %v1140 = vpop.permute.xlu0 %1139
        %1142 = vrot.lane.b32.xlu0 %v1075, 11
        %v1143 = vpop.permute.xlu0 %1142
        %vm1145 = vcmask 89088
        %v1146 = vsel %vm1145, %v1140, %v1143
        %v1148 = vrot.slane %v1099, 4
        %v1151 = vrot.slane %v1114, 4
        %v1154 = vrot.slane %v1122, 4
        %v1157 = vrot.slane %v1138, 4
        %v1159 = vsel %vm938, %v1091, %v1148
        %v1160 = vsel %vm938, %v1107, %v1151
        %v1161 = vsel %vm938, %v1075, %v1154
        %v1162 = vsel %vm938, %v1130, %v1157
        %v1163 = vmul.f32 %v1159, %v1078
        %v1164 = vmul.f32 %v1160, %v1079
        %v1165 = vmul.f32 %v1161, %v1080
        %v1166 = vmul.f32 %v1162, %v1081
        %v1167 = vmul.f32 %v1146, %v1082
        %v1168 = vsel %vm938, %v1167, 1.0
        %vm1169 = vcmask 302080
        %v1171 = vsel %vm1169, %v1077, 0
        %vm1173 = vcmask 1044480
        %v1175 = vsel %vm1173, %v1168, 0
        %1177 = vmatpush.msra.mxu0 0.0
        %1178 = vmatpush.msra.mxu0 0.0
        %1179 = vmatpush.msra.mxu0 0.0
        %1180 = vmatpush.msra.mxu0 0.0
        %1181 = vmatpush.msra.mxu0 0.0
        %1182 = vmatpush.msra.mxu0 0.0
        %1183 = vmatpush.msra.mxu0 0.0
        %1184 = vmatpush.msra.mxu0 0.0
        %1185 = vmatpush.msra.mxu0 0.0
        %1186 = vmatpush.msra.mxu0 0.0
        %1187 = vmatpush.msra.mxu0 0.0
        %1188 = vmatpush.msra.mxu0 %v1175
        %1189 = vmatpush.msra.mxu0 %v1166
        %1190 = vmatpush.msra.mxu0 %v1165
        %1191 = vmatpush.msra.mxu0 %v1164
        %1192 = vmatpush.msra.mxu0 %v1163
        %1193 = vmatmul.f32.gmra.mxu0 %v1171
        %v1194 = vpop.f32.mrf.mxu0
        %v1195 = vadd.f32 0.0, %v1194
        %1196 = vdwg.mxu0
        %v1197 = vld [vmem:[%s14] sm:$0xff]
        %v1198 = vld [vmem:[%s14 + $0x8] sm:$0xff]
        %v1199 = vld [vmem:[%s14 + $0x10] sm:$0xff]
        %v1200 = vld [vmem:[%s14 + $0x18] sm:$0xff]
        %v1201 = vld [vmem:[%s14 + $0x20] sm:$0xff]
        %v1202 = vld [vmem:[%s14 + $0x28] sm:$0xff]
        %vm1203 = vcmask 130048
        %v1205 = vsel %vm1203, %v1195, 0
        %1207 = vmatpush.msra.mxu0 0.0
        %1208 = vmatpush.msra.mxu0 0.0
        %1209 = vmatpush.msra.mxu0 0.0
        %1210 = vmatpush.msra.mxu0 0.0
        %1211 = vmatpush.msra.mxu0 0.0
        %1212 = vmatpush.msra.mxu0 0.0
        %1213 = vmatpush.msra.mxu0 0.0
        %1214 = vmatpush.msra.mxu0 0.0
        %1215 = vmatpush.msra.mxu0 0.0
        %1216 = vmatpush.msra.mxu0 0.0
        %1217 = vmatpush.msra.mxu0 0.0
        %1218 = vmatpush.msra.mxu0 0.0
        %1219 = vmatpush.msra.mxu0 0.0
        %1220 = vmatpush.msra.mxu0 0.0
        %1221 = vmatpush.msra.mxu0 %v1200
        %1222 = vmatpush.msra.mxu0 %v1197
        %1223 = vmatmul.f32.gmra.mxu0 %v1205
        %v1224 = vpop.f32.mrf.mxu0
        %v1225 = vadd.f32 0.0, %v1224
        %1226 = vdwg.mxu0
        %1227 = vmatpush.msra.mxu0 0.0
        %1228 = vmatpush.msra.mxu0 0.0
        %1229 = vmatpush.msra.mxu0 0.0
        %1230 = vmatpush.msra.mxu0 0.0
        %1231 = vmatpush.msra.mxu0 0.0
        %1232 = vmatpush.msra.mxu0 0.0
        %1233 = vmatpush.msra.mxu0 0.0
        %1234 = vmatpush.msra.mxu0 0.0
        %1235 = vmatpush.msra.mxu0 0.0
        %1236 = vmatpush.msra.mxu0 0.0
        %1237 = vmatpush.msra.mxu0 0.0
        %1238 = vmatpush.msra.mxu0 0.0
        %1239 = vmatpush.msra.mxu0 0.0
        %1240 = vmatpush.msra.mxu0 0.0
        %1241 = vmatpush.msra.mxu0 %v1201
        %1242 = vmatpush.msra.mxu0 %v1198
        %1243 = vmatmul.f32.gmra.mxu0 %v1205
        %v1244 = vpop.f32.mrf.mxu0
        %v1245 = vadd.f32 0.0, %v1244
        %1246 = vdwg.mxu0
        %1247 = vmatpush.msra.mxu0 0.0
        %1248 = vmatpush.msra.mxu0 0.0
        %1249 = vmatpush.msra.mxu0 0.0
        %1250 = vmatpush.msra.mxu0 0.0
        %1251 = vmatpush.msra.mxu0 0.0
        %1252 = vmatpush.msra.mxu0 0.0
        %1253 = vmatpush.msra.mxu0 0.0
        %1254 = vmatpush.msra.mxu0 0.0
        %1255 = vmatpush.msra.mxu0 0.0
        %1256 = vmatpush.msra.mxu0 0.0
        %1257 = vmatpush.msra.mxu0 0.0
        %1258 = vmatpush.msra.mxu0 0.0
        %1259 = vmatpush.msra.mxu0 0.0
        %1260 = vmatpush.msra.mxu0 0.0
        %1261 = vmatpush.msra.mxu0 %v1202
        %1262 = vmatpush.msra.mxu0 %v1199
        %1263 = vmatmul.f32.gmra.mxu0 %v1205
        %v1264 = vpop.f32.mrf.mxu0
        %v1265 = vadd.f32 0.0, %v1264
        %1266 = vdwg.mxu0
        %v1267 = vld [vmem:[%s11] sm:$0xff]
        %v1268 = vld [vmem:[%s11 + $0x8] sm:$0xff]
        %v1269 = vld [vmem:[%s11 + $0x10] sm:$0xff]
        %v1270 = vld [vmem:[%s11 + $0x18] sm:$0xff]
        %v1271 = vld [vmem:[%s11 + $0x20] sm:$0xff]
        %v1272 = vld [vmem:[%s11 + $0x28] sm:$0xff]
        %v1273 = vld [vmem:[%s11 + $0x30] sm:$0xff]
        %v1274 = vld [vmem:[%s11 + $0x38] sm:$0xff]
        %v1275 = vld [vmem:[%s11 + $0x40] sm:$0xff]
        %v1276 = vld [vmem:[%s11 + $0x48] sm:$0xff]
        %v1277 = vld [vmem:[%s11 + $0x50] sm:$0xff]
        %v1278 = vld [vmem:[%s11 + $0x58] sm:$0xff]
        %v1279 = vld [vmem:[%s11 + $0x60] sm:$0xff]
        %v1280 = vld [vmem:[%s11 + $0x68] sm:$0xff]
        %v1281 = vld [vmem:[%s11 + $0x70] sm:$0xff]
        %v1282 = vld [vmem:[%s11 + $0x78] sm:$0xff]
        %v1283 = vld [vmem:[%s11 + $0x80] sm:$0xff]
        %v1284 = vld [vmem:[%s11 + $0x88] sm:$0xff]
        %v1285 = vld [vmem:[%s11 + $0x90] sm:$0xff]
        %v1286 = vld [vmem:[%s11 + $0x98] sm:$0xff]
        %v1287 = vld [vmem:[%s11 + $0xa0] sm:$0xff]
        %v1288 = vld [vmem:[%s11 + $0xa8] sm:$0xff]
        %v1289 = vld [vmem:[%s11 + $0xb0] sm:$0xff]
        %v1290 = vld [vmem:[%s11 + $0xb8] sm:$0xff]
        %v1291 = vld [vmem:[%s11 + $0xc0] sm:$0xff]
        %v1292 = vld [vmem:[%s11 + $0xc8] sm:$0xff]
        %v1293 = vld [vmem:[%s11 + $0xd0] sm:$0xff]
        %v1294 = vld [vmem:[%s11 + $0xd8] sm:$0xff]
        %v1295 = vld [vmem:[%s11 + $0xe0] sm:$0xff]
        %v1296 = vld [vmem:[%s11 + $0xe8] sm:$0xff]
        %v1297 = vld [vmem:[%s11 + $0xf0] sm:$0xff]
        %v1298 = vld [vmem:[%s11 + $0xf8] sm:$0xff]
        %v1299 = vld [vmem:[%s11 + $0x100] sm:$0xff]
        %v1300 = vld [vmem:[%s11 + $0x108] sm:$0xff]
        %v1301 = vld [vmem:[%s11 + $0x110] sm:$0xff]
        %v1302 = vld [vmem:[%s11 + $0x118] sm:$0xff]
        %v1303 = vld [vmem:[%s11 + $0x120] sm:$0xff]
        %v1304 = vld [vmem:[%s11 + $0x128] sm:$0xff]
        %v1305 = vld [vmem:[%s11 + $0x130] sm:$0xff]
        %v1306 = vld [vmem:[%s11 + $0x138] sm:$0xff]
        %v1307 = vld [vmem:[%s11 + $0x140] sm:$0xff]
        %v1308 = vld [vmem:[%s11 + $0x148] sm:$0xff]
        %v1309 = vld [vmem:[%s11 + $0x150] sm:$0xff]
        %v1310 = vld [vmem:[%s11 + $0x158] sm:$0xff]
        %v1311 = vld [vmem:[%s11 + $0x160] sm:$0xff]
        %v1312 = vld [vmem:[%s11 + $0x168] sm:$0xff]
        %v1313 = vld [vmem:[%s11 + $0x170] sm:$0xff]
        %v1314 = vld [vmem:[%s11 + $0x178] sm:$0xff]
        %1315 = vmatpush.msra.mxu0 %v1282
        %1316 = vmatpush.msra.mxu0 %v1281
        %1317 = vmatpush.msra.mxu0 %v1280
        %1318 = vmatpush.msra.mxu0 %v1279
        %1319 = vmatpush.msra.mxu0 %v1278
        %1320 = vmatpush.msra.mxu0 %v1277
        %1321 = vmatpush.msra.mxu0 %v1276
        %1322 = vmatpush.msra.mxu0 %v1275
        %1323 = vmatpush.msra.mxu0 %v1274
        %1324 = vmatpush.msra.mxu0 %v1273
        %1325 = vmatpush.msra.mxu0 %v1272
        %1326 = vmatpush.msra.mxu0 %v1271
        %1327 = vmatpush.msra.mxu0 %v1270
        %1328 = vmatpush.msra.mxu0 %v1269
        %1329 = vmatpush.msra.mxu0 %v1268
        %1330 = vmatpush.msra.mxu0 %v1267
        %1331 = vmatmul.f32.gmra.mxu0 %v799
        %v1332 = vpop.f32.mrf.mxu0
        %v1333 = vadd.f32 0.0, %v1332
        %1334 = vdwg.mxu0
        %1335 = vmatpush.msra.mxu0 %v1298
        %1336 = vmatpush.msra.mxu0 %v1297
        %1337 = vmatpush.msra.mxu0 %v1296
        %1338 = vmatpush.msra.mxu0 %v1295
        %1339 = vmatpush.msra.mxu0 %v1294
        %1340 = vmatpush.msra.mxu0 %v1293
        %1341 = vmatpush.msra.mxu0 %v1292
        %1342 = vmatpush.msra.mxu0 %v1291
        %1343 = vmatpush.msra.mxu0 %v1290
        %1344 = vmatpush.msra.mxu0 %v1289
        %1345 = vmatpush.msra.mxu0 %v1288
        %1346 = vmatpush.msra.mxu0 %v1287
        %1347 = vmatpush.msra.mxu0 %v1286
        %1348 = vmatpush.msra.mxu0 %v1285
        %1349 = vmatpush.msra.mxu0 %v1284
        %1350 = vmatpush.msra.mxu0 %v1283
        %1351 = vmatmul.f32.gmra.mxu0 %v800
        %v1352 = vpop.f32.mrf.mxu0
        %v1353 = vadd.f32 %v1333, %v1352
        %1354 = vdwg.mxu0
        %1355 = vmatpush.msra.mxu0 %v1314
        %1356 = vmatpush.msra.mxu0 %v1313
        %1357 = vmatpush.msra.mxu0 %v1312
        %1358 = vmatpush.msra.mxu0 %v1311
        %1359 = vmatpush.msra.mxu0 %v1310
        %1360 = vmatpush.msra.mxu0 %v1309
        %1361 = vmatpush.msra.mxu0 %v1308
        %1362 = vmatpush.msra.mxu0 %v1307
        %1363 = vmatpush.msra.mxu0 %v1306
        %1364 = vmatpush.msra.mxu0 %v1305
        %1365 = vmatpush.msra.mxu0 %v1304
        %1366 = vmatpush.msra.mxu0 %v1303
        %1367 = vmatpush.msra.mxu0 %v1302
        %1368 = vmatpush.msra.mxu0 %v1301
        %1369 = vmatpush.msra.mxu0 %v1300
        %1370 = vmatpush.msra.mxu0 %v1299
        %1371 = vmatmul.f32.gmra.mxu0 %v801
        %v1372 = vpop.f32.mrf.mxu0
        %v1373 = vadd.f32 %v1353, %v1372
        %1374 = vdwg.mxu0
        %v1375 = vld [vmem:[%s4] sm:$0xf]
        %v1376 = vld [vmem:[%s20] sm:$0xff]
        %v1377 = vld [vmem:[%s20 + $0x8] sm:$0xff]
        %v1378 = vld [vmem:[%s20 + $0x10] sm:$0xff]
        %v1379 = vld [vmem:[%s20 + $0x18] sm:$0xff]
        %v1380 = vld [vmem:[%s20 + $0x20] sm:$0xf]
        %1382 = vrot.lane.b32.xlu0 %v1373, 73
        %v1383 = vpop.permute.xlu0 %1382
        %1385 = vrot.lane.b32.xlu0 %v1373, 9
        %v1386 = vpop.permute.xlu0 %1385
        %vm1388 = vcmask 72704
        %v1389 = vsel %vm1388, %v1383, %v1386
        %1390 = vrot.lane.b32.xlu0 %v1373, 72
        %v1391 = vpop.permute.xlu0 %1390
        %1393 = vrot.lane.b32.xlu0 %v1373, 8
        %v1394 = vpop.permute.xlu0 %1393
        %vm1396 = vcmask 64512
        %v1397 = vsel %vm1396, %v1391, %v1394
        %1398 = vrot.lane.b32.xlu0 %v1373, 71
        %v1399 = vpop.permute.xlu0 %1398
        %1401 = vrot.lane.b32.xlu0 %v1373, 7
        %v1402 = vpop.permute.xlu0 %1401
        %vm1404 = vcmask 56320
        %v1405 = vsel %vm1404, %v1399, %v1402
        %1406 = vrot.lane.b32.xlu0 %v1373, 65
        %v1407 = vpop.permute.xlu0 %1406
        %1409 = vrot.lane.b32.xlu0 %v1373, 1
        %v1410 = vpop.permute.xlu0 %1409
        %v1412 = vsel %vm853, %v1407, %v1410
        %1413 = vrot.lane.b32.xlu0 %v1373, 127
        %v1414 = vpop.permute.xlu0 %1413
        %1416 = vrot.lane.b32.xlu0 %v1373, 63
        %v1417 = vpop.permute.xlu0 %1416
        %vm1419 = vcmask 515072
        %v1420 = vsel %vm1419, %v1414, %v1417
        %1421 = vrot.lane.b32.xlu0 %v1373, 121
        %v1422 = vpop.permute.xlu0 %1421
        %1424 = vrot.lane.b32.xlu0 %v1373, 57
        %v1425 = vpop.permute.xlu0 %1424
        %vm1427 = vcmask 465920
        %v1428 = vsel %vm1427, %v1422, %v1425
        %1429 = vrot.lane.b32.xlu0 %v1373, 120
        %v1430 = vpop.permute.xlu0 %1429
        %1432 = vrot.lane.b32.xlu0 %v1373, 56
        %v1433 = vpop.permute.xlu0 %1432
        %vm1435 = vcmask 457728
        %v1436 = vsel %vm1435, %v1430, %v1433
        %1437 = vrot.lane.b32.xlu0 %v1373, 119
        %v1438 = vpop.permute.xlu0 %1437
        %1440 = vrot.lane.b32.xlu0 %v1373, 55
        %v1441 = vpop.permute.xlu0 %1440
        %vm1443 = vcmask 449536
        %v1444 = vsel %vm1443, %v1438, %v1441
        %v1446 = vrot.slane %v1397, 4
        %v1449 = vrot.slane %v1412, 4
        %v1452 = vrot.slane %v1420, 4
        %v1455 = vrot.slane %v1436, 4
        %v1457 = vsel %vm938, %v1389, %v1446
        %v1458 = vsel %vm938, %v1405, %v1449
        %v1459 = vsel %vm938, %v1373, %v1452
        %v1460 = vsel %vm938, %v1428, %v1455
        %v1461 = vmul.f32 %v1457, %v1376
        %v1462 = vmul.f32 %v1458, %v1377
        %v1463 = vmul.f32 %v1459, %v1378
        %v1464 = vmul.f32 %v1460, %v1379
        %v1465 = vmul.f32 %v1444, %v1380
        %v1466 = vsel %vm938, %v1465, 1.0
        %v1468 = vsel %vm1169, %v1375, 0
        %v1471 = vsel %vm1173, %v1466, 0
        %1473 = vmatpush.msra.mxu0 0.0
        %1474 = vmatpush.msra.mxu0 0.0
        %1475 = vmatpush.msra.mxu0 0.0
        %1476 = vmatpush.msra.mxu0 0.0
        %1477 = vmatpush.msra.mxu0 0.0
        %1478 = vmatpush.msra.mxu0 0.0
        %1479 = vmatpush.msra.mxu0 0.0
        %1480 = vmatpush.msra.mxu0 0.0
        %1481 = vmatpush.msra.mxu0 0.0
        %1482 = vmatpush.msra.mxu0 0.0
        %1483 = vmatpush.msra.mxu0 0.0
        %1484 = vmatpush.msra.mxu0 %v1471
        %1485 = vmatpush.msra.mxu0 %v1464
        %1486 = vmatpush.msra.mxu0 %v1463
        %1487 = vmatpush.msra.mxu0 %v1462
        %1488 = vmatpush.msra.mxu0 %v1461
        %1489 = vmatmul.f32.gmra.mxu0 %v1468
        %v1490 = vpop.f32.mrf.mxu0
        %v1491 = vadd.f32 0.0, %v1490
        %1492 = vdwg.mxu0
        %v1493 = vld [vmem:[%s15] sm:$0xff]
        %v1494 = vld [vmem:[%s15 + $0x8] sm:$0xff]
        %v1495 = vld [vmem:[%s15 + $0x10] sm:$0xff]
        %v1496 = vld [vmem:[%s15 + $0x18] sm:$0xff]
        %v1497 = vld [vmem:[%s15 + $0x20] sm:$0xff]
        %v1498 = vld [vmem:[%s15 + $0x28] sm:$0xff]
        %v1499 = vld [vmem:[%s15 + $0x30] sm:$0xff]
        %v1500 = vld [vmem:[%s15 + $0x38] sm:$0xff]
        %v1501 = vld [vmem:[%s15 + $0x40] sm:$0xff]
        %v1502 = vld [vmem:[%s15 + $0x48] sm:$0xff]
        %v1503 = vld [vmem:[%s15 + $0x50] sm:$0xff]
        %v1504 = vld [vmem:[%s15 + $0x58] sm:$0xff]
        %v1505 = vld [vmem:[%s15 + $0x60] sm:$0xff]
        %v1506 = vld [vmem:[%s15 + $0x68] sm:$0xff]
        %v1507 = vld [vmem:[%s15 + $0x70] sm:$0xff]
        %v1508 = vld [vmem:[%s15 + $0x78] sm:$0xff]
        %v1509 = vld [vmem:[%s15 + $0x80] sm:$0xff]
        %v1510 = vld [vmem:[%s15 + $0x88] sm:$0xff]
        %v1511 = vld [vmem:[%s15 + $0x90] sm:$0xff]
        %v1512 = vld [vmem:[%s15 + $0x98] sm:$0xff]
        %v1513 = vld [vmem:[%s15 + $0xa0] sm:$0xff]
        %v1514 = vld [vmem:[%s15 + $0xa8] sm:$0xff]
        %v1515 = vld [vmem:[%s15 + $0xb0] sm:$0xff]
        %v1516 = vld [vmem:[%s15 + $0xb8] sm:$0xff]
        %vm1517 = vcmask 523264
        %v1519 = vsel %vm1517, %v1491, 0
        %1521 = vmatpush.msra.mxu0 0.0
        %1522 = vmatpush.msra.mxu0 0.0
        %1523 = vmatpush.msra.mxu0 0.0
        %1524 = vmatpush.msra.mxu0 0.0
        %1525 = vmatpush.msra.mxu0 0.0
        %1526 = vmatpush.msra.mxu0 0.0
        %1527 = vmatpush.msra.mxu0 0.0
        %1528 = vmatpush.msra.mxu0 0.0
        %1529 = vmatpush.msra.mxu0 %v1514
        %1530 = vmatpush.msra.mxu0 %v1511
        %1531 = vmatpush.msra.mxu0 %v1508
        %1532 = vmatpush.msra.mxu0 %v1505
        %1533 = vmatpush.msra.mxu0 %v1502
        %1534 = vmatpush.msra.mxu0 %v1499
        %1535 = vmatpush.msra.mxu0 %v1496
        %1536 = vmatpush.msra.mxu0 %v1493
        %1537 = vmatmul.f32.gmra.mxu0 %v1519
        %v1538 = vpop.f32.mrf.mxu0
        %v1539 = vadd.f32 0.0, %v1538
        %1540 = vdwg.mxu0
        %1541 = vmatpush.msra.mxu0 0.0
        %1542 = vmatpush.msra.mxu0 0.0
        %1543 = vmatpush.msra.mxu0 0.0
        %1544 = vmatpush.msra.mxu0 0.0
        %1545 = vmatpush.msra.mxu0 0.0
        %1546 = vmatpush.msra.mxu0 0.0
        %1547 = vmatpush.msra.mxu0 0.0
        %1548 = vmatpush.msra.mxu0 0.0
        %1549 = vmatpush.msra.mxu0 %v1515
        %1550 = vmatpush.msra.mxu0 %v1512
        %1551 = vmatpush.msra.mxu0 %v1509
        %1552 = vmatpush.msra.mxu0 %v1506
        %1553 = vmatpush.msra.mxu0 %v1503
        %1554 = vmatpush.msra.mxu0 %v1500
        %1555 = vmatpush.msra.mxu0 %v1497
        %1556 = vmatpush.msra.mxu0 %v1494
        %1557 = vmatmul.f32.gmra.mxu0 %v1519
        %v1558 = vpop.f32.mrf.mxu0
        %v1559 = vadd.f32 0.0, %v1558
        %1560 = vdwg.mxu0
        %1561 = vmatpush.msra.mxu0 0.0
        %1562 = vmatpush.msra.mxu0 0.0
        %1563 = vmatpush.msra.mxu0 0.0
        %1564 = vmatpush.msra.mxu0 0.0
        %1565 = vmatpush.msra.mxu0 0.0
        %1566 = vmatpush.msra.mxu0 0.0
        %1567 = vmatpush.msra.mxu0 0.0
        %1568 = vmatpush.msra.mxu0 0.0
        %1569 = vmatpush.msra.mxu0 %v1516
        %1570 = vmatpush.msra.mxu0 %v1513
        %1571 = vmatpush.msra.mxu0 %v1510
        %1572 = vmatpush.msra.mxu0 %v1507
        %1573 = vmatpush.msra.mxu0 %v1504
        %1574 = vmatpush.msra.mxu0 %v1501
        %1575 = vmatpush.msra.mxu0 %v1498
        %1576 = vmatpush.msra.mxu0 %v1495
        %1577 = vmatmul.f32.gmra.mxu0 %v1519
        %v1578 = vpop.f32.mrf.mxu0
        %v1579 = vadd.f32 0.0, %v1578
        %1580 = vdwg.mxu0
        %v1581 = vld [vmem:[%s12] sm:$0xff]
        %v1582 = vld [vmem:[%s12 + $0x8] sm:$0xff]
        %v1583 = vld [vmem:[%s12 + $0x10] sm:$0xff]
        %v1584 = vld [vmem:[%s12 + $0x18] sm:$0xff]
        %v1585 = vld [vmem:[%s12 + $0x20] sm:$0xff]
        %v1586 = vld [vmem:[%s12 + $0x28] sm:$0xff]
        %v1587 = vld [vmem:[%s12 + $0x30] sm:$0xff]
        %v1588 = vld [vmem:[%s12 + $0x38] sm:$0xff]
        %v1589 = vld [vmem:[%s12 + $0x40] sm:$0xff]
        %v1590 = vld [vmem:[%s12 + $0x48] sm:$0xff]
        %v1591 = vld [vmem:[%s12 + $0x50] sm:$0xff]
        %v1592 = vld [vmem:[%s12 + $0x58] sm:$0xff]
        %v1593 = vld [vmem:[%s12 + $0x60] sm:$0xff]
        %v1594 = vld [vmem:[%s12 + $0x68] sm:$0xff]
        %v1595 = vld [vmem:[%s12 + $0x70] sm:$0xff]
        %v1596 = vld [vmem:[%s12 + $0x78] sm:$0xff]
        %v1597 = vld [vmem:[%s12 + $0x80] sm:$0xff]
        %v1598 = vld [vmem:[%s12 + $0x88] sm:$0xff]
        %v1599 = vld [vmem:[%s12 + $0x90] sm:$0xff]
        %v1600 = vld [vmem:[%s12 + $0x98] sm:$0xff]
        %v1601 = vld [vmem:[%s12 + $0xa0] sm:$0xff]
        %v1602 = vld [vmem:[%s12 + $0xa8] sm:$0xff]
        %v1603 = vld [vmem:[%s12 + $0xb0] sm:$0xff]
        %v1604 = vld [vmem:[%s12 + $0xb8] sm:$0xff]
        %v1605 = vld [vmem:[%s12 + $0xc0] sm:$0xff]
        %v1606 = vld [vmem:[%s12 + $0xc8] sm:$0xff]
        %v1607 = vld [vmem:[%s12 + $0xd0] sm:$0xff]
        %v1608 = vld [vmem:[%s12 + $0xd8] sm:$0xff]
        %v1609 = vld [vmem:[%s12 + $0xe0] sm:$0xff]
        %v1610 = vld [vmem:[%s12 + $0xe8] sm:$0xff]
        %v1611 = vld [vmem:[%s12 + $0xf0] sm:$0xff]
        %v1612 = vld [vmem:[%s12 + $0xf8] sm:$0xff]
        %v1613 = vld [vmem:[%s12 + $0x100] sm:$0xff]
        %v1614 = vld [vmem:[%s12 + $0x108] sm:$0xff]
        %v1615 = vld [vmem:[%s12 + $0x110] sm:$0xff]
        %v1616 = vld [vmem:[%s12 + $0x118] sm:$0xff]
        %v1617 = vld [vmem:[%s12 + $0x120] sm:$0xff]
        %v1618 = vld [vmem:[%s12 + $0x128] sm:$0xff]
        %v1619 = vld [vmem:[%s12 + $0x130] sm:$0xff]
        %v1620 = vld [vmem:[%s12 + $0x138] sm:$0xff]
        %v1621 = vld [vmem:[%s12 + $0x140] sm:$0xff]
        %v1622 = vld [vmem:[%s12 + $0x148] sm:$0xff]
        %v1623 = vld [vmem:[%s12 + $0x150] sm:$0xff]
        %v1624 = vld [vmem:[%s12 + $0x158] sm:$0xff]
        %v1625 = vld [vmem:[%s12 + $0x160] sm:$0xff]
        %v1626 = vld [vmem:[%s12 + $0x168] sm:$0xff]
        %v1627 = vld [vmem:[%s12 + $0x170] sm:$0xff]
        %v1628 = vld [vmem:[%s12 + $0x178] sm:$0xff]
        %v1629 = vrot.slane %v799, 4
        %v1630 = vrot.slane %v800, 4
        %v1631 = vrot.slane %v801, 4
        %1635 = vmatpush.msra.mxu0 %v1596
        %1636 = vmatpush.msra.mxu0 %v1595
        %1637 = vmatpush.msra.mxu0 %v1594
        %1638 = vmatpush.msra.mxu0 %v1593
        %1639 = vmatpush.msra.mxu0 %v1592
        %1640 = vmatpush.msra.mxu0 %v1591
        %1641 = vmatpush.msra.mxu0 %v1590
        %1642 = vmatpush.msra.mxu0 %v1589
        %1643 = vmatpush.msra.mxu0 %v1588
        %1644 = vmatpush.msra.mxu0 %v1587
        %1645 = vmatpush.msra.mxu0 %v1586
        %1646 = vmatpush.msra.mxu0 %v1585
        %1647 = vmatpush.msra.mxu0 %v1584
        %1648 = vmatpush.msra.mxu0 %v1583
        %1649 = vmatpush.msra.mxu0 %v1582
        %1650 = vmatpush.msra.mxu0 %v1581
        %1651 = vmatmul.f32.gmra.mxu0 %v1629
        %v1652 = vpop.f32.mrf.mxu0
        %v1653 = vadd.f32 0.0, %v1652
        %1654 = vdwg.mxu0
        %1655 = vmatpush.msra.mxu0 %v1612
        %1656 = vmatpush.msra.mxu0 %v1611
        %1657 = vmatpush.msra.mxu0 %v1610
        %1658 = vmatpush.msra.mxu0 %v1609
        %1659 = vmatpush.msra.mxu0 %v1608
        %1660 = vmatpush.msra.mxu0 %v1607
        %1661 = vmatpush.msra.mxu0 %v1606
        %1662 = vmatpush.msra.mxu0 %v1605
        %1663 = vmatpush.msra.mxu0 %v1604
        %1664 = vmatpush.msra.mxu0 %v1603
        %1665 = vmatpush.msra.mxu0 %v1602
        %1666 = vmatpush.msra.mxu0 %v1601
        %1667 = vmatpush.msra.mxu0 %v1600
        %1668 = vmatpush.msra.mxu0 %v1599
        %1669 = vmatpush.msra.mxu0 %v1598
        %1670 = vmatpush.msra.mxu0 %v1597
        %1671 = vmatmul.f32.gmra.mxu0 %v1630
        %v1672 = vpop.f32.mrf.mxu0
        %v1673 = vadd.f32 %v1653, %v1672
        %1674 = vdwg.mxu0
        %1675 = vmatpush.msra.mxu0 %v1628
        %1676 = vmatpush.msra.mxu0 %v1627
        %1677 = vmatpush.msra.mxu0 %v1626
        %1678 = vmatpush.msra.mxu0 %v1625
        %1679 = vmatpush.msra.mxu0 %v1624
        %1680 = vmatpush.msra.mxu0 %v1623
        %1681 = vmatpush.msra.mxu0 %v1622
        %1682 = vmatpush.msra.mxu0 %v1621
        %1683 = vmatpush.msra.mxu0 %v1620
        %1684 = vmatpush.msra.mxu0 %v1619
        %1685 = vmatpush.msra.mxu0 %v1618
        %1686 = vmatpush.msra.mxu0 %v1617
        %1687 = vmatpush.msra.mxu0 %v1616
        %1688 = vmatpush.msra.mxu0 %v1615
        %1689 = vmatpush.msra.mxu0 %v1614
        %1690 = vmatpush.msra.mxu0 %v1613
        %1691 = vmatmul.f32.gmra.mxu0 %v1631
        %v1692 = vpop.f32.mrf.mxu0
        %v1693 = vadd.f32 %v1673, %v1692
        %1694 = vdwg.mxu0
        %v1695 = vld [vmem:[%s5] sm:$0xf]
        %v1696 = vld [vmem:[%s21] sm:$0xff]
        %v1697 = vld [vmem:[%s21 + $0x8] sm:$0xf]
        %1699 = vrot.lane.b32.xlu0 %v1693, 105
        %v1700 = vpop.permute.xlu0 %1699
        %1702 = vrot.lane.b32.xlu0 %v1693, 1
        %v1703 = vpop.permute.xlu0 %1702
        %v1705 = vsel %vm853, %v1700, %v1703
        %1706 = vrot.lane.b32.xlu0 %v1693, 127
        %v1707 = vpop.permute.xlu0 %1706
        %1709 = vrot.lane.b32.xlu0 %v1693, 23
        %v1710 = vpop.permute.xlu0 %1709
        %v1712 = vsel %vm839, %v1707, %v1710
        %v1713 = vrot.slane %v1693, 4
        %v1715 = vsel %vm938, %v1705, %v1713
        %v1716 = vmul.f32 %v1715, %v1696
        %v1717 = vmul.f32 %v1712, %v1697
        %v1718 = vsel %vm938, %v1717, 1.0
        %v1720 = vsel %vm1129, %v1695, 0
        %v1723 = vsel %vm1173, %v1718, 0
        %1725 = vmatpush.msra.mxu0 0.0
        %1726 = vmatpush.msra.mxu0 0.0
        %1727 = vmatpush.msra.mxu0 0.0
        %1728 = vmatpush.msra.mxu0 0.0
        %1729 = vmatpush.msra.mxu0 0.0
        %1730 = vmatpush.msra.mxu0 0.0
        %1731 = vmatpush.msra.mxu0 0.0
        %1732 = vmatpush.msra.mxu0 0.0
        %1733 = vmatpush.msra.mxu0 0.0
        %1734 = vmatpush.msra.mxu0 0.0
        %1735 = vmatpush.msra.mxu0 0.0
        %1736 = vmatpush.msra.mxu0 0.0
        %1737 = vmatpush.msra.mxu0 0.0
        %1738 = vmatpush.msra.mxu0 0.0
        %1739 = vmatpush.msra.mxu0 %v1723
        %1740 = vmatpush.msra.mxu0 %v1716
        %1741 = vmatmul.f32.gmra.mxu0 %v1720
        %v1742 = vpop.f32.mrf.mxu0
        %v1743 = vadd.f32 0.0, %v1742
        %1744 = vdwg.mxu0
        %v1745 = vld [vmem:[%s16] sm:$0xff]
        %v1746 = vld [vmem:[%s16 + $0x8] sm:$0xff]
        %v1747 = vld [vmem:[%s16 + $0x10] sm:$0xff]
        %v1748 = vld [vmem:[%s16 + $0x18] sm:$0xff]
        %v1749 = vld [vmem:[%s16 + $0x20] sm:$0xff]
        %v1750 = vld [vmem:[%s16 + $0x28] sm:$0xff]
        %v1751 = vld [vmem:[%s16 + $0x30] sm:$0xff]
        %v1752 = vld [vmem:[%s16 + $0x38] sm:$0xff]
        %v1753 = vld [vmem:[%s16 + $0x40] sm:$0xff]
        %v1755 = vsel %vm827, %v1743, 0
        %1757 = vmatpush.msra.mxu0 0.0
        %1758 = vmatpush.msra.mxu0 0.0
        %1759 = vmatpush.msra.mxu0 0.0
        %1760 = vmatpush.msra.mxu0 0.0
        %1761 = vmatpush.msra.mxu0 0.0
        %1762 = vmatpush.msra.mxu0 0.0
        %1763 = vmatpush.msra.mxu0 0.0
        %1764 = vmatpush.msra.mxu0 0.0
        %1765 = vmatpush.msra.mxu0 0.0
        %1766 = vmatpush.msra.mxu0 0.0
        %1767 = vmatpush.msra.mxu0 0.0
        %1768 = vmatpush.msra.mxu0 0.0
        %1769 = vmatpush.msra.mxu0 0.0
        %1770 = vmatpush.msra.mxu0 %v1751
        %1771 = vmatpush.msra.mxu0 %v1748
        %1772 = vmatpush.msra.mxu0 %v1745
        %1773 = vmatmul.f32.gmra.mxu0 %v1755
        %v1774 = vpop.f32.mrf.mxu0
        %v1775 = vadd.f32 0.0, %v1774
        %1776 = vdwg.mxu0
        %1777 = vmatpush.msra.mxu0 0.0
        %1778 = vmatpush.msra.mxu0 0.0
        %1779 = vmatpush.msra.mxu0 0.0
        %1780 = vmatpush.msra.mxu0 0.0
        %1781 = vmatpush.msra.mxu0 0.0
        %1782 = vmatpush.msra.mxu0 0.0
        %1783 = vmatpush.msra.mxu0 0.0
        %1784 = vmatpush.msra.mxu0 0.0
        %1785 = vmatpush.msra.mxu0 0.0
        %1786 = vmatpush.msra.mxu0 0.0
        %1787 = vmatpush.msra.mxu0 0.0
        %1788 = vmatpush.msra.mxu0 0.0
        %1789 = vmatpush.msra.mxu0 0.0
        %1790 = vmatpush.msra.mxu0 %v1752
        %1791 = vmatpush.msra.mxu0 %v1749
        %1792 = vmatpush.msra.mxu0 %v1746
        %1793 = vmatmul.f32.gmra.mxu0 %v1755
        %v1794 = vpop.f32.mrf.mxu0
        %v1795 = vadd.f32 0.0, %v1794
        %1796 = vdwg.mxu0
        %1797 = vmatpush.msra.mxu0 0.0
        %1798 = vmatpush.msra.mxu0 0.0
        %1799 = vmatpush.msra.mxu0 0.0
        %1800 = vmatpush.msra.mxu0 0.0
        %1801 = vmatpush.msra.mxu0 0.0
        %1802 = vmatpush.msra.mxu0 0.0
        %1803 = vmatpush.msra.mxu0 0.0
        %1804 = vmatpush.msra.mxu0 0.0
        %1805 = vmatpush.msra.mxu0 0.0
        %1806 = vmatpush.msra.mxu0 0.0
        %1807 = vmatpush.msra.mxu0 0.0
        %1808 = vmatpush.msra.mxu0 0.0
        %1809 = vmatpush.msra.mxu0 0.0
        %1810 = vmatpush.msra.mxu0 %v1753
        %1811 = vmatpush.msra.mxu0 %v1750
        %1812 = vmatpush.msra.mxu0 %v1747
        %1813 = vmatmul.f32.gmra.mxu0 %v1755
        %v1814 = vpop.f32.mrf.mxu0
        %v1815 = vadd.f32 0.0, %v1814
        %1816 = vdwg.mxu0
        %v1817 = vld [vmem:[%s13] sm:$0xff]
        %v1818 = vld [vmem:[%s13 + $0x8] sm:$0xff]
        %v1819 = vld [vmem:[%s13 + $0x10] sm:$0xff]
        %v1820 = vld [vmem:[%s13 + $0x18] sm:$0xff]
        %v1821 = vld [vmem:[%s13 + $0x20] sm:$0xff]
        %v1822 = vld [vmem:[%s13 + $0x28] sm:$0xff]
        %v1823 = vld [vmem:[%s13 + $0x30] sm:$0xff]
        %v1824 = vld [vmem:[%s13 + $0x38] sm:$0xff]
        %v1825 = vld [vmem:[%s13 + $0x40] sm:$0xff]
        %v1826 = vld [vmem:[%s13 + $0x48] sm:$0xff]
        %v1827 = vld [vmem:[%s13 + $0x50] sm:$0xff]
        %v1828 = vld [vmem:[%s13 + $0x58] sm:$0xff]
        %v1829 = vld [vmem:[%s13 + $0x60] sm:$0xff]
        %v1830 = vld [vmem:[%s13 + $0x68] sm:$0xff]
        %v1831 = vld [vmem:[%s13 + $0x70] sm:$0xff]
        %v1832 = vld [vmem:[%s13 + $0x78] sm:$0xff]
        %v1833 = vld [vmem:[%s13 + $0x80] sm:$0xff]
        %v1834 = vld [vmem:[%s13 + $0x88] sm:$0xff]
        %v1835 = vld [vmem:[%s13 + $0x90] sm:$0xff]
        %v1836 = vld [vmem:[%s13 + $0x98] sm:$0xff]
        %v1837 = vld [vmem:[%s13 + $0xa0] sm:$0xff]
        %v1838 = vld [vmem:[%s13 + $0xa8] sm:$0xff]
        %v1839 = vld [vmem:[%s13 + $0xb0] sm:$0xff]
        %v1840 = vld [vmem:[%s13 + $0xb8] sm:$0xff]
        %v1841 = vld [vmem:[%s13 + $0xc0] sm:$0xff]
        %v1842 = vld [vmem:[%s13 + $0xc8] sm:$0xff]
        %v1843 = vld [vmem:[%s13 + $0xd0] sm:$0xff]
        %v1844 = vld [vmem:[%s13 + $0xd8] sm:$0xff]
        %v1845 = vld [vmem:[%s13 + $0xe0] sm:$0xff]
        %v1846 = vld [vmem:[%s13 + $0xe8] sm:$0xff]
        %v1847 = vld [vmem:[%s13 + $0xf0] sm:$0xff]
        %v1848 = vld [vmem:[%s13 + $0xf8] sm:$0xff]
        %v1849 = vld [vmem:[%s13 + $0x100] sm:$0xff]
        %v1850 = vld [vmem:[%s13 + $0x108] sm:$0xff]
        %v1851 = vld [vmem:[%s13 + $0x110] sm:$0xff]
        %v1852 = vld [vmem:[%s13 + $0x118] sm:$0xff]
        %v1853 = vld [vmem:[%s13 + $0x120] sm:$0xff]
        %v1854 = vld [vmem:[%s13 + $0x128] sm:$0xff]
        %v1855 = vld [vmem:[%s13 + $0x130] sm:$0xff]
        %v1856 = vld [vmem:[%s13 + $0x138] sm:$0xff]
        %v1857 = vld [vmem:[%s13 + $0x140] sm:$0xff]
        %v1858 = vld [vmem:[%s13 + $0x148] sm:$0xff]
        %v1859 = vld [vmem:[%s13 + $0x150] sm:$0xff]
        %v1860 = vld [vmem:[%s13 + $0x158] sm:$0xff]
        %v1861 = vld [vmem:[%s13 + $0x160] sm:$0xff]
        %v1862 = vld [vmem:[%s13 + $0x168] sm:$0xff]
        %v1863 = vld [vmem:[%s13 + $0x170] sm:$0xff]
        %v1864 = vld [vmem:[%s13 + $0x178] sm:$0xff]
        %1865 = vmatpush.msra.mxu0 %v1832
        %1866 = vmatpush.msra.mxu0 %v1831
        %1867 = vmatpush.msra.mxu0 %v1830
        %1868 = vmatpush.msra.mxu0 %v1829
        %1869 = vmatpush.msra.mxu0 %v1828
        %1870 = vmatpush.msra.mxu0 %v1827
        %1871 = vmatpush.msra.mxu0 %v1826
        %1872 = vmatpush.msra.mxu0 %v1825
        %1873 = vmatpush.msra.mxu0 %v1824
        %1874 = vmatpush.msra.mxu0 %v1823
        %1875 = vmatpush.msra.mxu0 %v1822
        %1876 = vmatpush.msra.mxu0 %v1821
        %1877 = vmatpush.msra.mxu0 %v1820
        %1878 = vmatpush.msra.mxu0 %v1819
        %1879 = vmatpush.msra.mxu0 %v1818
        %1880 = vmatpush.msra.mxu0 %v1817
        %1881 = vmatmul.f32.gmra.mxu0 %v1629
        %v1882 = vpop.f32.mrf.mxu0
        %v1883 = vadd.f32 0.0, %v1882
        %1884 = vdwg.mxu0
        %1885 = vmatpush.msra.mxu0 %v1848
        %1886 = vmatpush.msra.mxu0 %v1847
        %1887 = vmatpush.msra.mxu0 %v1846
        %1888 = vmatpush.msra.mxu0 %v1845
        %1889 = vmatpush.msra.mxu0 %v1844
        %1890 = vmatpush.msra.mxu0 %v1843
        %1891 = vmatpush.msra.mxu0 %v1842
        %1892 = vmatpush.msra.mxu0 %v1841
        %1893 = vmatpush.msra.mxu0 %v1840
        %1894 = vmatpush.msra.mxu0 %v1839
        %1895 = vmatpush.msra.mxu0 %v1838
        %1896 = vmatpush.msra.mxu0 %v1837
        %1897 = vmatpush.msra.mxu0 %v1836
        %1898 = vmatpush.msra.mxu0 %v1835
        %1899 = vmatpush.msra.mxu0 %v1834
        %1900 = vmatpush.msra.mxu0 %v1833
        %1901 = vmatmul.f32.gmra.mxu0 %v1630
        %v1902 = vpop.f32.mrf.mxu0
        %v1903 = vadd.f32 %v1883, %v1902
        %1904 = vdwg.mxu0
        %1905 = vmatpush.msra.mxu0 %v1864
        %1906 = vmatpush.msra.mxu0 %v1863
        %1907 = vmatpush.msra.mxu0 %v1862
        %1908 = vmatpush.msra.mxu0 %v1861
        %1909 = vmatpush.msra.mxu0 %v1860
        %1910 = vmatpush.msra.mxu0 %v1859
        %1911 = vmatpush.msra.mxu0 %v1858
        %1912 = vmatpush.msra.mxu0 %v1857
        %1913 = vmatpush.msra.mxu0 %v1856
        %1914 = vmatpush.msra.mxu0 %v1855
        %1915 = vmatpush.msra.mxu0 %v1854
        %1916 = vmatpush.msra.mxu0 %v1853
        %1917 = vmatpush.msra.mxu0 %v1852
        %1918 = vmatpush.msra.mxu0 %v1851
        %1919 = vmatpush.msra.mxu0 %v1850
        %1920 = vmatpush.msra.mxu0 %v1849
        %1921 = vmatmul.f32.gmra.mxu0 %v1631
        %v1922 = vpop.f32.mrf.mxu0
        %v1923 = vadd.f32 %v1903, %v1922
        %1924 = vdwg.mxu0
        %v1925 = vld [vmem:[%s6] sm:$0xf]
        %v1926 = vld [vmem:[%s22] sm:$0xff]
        %v1927 = vld [vmem:[%s22 + $0x8] sm:$0xf]
        %1929 = vrot.lane.b32.xlu0 %v1923, 113
        %v1930 = vpop.permute.xlu0 %1929
        %1932 = vrot.lane.b32.xlu0 %v1923, 1
        %v1933 = vpop.permute.xlu0 %1932
        %v1935 = vsel %vm853, %v1930, %v1933
        %1936 = vrot.lane.b32.xlu0 %v1923, 127
        %v1937 = vpop.permute.xlu0 %1936
        %1939 = vrot.lane.b32.xlu0 %v1923, 15
        %v1940 = vpop.permute.xlu0 %1939
        %v1942 = vsel %vm1121, %v1937, %v1940
        %v1943 = vrot.slane %v1923, 4
        %v1945 = vsel %vm938, %v1935, %v1943
        %v1946 = vmul.f32 %v1945, %v1926
        %v1947 = vmul.f32 %v1942, %v1927
        %v1948 = vsel %vm938, %v1947, 1.0
        %v1950 = vsel %vm1129, %v1925, 0
        %v1953 = vsel %vm1173, %v1948, 0
        %1955 = vmatpush.msra.mxu0 0.0
        %1956 = vmatpush.msra.mxu0 0.0
        %1957 = vmatpush.msra.mxu0 0.0
        %1958 = vmatpush.msra.mxu0 0.0
        %1959 = vmatpush.msra.mxu0 0.0
        %1960 = vmatpush.msra.mxu0 0.0
        %1961 = vmatpush.msra.mxu0 0.0
        %1962 = vmatpush.msra.mxu0 0.0
        %1963 = vmatpush.msra.mxu0 0.0
        %1964 = vmatpush.msra.mxu0 0.0
        %1965 = vmatpush.msra.mxu0 0.0
        %1966 = vmatpush.msra.mxu0 0.0
        %1967 = vmatpush.msra.mxu0 0.0
        %1968 = vmatpush.msra.mxu0 0.0
        %1969 = vmatpush.msra.mxu0 %v1953
        %1970 = vmatpush.msra.mxu0 %v1946
        %1971 = vmatmul.f32.gmra.mxu0 %v1950
        %v1972 = vpop.f32.mrf.mxu0
        %v1973 = vadd.f32 0.0, %v1972
        %1974 = vdwg.mxu0
        %v1975 = vld [vmem:[%s17] sm:$0xff]
        %v1976 = vld [vmem:[%s17 + $0x8] sm:$0xff]
        %v1977 = vld [vmem:[%s17 + $0x10] sm:$0xff]
        %v1978 = vld [vmem:[%s17 + $0x18] sm:$0xff]
        %v1979 = vld [vmem:[%s17 + $0x20] sm:$0xff]
        %v1980 = vld [vmem:[%s17 + $0x28] sm:$0xff]
        %v1982 = vsel %vm1169, %v802, 0
        %v1985 = vsel %vm1173, %v966, 0
        %v1988 = vsel %vm1173, %v967, 0
        %v1991 = vsel %vm1173, %v968, 0
        %1993 = vmatpush.msra.mxu0 0.0
        %1994 = vmatpush.msra.mxu0 0.0
        %1995 = vmatpush.msra.mxu0 0.0
        %1996 = vmatpush.msra.mxu0 0.0
        %1997 = vmatpush.msra.mxu0 0.0
        %1998 = vmatpush.msra.mxu0 0.0
        %1999 = vmatpush.msra.mxu0 0.0
        %2000 = vmatpush.msra.mxu0 0.0
        %2001 = vmatpush.msra.mxu0 0.0
        %2002 = vmatpush.msra.mxu0 0.0
        %2003 = vmatpush.msra.mxu0 0.0
        %2004 = vmatpush.msra.mxu0 %v1985
        %2005 = vmatpush.msra.mxu0 %v960
        %2006 = vmatpush.msra.mxu0 %v957
        %2007 = vmatpush.msra.mxu0 %v954
        %2008 = vmatpush.msra.mxu0 %v951
        %2009 = vmatmul.f32.gmra.mxu0 %v1982
        %v2010 = vpop.f32.mrf.mxu0
        %v2011 = vadd.f32 %v1225, %v2010
        %2012 = vdwg.mxu0
        %2013 = vmatpush.msra.mxu0 0.0
        %2014 = vmatpush.msra.mxu0 0.0
        %2015 = vmatpush.msra.mxu0 0.0
        %2016 = vmatpush.msra.mxu0 0.0
        %2017 = vmatpush.msra.mxu0 0.0
        %2018 = vmatpush.msra.mxu0 0.0
        %2019 = vmatpush.msra.mxu0 0.0
        %2020 = vmatpush.msra.mxu0 0.0
        %2021 = vmatpush.msra.mxu0 0.0
        %2022 = vmatpush.msra.mxu0 0.0
        %2023 = vmatpush.msra.mxu0 0.0
        %2024 = vmatpush.msra.mxu0 %v1988
        %2025 = vmatpush.msra.mxu0 %v961
        %2026 = vmatpush.msra.mxu0 %v958
        %2027 = vmatpush.msra.mxu0 %v955
        %2028 = vmatpush.msra.mxu0 %v952
        %2029 = vmatmul.f32.gmra.mxu0 %v1982
        %v2030 = vpop.f32.mrf.mxu0
        %v2031 = vadd.f32 %v1245, %v2030
        %2032 = vdwg.mxu0
        %2033 = vmatpush.msra.mxu0 0.0
        %2034 = vmatpush.msra.mxu0 0.0
        %2035 = vmatpush.msra.mxu0 0.0
        %2036 = vmatpush.msra.mxu0 0.0
        %2037 = vmatpush.msra.mxu0 0.0
        %2038 = vmatpush.msra.mxu0 0.0
        %2039 = vmatpush.msra.mxu0 0.0
        %2040 = vmatpush.msra.mxu0 0.0
        %2041 = vmatpush.msra.mxu0 0.0
        %2042 = vmatpush.msra.mxu0 0.0
        %2043 = vmatpush.msra.mxu0 0.0
        %2044 = vmatpush.msra.mxu0 %v1991
        %2045 = vmatpush.msra.mxu0 %v962
        %2046 = vmatpush.msra.mxu0 %v959
        %2047 = vmatpush.msra.mxu0 %v956
        %2048 = vmatpush.msra.mxu0 %v953
        %2049 = vmatmul.f32.gmra.mxu0 %v1982
        %v2050 = vpop.f32.mrf.mxu0
        %v2051 = vadd.f32 %v1265, %v2050
        %2052 = vdwg.mxu0
        %v2053 = vadd.f32 %v2011, %v1539
        %v2054 = vadd.f32 %v2031, %v1559
        %v2055 = vadd.f32 %v2051, %v1579
        %v2056 = vmax.f32 %v2053, 0.0
        %v2057 = vmax.f32 %v2054, 0.0
        %v2058 = vmax.f32 %v2055, 0.0
        %v2059 = vld [vmem:[%s7] sm:$0xf]
        %2061 = vrot.lane.b32.xlu0 %v2058, 25
        %v2062 = vpop.permute.xlu0 %2061
        %2066 = vrot.lane.b32.xlu0 %v2056, 25
        %v2067 = vpop.permute.xlu0 %2066
        %2068 = vrot.lane.b32.xlu0 %v2057, 25
        %v2069 = vpop.permute.xlu0 %2068
        %v2070 = vsel %vm813, %v2067, %v2069
        %v2071 = vsel %vm813, %v2069, %v2062
        %v2075 = vsel %vm813, %v2062, %v2067
        %2076 = vrot.lane.b32.xlu0 %v2058, 24
        %v2077 = vpop.permute.xlu0 %2076
        %2079 = vrot.lane.b32.xlu0 %v2056, 24
        %v2080 = vpop.permute.xlu0 %2079
        %2081 = vrot.lane.b32.xlu0 %v2057, 24
        %v2082 = vpop.permute.xlu0 %2081
        %v2083 = vsel %vm827, %v2080, %v2082
        %v2084 = vsel %vm827, %v2082, %v2077
        %v2086 = vsel %vm827, %v2077, %v2080
        %2087 = vrot.lane.b32.xlu0 %v2058, 23
        %v2088 = vpop.permute.xlu0 %2087
        %2090 = vrot.lane.b32.xlu0 %v2056, 23
        %v2091 = vpop.permute.xlu0 %2090
        %2092 = vrot.lane.b32.xlu0 %v2057, 23
        %v2093 = vpop.permute.xlu0 %2092
        %v2094 = vsel %vm839, %v2091, %v2093
        %v2095 = vsel %vm839, %v2093, %v2088
        %v2099 = vsel %vm839, %v2088, %v2091
        %2100 = vrot.lane.b32.xlu0 %v2058, 1
        %v2101 = vpop.permute.xlu0 %2100
        %2103 = vrot.lane.b32.xlu0 %v2056, 1
        %v2104 = vpop.permute.xlu0 %2103
        %2105 = vrot.lane.b32.xlu0 %v2057, 1
        %v2106 = vpop.permute.xlu0 %2105
        %v2107 = vsel %vm853, %v2104, %v2106
        %v2108 = vsel %vm853, %v2106, %v2101
        %v2110 = vsel %vm853, %v2101, %v2104
        %2111 = vrot.lane.b32.xlu0 %v2056, 127
        %v2112 = vpop.permute.xlu0 %2111
        %2113 = vrot.lane.b32.xlu0 %v2057, 127
        %v2114 = vpop.permute.xlu0 %2113
        %2115 = vrot.lane.b32.xlu0 %v2058, 127
        %v2116 = vpop.permute.xlu0 %2115
        %v2117 = vsel %vm864, %v2112, %v2114
        %v2118 = vsel %vm864, %v2114, %v2116
        %v2121 = vsel %vm864, %v2116, %v2112
        %2122 = vrot.lane.b32.xlu0 %v2056, 105
        %v2123 = vpop.permute.xlu0 %2122
        %2124 = vrot.lane.b32.xlu0 %v2057, 105
        %v2125 = vpop.permute.xlu0 %2124
        %2126 = vrot.lane.b32.xlu0 %v2058, 105
        %v2127 = vpop.permute.xlu0 %2126
        %v2128 = vsel %vm876, %v2123, %v2125
        %v2129 = vsel %vm876, %v2125, %v2127
        %v2134 = vsel %vm876, %v2127, %v2123
        %2135 = vrot.lane.b32.xlu0 %v2056, 104
        %v2136 = vpop.permute.xlu0 %2135
        %2137 = vrot.lane.b32.xlu0 %v2057, 104
        %v2138 = vpop.permute.xlu0 %2137
        %2139 = vrot.lane.b32.xlu0 %v2058, 104
        %v2140 = vpop.permute.xlu0 %2139
        %v2141 = vsel %vm890, %v2136, %v2138
        %v2142 = vsel %vm890, %v2138, %v2140
        %v2145 = vsel %vm890, %v2140, %v2136
        %2146 = vrot.lane.b32.xlu0 %v2056, 103
        %v2147 = vpop.permute.xlu0 %2146
        %2148 = vrot.lane.b32.xlu0 %v2057, 103
        %v2149 = vpop.permute.xlu0 %2148
        %2150 = vrot.lane.b32.xlu0 %v2058, 103
        %v2151 = vpop.permute.xlu0 %2150
        %v2152 = vsel %vm902, %v2147, %v2149
        %v2153 = vsel %vm902, %v2149, %v2151
        %v2158 = vsel %vm902, %v2151, %v2147
        %v2160 = vrot.slane %v2086, 4
        %v2161 = vrot.slane %v2083, 4
        %v2162 = vrot.slane %v2084, 4
        %v2167 = vrot.slane %v2110, 4
        %v2168 = vrot.slane %v2107, 4
        %v2169 = vrot.slane %v2108, 4
        %v2174 = vrot.slane %v2117, 4
        %v2175 = vrot.slane %v2118, 4
        %v2176 = vrot.slane %v2121, 4
        %v2181 = vrot.slane %v2141, 4
        %v2182 = vrot.slane %v2142, 4
        %v2183 = vrot.slane %v2145, 4
        %v2187 = vsel %vm938, %v2075, %v2160
        %v2188 = vsel %vm938, %v2070, %v2161
        %v2189 = vsel %vm938, %v2071, %v2162
        %v2190 = vsel %vm938, %v2099, %v2167
        %v2191 = vsel %vm938, %v2094, %v2168
        %v2192 = vsel %vm938, %v2095, %v2169
        %v2193 = vsel %vm938, %v2056, %v2174
        %v2194 = vsel %vm938, %v2057, %v2175
        %v2195 = vsel %vm938, %v2058, %v2176
        %v2196 = vsel %vm938, %v2128, %v2181
        %v2197 = vsel %vm938, %v2129, %v2182
        %v2198 = vsel %vm938, %v2134, %v2183
        %v2199 = vmul.f32 %v2187, %v715
        %v2200 = vmul.f32 %v2188, %v716
        %v2201 = vmul.f32 %v2189, %v717
        %v2202 = vmul.f32 %v2190, %v718
        %v2203 = vmul.f32 %v2191, %v719
        %v2204 = vmul.f32 %v2192, %v720
        %v2205 = vmul.f32 %v2193, %v721
        %v2206 = vmul.f32 %v2194, %v722
        %v2207 = vmul.f32 %v2195, %v723
        %v2208 = vmul.f32 %v2196, %v724
        %v2209 = vmul.f32 %v2197, %v725
        %v2210 = vmul.f32 %v2198, %v726
        %v2211 = vmul.f32 %v2152, %v727
        %v2212 = vmul.f32 %v2153, %v728
        %v2213 = vmul.f32 %v2158, %v729
        %v2214 = vsel %vm938, %v2211, 1.0
        %v2215 = vsel %vm938, %v2212, 1.0
        %v2216 = vsel %vm938, %v2213, 1.0
        %v2218 = vsel %vm1169, %v2059, 0
        %v2221 = vsel %vm1173, %v2214, 0
        %v2224 = vsel %vm1173, %v2215, 0
        %v2227 = vsel %vm1173, %v2216, 0
        %2229 = vmatpush.msra.mxu0 0.0
        %2230 = vmatpush.msra.mxu0 0.0
        %2231 = vmatpush.msra.mxu0 0.0
        %2232 = vmatpush.msra.mxu0 0.0
        %2233 = vmatpush.msra.mxu0 0.0
        %2234 = vmatpush.msra.mxu0 0.0
        %2235 = vmatpush.msra.mxu0 0.0
        %2236 = vmatpush.msra.mxu0 0.0
        %2237 = vmatpush.msra.mxu0 0.0
        %2238 = vmatpush.msra.mxu0 0.0
        %2239 = vmatpush.msra.mxu0 0.0
        %2240 = vmatpush.msra.mxu0 %v2221
        %2241 = vmatpush.msra.mxu0 %v2208
        %2242 = vmatpush.msra.mxu0 %v2205
        %2243 = vmatpush.msra.mxu0 %v2202
        %2244 = vmatpush.msra.mxu0 %v2199
        %2245 = vmatmul.f32.gmra.mxu0 %v2218
        %v2246 = vpop.f32.mrf.mxu0
        %v2247 = vadd.f32 0.0, %v2246
        %2248 = vdwg.mxu0
        %2249 = vmatpush.msra.mxu0 0.0
        %2250 = vmatpush.msra.mxu0 0.0
        %2251 = vmatpush.msra.mxu0 0.0
        %2252 = vmatpush.msra.mxu0 0.0
        %2253 = vmatpush.msra.mxu0 0.0
        %2254 = vmatpush.msra.mxu0 0.0
        %2255 = vmatpush.msra.mxu0 0.0
        %2256 = vmatpush.msra.mxu0 0.0
        %2257 = vmatpush.msra.mxu0 0.0
        %2258 = vmatpush.msra.mxu0 0.0
        %2259 = vmatpush.msra.mxu0 0.0
        %2260 = vmatpush.msra.mxu0 %v2224
        %2261 = vmatpush.msra.mxu0 %v2209
        %2262 = vmatpush.msra.mxu0 %v2206
        %2263 = vmatpush.msra.mxu0 %v2203
        %2264 = vmatpush.msra.mxu0 %v2200
        %2265 = vmatmul.f32.gmra.mxu0 %v2218
        %v2266 = vpop.f32.mrf.mxu0
        %v2267 = vadd.f32 0.0, %v2266
        %2268 = vdwg.mxu0
        %2269 = vmatpush.msra.mxu0 0.0
        %2270 = vmatpush.msra.mxu0 0.0
        %2271 = vmatpush.msra.mxu0 0.0
        %2272 = vmatpush.msra.mxu0 0.0
        %2273 = vmatpush.msra.mxu0 0.0
        %2274 = vmatpush.msra.mxu0 0.0
        %2275 = vmatpush.msra.mxu0 0.0
        %2276 = vmatpush.msra.mxu0 0.0
        %2277 = vmatpush.msra.mxu0 0.0
        %2278 = vmatpush.msra.mxu0 0.0
        %2279 = vmatpush.msra.mxu0 0.0
        %2280 = vmatpush.msra.mxu0 %v2227
        %2281 = vmatpush.msra.mxu0 %v2210
        %2282 = vmatpush.msra.mxu0 %v2207
        %2283 = vmatpush.msra.mxu0 %v2204
        %2284 = vmatpush.msra.mxu0 %v2201
        %2285 = vmatmul.f32.gmra.mxu0 %v2218
        %v2286 = vpop.f32.mrf.mxu0
        %v2287 = vadd.f32 0.0, %v2286
        %2288 = vdwg.mxu0
        %v2289 = vmax.f32 %v2247, 0.0
        %v2290 = vmax.f32 %v2267, 0.0
        %v2291 = vmax.f32 %v2287, 0.0
        %v2293 = vsel %vm1203, %v1973, 0
        %2295 = vmatpush.msra.mxu0 0.0
        %2296 = vmatpush.msra.mxu0 0.0
        %2297 = vmatpush.msra.mxu0 0.0
        %2298 = vmatpush.msra.mxu0 0.0
        %2299 = vmatpush.msra.mxu0 0.0
        %2300 = vmatpush.msra.mxu0 0.0
        %2301 = vmatpush.msra.mxu0 0.0
        %2302 = vmatpush.msra.mxu0 0.0
        %2303 = vmatpush.msra.mxu0 0.0
        %2304 = vmatpush.msra.mxu0 0.0
        %2305 = vmatpush.msra.mxu0 0.0
        %2306 = vmatpush.msra.mxu0 0.0
        %2307 = vmatpush.msra.mxu0 0.0
        %2308 = vmatpush.msra.mxu0 0.0
        %2309 = vmatpush.msra.mxu0 %v1978
        %2310 = vmatpush.msra.mxu0 %v1975
        %2311 = vmatmul.f32.gmra.mxu0 %v2293
        %v2312 = vpop.f32.mrf.mxu0
        %v2313 = vadd.f32 %v1775, %v2312
        %2314 = vdwg.mxu0
        %2315 = vmatpush.msra.mxu0 0.0
        %2316 = vmatpush.msra.mxu0 0.0
        %2317 = vmatpush.msra.mxu0 0.0
        %2318 = vmatpush.msra.mxu0 0.0
        %2319 = vmatpush.msra.mxu0 0.0
        %2320 = vmatpush.msra.mxu0 0.0
        %2321 = vmatpush.msra.mxu0 0.0
        %2322 = vmatpush.msra.mxu0 0.0
        %2323 = vmatpush.msra.mxu0 0.0
        %2324 = vmatpush.msra.mxu0 0.0
        %2325 = vmatpush.msra.mxu0 0.0
        %2326 = vmatpush.msra.mxu0 0.0
        %2327 = vmatpush.msra.mxu0 0.0
        %2328 = vmatpush.msra.mxu0 0.0
        %2329 = vmatpush.msra.mxu0 %v1979
        %2330 = vmatpush.msra.mxu0 %v1976
        %2331 = vmatmul.f32.gmra.mxu0 %v2293
        %v2332 = vpop.f32.mrf.mxu0
        %v2333 = vadd.f32 %v1795, %v2332
        %2334 = vdwg.mxu0
        %2335 = vmatpush.msra.mxu0 0.0
        %2336 = vmatpush.msra.mxu0 0.0
        %2337 = vmatpush.msra.mxu0 0.0
        %2338 = vmatpush.msra.mxu0 0.0
        %2339 = vmatpush.msra.mxu0 0.0
        %2340 = vmatpush.msra.mxu0 0.0
        %2341 = vmatpush.msra.mxu0 0.0
        %2342 = vmatpush.msra.mxu0 0.0
        %2343 = vmatpush.msra.mxu0 0.0
        %2344 = vmatpush.msra.mxu0 0.0
        %2345 = vmatpush.msra.mxu0 0.0
        %2346 = vmatpush.msra.mxu0 0.0
        %2347 = vmatpush.msra.mxu0 0.0
        %2348 = vmatpush.msra.mxu0 0.0
        %2349 = vmatpush.msra.mxu0 %v1980
        %2350 = vmatpush.msra.mxu0 %v1977
        %2351 = vmatmul.f32.gmra.mxu0 %v2293
        %v2352 = vpop.f32.mrf.mxu0
        %v2353 = vadd.f32 %v1815, %v2352
        %2354 = vdwg.mxu0
        %v2355 = vmax.f32 %v2313, 0.0
        %v2356 = vmax.f32 %v2333, 0.0
        %v2357 = vmax.f32 %v2353, 0.0
        %v2358 = vld [vmem:[%s8] sm:$0xf]
        %2360 = vrot.lane.b32.xlu0 %v2357, 25
        %v2361 = vpop.permute.xlu0 %2360
        %2365 = vrot.lane.b32.xlu0 %v2355, 25
        %v2366 = vpop.permute.xlu0 %2365
        %2367 = vrot.lane.b32.xlu0 %v2356, 25
        %v2368 = vpop.permute.xlu0 %2367
        %v2369 = vsel %vm813, %v2366, %v2368
        %v2370 = vsel %vm813, %v2368, %v2361
        %v2374 = vsel %vm813, %v2361, %v2366
        %2375 = vrot.lane.b32.xlu0 %v2357, 24
        %v2376 = vpop.permute.xlu0 %2375
        %2378 = vrot.lane.b32.xlu0 %v2355, 24
        %v2379 = vpop.permute.xlu0 %2378
        %2380 = vrot.lane.b32.xlu0 %v2356, 24
        %v2381 = vpop.permute.xlu0 %2380
        %v2382 = vsel %vm827, %v2379, %v2381
        %v2383 = vsel %vm827, %v2381, %v2376
        %v2385 = vsel %vm827, %v2376, %v2379
        %2386 = vrot.lane.b32.xlu0 %v2357, 23
        %v2387 = vpop.permute.xlu0 %2386
        %2389 = vrot.lane.b32.xlu0 %v2355, 23
        %v2390 = vpop.permute.xlu0 %2389
        %2391 = vrot.lane.b32.xlu0 %v2356, 23
        %v2392 = vpop.permute.xlu0 %2391
        %v2393 = vsel %vm839, %v2390, %v2392
        %v2394 = vsel %vm839, %v2392, %v2387
        %v2398 = vsel %vm839, %v2387, %v2390
        %2399 = vrot.lane.b32.xlu0 %v2357, 1
        %v2400 = vpop.permute.xlu0 %2399
        %2402 = vrot.lane.b32.xlu0 %v2355, 1
        %v2403 = vpop.permute.xlu0 %2402
        %2404 = vrot.lane.b32.xlu0 %v2356, 1
        %v2405 = vpop.permute.xlu0 %2404
        %v2406 = vsel %vm853, %v2403, %v2405
        %v2407 = vsel %vm853, %v2405, %v2400
        %v2409 = vsel %vm853, %v2400, %v2403
        %2410 = vrot.lane.b32.xlu0 %v2355, 127
        %v2411 = vpop.permute.xlu0 %2410
        %2412 = vrot.lane.b32.xlu0 %v2356, 127
        %v2413 = vpop.permute.xlu0 %2412
        %2414 = vrot.lane.b32.xlu0 %v2357, 127
        %v2415 = vpop.permute.xlu0 %2414
        %v2416 = vsel %vm864, %v2411, %v2413
        %v2417 = vsel %vm864, %v2413, %v2415
        %v2420 = vsel %vm864, %v2415, %v2411
        %2421 = vrot.lane.b32.xlu0 %v2355, 105
        %v2422 = vpop.permute.xlu0 %2421
        %2423 = vrot.lane.b32.xlu0 %v2356, 105
        %v2424 = vpop.permute.xlu0 %2423
        %2425 = vrot.lane.b32.xlu0 %v2357, 105
        %v2426 = vpop.permute.xlu0 %2425
        %v2427 = vsel %vm876, %v2422, %v2424
        %v2428 = vsel %vm876, %v2424, %v2426
        %v2433 = vsel %vm876, %v2426, %v2422
        %2434 = vrot.lane.b32.xlu0 %v2355, 104
        %v2435 = vpop.permute.xlu0 %2434
        %2436 = vrot.lane.b32.xlu0 %v2356, 104
        %v2437 = vpop.permute.xlu0 %2436
        %2438 = vrot.lane.b32.xlu0 %v2357, 104
        %v2439 = vpop.permute.xlu0 %2438
        %v2440 = vsel %vm890, %v2435, %v2437
        %v2441 = vsel %vm890, %v2437, %v2439
        %v2444 = vsel %vm890, %v2439, %v2435
        %2445 = vrot.lane.b32.xlu0 %v2355, 103
        %v2446 = vpop.permute.xlu0 %2445
        %2447 = vrot.lane.b32.xlu0 %v2356, 103
        %v2448 = vpop.permute.xlu0 %2447
        %2449 = vrot.lane.b32.xlu0 %v2357, 103
        %v2450 = vpop.permute.xlu0 %2449
        %v2451 = vsel %vm902, %v2446, %v2448
        %v2452 = vsel %vm902, %v2448, %v2450
        %v2457 = vsel %vm902, %v2450, %v2446
        %v2459 = vrot.slane %v2385, 4
        %v2460 = vrot.slane %v2382, 4
        %v2461 = vrot.slane %v2383, 4
        %v2466 = vrot.slane %v2409, 4
        %v2467 = vrot.slane %v2406, 4
        %v2468 = vrot.slane %v2407, 4
        %v2473 = vrot.slane %v2416, 4
        %v2474 = vrot.slane %v2417, 4
        %v2475 = vrot.slane %v2420, 4
        %v2480 = vrot.slane %v2440, 4
        %v2481 = vrot.slane %v2441, 4
        %v2482 = vrot.slane %v2444, 4
        %v2486 = vsel %vm938, %v2374, %v2459
        %v2487 = vsel %vm938, %v2369, %v2460
        %v2488 = vsel %vm938, %v2370, %v2461
        %v2489 = vsel %vm938, %v2398, %v2466
        %v2490 = vsel %vm938, %v2393, %v2467
        %v2491 = vsel %vm938, %v2394, %v2468
        %v2492 = vsel %vm938, %v2355, %v2473
        %v2493 = vsel %vm938, %v2356, %v2474
        %v2494 = vsel %vm938, %v2357, %v2475
        %v2495 = vsel %vm938, %v2427, %v2480
        %v2496 = vsel %vm938, %v2428, %v2481
        %v2497 = vsel %vm938, %v2433, %v2482
        %v2498 = vmul.f32 %v2486, %v715
        %v2499 = vmul.f32 %v2487, %v716
        %v2500 = vmul.f32 %v2488, %v717
        %v2501 = vmul.f32 %v2489, %v718
        %v2502 = vmul.f32 %v2490, %v719
        %v2503 = vmul.f32 %v2491, %v720
        %v2504 = vmul.f32 %v2492, %v721
        %v2505 = vmul.f32 %v2493, %v722
        %v2506 = vmul.f32 %v2494, %v723
        %v2507 = vmul.f32 %v2495, %v724
        %v2508 = vmul.f32 %v2496, %v725
        %v2509 = vmul.f32 %v2497, %v726
        %v2510 = vmul.f32 %v2451, %v727
        %v2511 = vmul.f32 %v2452, %v728
        %v2512 = vmul.f32 %v2457, %v729
        %v2513 = vsel %vm938, %v2510, 1.0
        %v2514 = vsel %vm938, %v2511, 1.0
        %v2515 = vsel %vm938, %v2512, 1.0
        %v2517 = vsel %vm1169, %v2358, 0
        %v2520 = vsel %vm1173, %v2513, 0
        %v2523 = vsel %vm1173, %v2514, 0
        %v2526 = vsel %vm1173, %v2515, 0
        %2528 = vmatpush.msra.mxu0 0.0
        %2529 = vmatpush.msra.mxu0 0.0
        %2530 = vmatpush.msra.mxu0 0.0
        %2531 = vmatpush.msra.mxu0 0.0
        %2532 = vmatpush.msra.mxu0 0.0
        %2533 = vmatpush.msra.mxu0 0.0
        %2534 = vmatpush.msra.mxu0 0.0
        %2535 = vmatpush.msra.mxu0 0.0
        %2536 = vmatpush.msra.mxu0 0.0
        %2537 = vmatpush.msra.mxu0 0.0
        %2538 = vmatpush.msra.mxu0 0.0
        %2539 = vmatpush.msra.mxu0 %v2520
        %2540 = vmatpush.msra.mxu0 %v2507
        %2541 = vmatpush.msra.mxu0 %v2504
        %2542 = vmatpush.msra.mxu0 %v2501
        %2543 = vmatpush.msra.mxu0 %v2498
        %2544 = vmatmul.f32.gmra.mxu0 %v2517
        %v2545 = vpop.f32.mrf.mxu0
        %v2546 = vadd.f32 0.0, %v2545
        %2547 = vdwg.mxu0
        %2548 = vmatpush.msra.mxu0 0.0
        %2549 = vmatpush.msra.mxu0 0.0
        %2550 = vmatpush.msra.mxu0 0.0
        %2551 = vmatpush.msra.mxu0 0.0
        %2552 = vmatpush.msra.mxu0 0.0
        %2553 = vmatpush.msra.mxu0 0.0
        %2554 = vmatpush.msra.mxu0 0.0
        %2555 = vmatpush.msra.mxu0 0.0
        %2556 = vmatpush.msra.mxu0 0.0
        %2557 = vmatpush.msra.mxu0 0.0
        %2558 = vmatpush.msra.mxu0 0.0
        %2559 = vmatpush.msra.mxu0 %v2523
        %2560 = vmatpush.msra.mxu0 %v2508
        %2561 = vmatpush.msra.mxu0 %v2505
        %2562 = vmatpush.msra.mxu0 %v2502
        %2563 = vmatpush.msra.mxu0 %v2499
        %2564 = vmatmul.f32.gmra.mxu0 %v2517
        %v2565 = vpop.f32.mrf.mxu0
        %v2566 = vadd.f32 0.0, %v2565
        %2567 = vdwg.mxu0
        %2568 = vmatpush.msra.mxu0 0.0
        %2569 = vmatpush.msra.mxu0 0.0
        %2570 = vmatpush.msra.mxu0 0.0
        %2571 = vmatpush.msra.mxu0 0.0
        %2572 = vmatpush.msra.mxu0 0.0
        %2573 = vmatpush.msra.mxu0 0.0
        %2574 = vmatpush.msra.mxu0 0.0
        %2575 = vmatpush.msra.mxu0 0.0
        %2576 = vmatpush.msra.mxu0 0.0
        %2577 = vmatpush.msra.mxu0 0.0
        %2578 = vmatpush.msra.mxu0 0.0
        %2579 = vmatpush.msra.mxu0 %v2526
        %2580 = vmatpush.msra.mxu0 %v2509
        %2581 = vmatpush.msra.mxu0 %v2506
        %2582 = vmatpush.msra.mxu0 %v2503
        %2583 = vmatpush.msra.mxu0 %v2500
        %2584 = vmatmul.f32.gmra.mxu0 %v2517
        %v2585 = vpop.f32.mrf.mxu0
        %v2586 = vadd.f32 0.0, %v2585
        %2587 = vdwg.mxu0
        %v2588 = vmax.f32 %v2546, 0.0
        %v2589 = vmax.f32 %v2566, 0.0
        %v2590 = vmax.f32 %v2586, 0.0
        %v2594 = vrot.slane %v2588, 4
        %v2595 = vrot.slane %v2589, 4
        %v2596 = vrot.slane %v2590, 4
        %v2600 = vsel %vm938, %v2289, %v2594
        %v2601 = vsel %vm938, %v2290, %v2595
        %v2602 = vsel %vm938, %v2291, %v2596
        %v2603 = vld [vmem:[%s9] sm:$0xff]
        %v2604 = vld [vmem:[%s9 + $0x8] sm:$0xff]
        %v2606 = vsel %vm1388, %v2603, 0
        %v2609 = vsel %vm1388, %v2604, 0
        %2611 = vmatpush.msra.mxu0 0.0
        %2612 = vmatpush.msra.mxu0 0.0
        %2613 = vmatpush.msra.mxu0 0.0
        %2614 = vmatpush.msra.mxu0 0.0
        %2615 = vmatpush.msra.mxu0 0.0
        %2616 = vmatpush.msra.mxu0 0.0
        %2617 = vmatpush.msra.mxu0 0.0
        %2618 = vmatpush.msra.mxu0 0.0
        %2619 = vmatpush.msra.mxu0 0.0
        %2620 = vmatpush.msra.mxu0 0.0
        %2621 = vmatpush.msra.mxu0 0.0
        %2622 = vmatpush.msra.mxu0 0.0
        %2623 = vmatpush.msra.mxu0 0.0
        %2624 = vmatpush.msra.mxu0 0.0
        %2625 = vmatpush.msra.mxu0 %v737
        %2626 = vmatpush.msra.mxu0 %v2600
        %2627 = vmatmul.f32.gmra.mxu0 %v2606
        %v2628 = vpop.f32.mrf.mxu0
        %v2629 = vadd.f32 0.0, %v2628
        %2630 = vmatmul.f32.gmra.mxu0 %v2609
        %v2631 = vpop.f32.mrf.mxu0
        %v2632 = vadd.f32 0.0, %v2631
        %2633 = vdwg.mxu0
        %2634 = vmatpush.msra.mxu0 0.0
        %2635 = vmatpush.msra.mxu0 0.0
        %2636 = vmatpush.msra.mxu0 0.0
        %2637 = vmatpush.msra.mxu0 0.0
        %2638 = vmatpush.msra.mxu0 0.0
        %2639 = vmatpush.msra.mxu0 0.0
        %2640 = vmatpush.msra.mxu0 0.0
        %2641 = vmatpush.msra.mxu0 0.0
        %2642 = vmatpush.msra.mxu0 0.0
        %2643 = vmatpush.msra.mxu0 0.0
        %2644 = vmatpush.msra.mxu0 0.0
        %2645 = vmatpush.msra.mxu0 0.0
        %2646 = vmatpush.msra.mxu0 0.0
        %2647 = vmatpush.msra.mxu0 0.0
        %2648 = vmatpush.msra.mxu0 %v737
        %2649 = vmatpush.msra.mxu0 %v2601
        %2650 = vmatmul.f32.gmra.mxu0 %v2606
        %v2651 = vpop.f32.mrf.mxu0
        %v2652 = vadd.f32 0.0, %v2651
        %2653 = vmatmul.f32.gmra.mxu0 %v2609
        %v2654 = vpop.f32.mrf.mxu0
        %v2655 = vadd.f32 0.0, %v2654
        %2656 = vdwg.mxu0
        %2657 = vmatpush.msra.mxu0 0.0
        %2658 = vmatpush.msra.mxu0 0.0
        %2659 = vmatpush.msra.mxu0 0.0
        %2660 = vmatpush.msra.mxu0 0.0
        %2661 = vmatpush.msra.mxu0 0.0
        %2662 = vmatpush.msra.mxu0 0.0
        %2663 = vmatpush.msra.mxu0 0.0
        %2664 = vmatpush.msra.mxu0 0.0
        %2665 = vmatpush.msra.mxu0 0.0
        %2666 = vmatpush.msra.mxu0 0.0
        %2667 = vmatpush.msra.mxu0 0.0
        %2668 = vmatpush.msra.mxu0 0.0
        %2669 = vmatpush.msra.mxu0 0.0
        %2670 = vmatpush.msra.mxu0 0.0
        %2671 = vmatpush.msra.mxu0 %v737
        %2672 = vmatpush.msra.mxu0 %v2602
        %2673 = vmatmul.f32.gmra.mxu0 %v2606
        %v2674 = vpop.f32.mrf.mxu0
        %v2675 = vadd.f32 0.0, %v2674
        %2676 = vmatmul.f32.gmra.mxu0 %v2609
        %v2677 = vpop.f32.mrf.mxu0
        %v2678 = vadd.f32 0.0, %v2677
        %2679 = vdwg.mxu0
        %v2680 = vadd.f32 %v709, %v2629
        %v2681 = vadd.f32 %v710, %v2652
        %v2682 = vadd.f32 %v711, %v2675
        %v2683 = vadd.f32 %v712, %v2632
        %v2684 = vadd.f32 %v713, %v2655
        %v2685 = vadd.f32 %v714, %v2678
        %v2686 = vmax.f32 %v2680, 0.0
        %v2687 = vmax.f32 %v2681, 0.0
        %v2688 = vmax.f32 %v2682, 0.0
        %v2689 = vmax.f32 %v2683, 0.0
        %v2690 = vmax.f32 %v2684, 0.0
        %v2691 = vmax.f32 %v2685, 0.0
        %2692 = vst [vmem:[%s703] sm:$0xff] %v2686
        %2693 = vst [vmem:[%s703 + $0x8] sm:$0xff] %v2687
        %2694 = vst [vmem:[%s703 + $0x10] sm:$0xff] %v2688
        %2695 = vst [vmem:[%s703 + $0x18] sm:$0xff] %v2689
        %2696 = vst [vmem:[%s703 + $0x20] sm:$0xff] %v2690
        %2697 = vst [vmem:[%s703 + $0x28] sm:$0xff] %v2691
        %s2698 = sand.u32 %s533, 1
        %s2699 = scalar_lea.sflag [#allocation3], %s2698
        %s2700 = sand.u32 %s533, 1
        %s2701 = smul.addr %s2700, 48
        %s2702 = scalar_lea.vmem [#allocation2], %s2701
        // Predicated region
        $region113: #{tpu_custom_call.1} parent=111 // pred_check
          %p2703 = pneg %p543
        $region114: #{tpu_custom_call.1} parent=111 // pred_check_branch
          %2705 = sbr.rel (%p2703) target = $region116
        $region115: #{tpu_custom_call.1} parent=111 // pred_region
          %2707 = vsyncadd %s2699, 0
          %s2708 = smul.addr %s37, 6
          %s2709 = smul.addr %s2708, 8
          %s2710 = scalar_lea.hbm %s23, %s2709
          %s2711 = sshll.u32 %s2702, 4
          %s2712 = int_to_ptr.vmem [resolvable:$true] %s2711
          %s2713 = sshll.u32 %s2710, 4
          %s2714 = int_to_ptr.hbm [resolvable:$true] %s2713
          %2719 = dma.vmem_to_hbm [thread:$0]  %s2712, 768, %s2714, %s2699, 384, 384, 24
        $region116: #{tpu_custom_call.1} parent=111 // pred_fallthru
          _
      $region112: #{tpu_custom_call.1} parent=5 // pred_fallthru
        _
      %p2720 = scmp.le.s32.totalorder 2, %s32
      // Predicated region
      $region117: #{tpu_custom_call.1} parent=5 // pred_check
        %p2721 = pneg %p2720
      $region118: #{tpu_custom_call.1} parent=5 // pred_check_branch
        %2723 = sbr.rel (%p2721) target = $region120
      $region119: #{tpu_custom_call.1} parent=5 // pred_region
        %s2724 = ssub.s32 %s32, 2
        // Predicated region
        $region121: #{tpu_custom_call.1} parent=119 // pred_check
          %p2725 = pneg %p549
        $region122: #{tpu_custom_call.1} parent=119 // pred_check_branch
          %2727 = sbr.rel (%p2725) target = $region124
        $region123: #{tpu_custom_call.1} parent=119 // pred_region
          %s2728 = sand.u32 %s534, 1
          %s2729 = scalar_lea.sflag [#allocation3], %s2728
          %s2730 = sand.u32 %s534, 1
          %s2731 = smul.addr %s2730, 48
          %s2732 = scalar_lea.vmem [#allocation2], %s2731
          %2734 = dma.done %s2729, 768
        $region124: #{tpu_custom_call.1} parent=119 // pred_fallthru
          _
      $region120: #{tpu_custom_call.1} parent=5 // pred_fallthru
        _
    $region6: #{tpu_custom_call.1} parent=1 // loop_footer
      %s36 = sadd.s32 1, %s32
    $region7: #{tpu_custom_call.1} parent=1 // loop_footer_branch
      %31 = sbr.rel target = $region3
    $region8: #{tpu_custom_call.1} parent=1 // loop_exit
      _
    %2735 = vsyncpa [#allocation3], 1
    %s2736 = scalar_lea.sflag [#allocation3], 1
    %2737 = vsyncpa %s2736, 1

</llo_original>
